<compile_context>
chip_gen: v5e
topology: v5e:2x2
jax: 0.10.0
libtpu: 0.0.40
codegen_flags: <defaults>
</compile_context>

<pallas_src>
import functools
import math

import numpy as np
import jax
import jax.numpy as jnp
from jax import lax
from jax.experimental import pallas as pl
from jax.experimental.pallas import tpu as pltpu

_BN_EPS = 1e-5
_BN_SCALE = 1.0 / math.sqrt(1.0 + _BN_EPS)   # eval-mode BatchNorm (mean=0, var=1)
_LEAKY = 0.01                                # F.leaky_relu default slope
_LN_EPS = 1e-5
_MM_DTYPE = jnp.bfloat16                     # matmul operand dtype (f32 accumulate);
                                             # set to jnp.float32 for bit-closer numerics


def _leaky(v):
    return jnp.where(v > 0, v, _LEAKY * v)


def _sigmoid(v):
    # Numerically stable logistic that maps to the EUP tanh unit (f32).
    return 0.5 * (jnp.tanh(0.5 * v) + 1.0)


def _round8(n):
    return ((n + 7) // 8) * 8


def _pad_rows(a, rows):
    return jnp.pad(a, ((0, rows - a.shape[0]), (0, 0)))


# ----------------------------------------------------------------------------
# Fused whole-model kernel (one grid step per batch element)
# ----------------------------------------------------------------------------
def _make_kernel(N, T, CN, Kt):
    r = _round8(T)
    WBLK = (1 + 3 * Kt) * CN                 # weight-slab columns per ST_BLOCK
    A_MATT = (0, CN)                         # aux-slab row offsets
    A_LNW = (2 * CN, 2 * CN + 2 * r)
    A_LNB = (2 * CN + r, 2 * CN + 3 * r)
    A_BIAS = 2 * CN + 4 * r
    A_HB = A_BIAS + 8
    T_TB = (0, 2 * r)                        # t-slab row offsets
    T_TV = (r, 3 * r)
    T_R0 = 4 * r
    T_R2 = 5 * r
    T_P4A = 6 * r
    T_P4B = 6 * r + 16
    f32 = jnp.float32

    def kernel(x_ref, w_ref, aux_ref, t_ref, out_ref, rm_ref):
        R0 = t_ref[T_R0:T_R0 + T, :]         # shift-by-(-1) stencil (exact 0/1)
        R2 = t_ref[T_R2:T_R2 + T, :]         # shift-by-(+1) stencil

        def shift_sum(u):
            # zero-padded width-Kt temporal stencil:  y[t] = u0[t-1]+u1[t]+u2[t+1]
            return (jnp.dot(R0, u[:, :CN], preferred_element_type=f32)
                    + u[:, CN:2 * CN]
                    + jnp.dot(R2, u[:, 2 * CN:3 * CN], preferred_element_type=f32))

        def st_block(x, blk):
            c0 = WBLK * blk
            ab = A_BIAS + 4 * blk
            xb = x.astype(_MM_DTYPE)

            # ---- 1x1 conv residual branch -------------------------------------
            x_in = (jnp.dot(xb, w_ref[:, c0:c0 + CN], preferred_element_type=f32)
                    + aux_ref[ab:ab + 1, :])

            # ---- temporal (1,Kt) conv, zero padding 1, + leaky_relu -----------
            u = jnp.dot(xb, w_ref[:, c0 + CN:c0 + CN + Kt * CN],
                        preferred_element_type=f32)                 # (T, Kt*CN)
            xt = _leaky(shift_sum(u) + aux_ref[ab + 1:ab + 2, :])
            # dropout(0.5) -> identity in eval mode.
            xtb = xt.astype(_MM_DTYPE)

            # ---- Chebyshev GCN (node+channel contraction prefolded) + (1,Kt)
            # conv + GLU.  Filter/gate halves computed separately to bound the
            # peak live vregs.
            of = c0 + CN + Kt * CN
            filt = _leaky(
                shift_sum(jnp.dot(xtb, w_ref[:, of:of + Kt * CN],
                                  preferred_element_type=f32))
                + aux_ref[ab + 2:ab + 3, :])
            og = of + Kt * CN
            gate = (shift_sum(jnp.dot(xtb, w_ref[:, og:og + Kt * CN],
                                      preferred_element_type=f32))
                    + aux_ref[ab + 3:ab + 4, :])
            x1 = _sigmoid(gate) * filt                              # (T, CN)
            # dropout(0.5) -> identity in eval mode.

            # ---- TATT temporal attention (f32; conv1/conv2/w prefolded) -------
            u_att = jnp.dot(x1, aux_ref[A_MATT[blk]:A_MATT[blk] + CN, :],
                            preferred_element_type=f32)             # (T, CN)
            s = lax.dot_general(u_att, x1, (((1,), (1,)), ((), ())),
                                preferred_element_type=f32)         # (T, T)
            s = _sigmoid(s + t_ref[T_TB[blk]:T_TB[blk] + T, :])
            logit = jnp.dot(t_ref[T_TV[blk]:T_TV[blk] + T, :], s,
                            preferred_element_type=f32) * _BN_SCALE  # v @ . ; eval BN1d
            # TODO(synk): reference adds an undefined global `B` before softmax; dropped.
            m = jnp.max(logit, axis=-1, keepdims=True)
            e = jnp.exp(logit - m)
            coefs = e / jnp.sum(e, axis=-1, keepdims=True)
            xc = jnp.dot(coefs, x1, preferred_element_type=f32)     # == x1 @ T_coef^T

            # ---- residual + LayerNorm over the whole (c_out, N, T) slab -------
            y = _leaky(xc) + x_in
            mu = jnp.mean(y, keepdims=True)
            var = jnp.mean(jnp.square(y - mu), keepdims=True)
            return ((y - mu) * lax.rsqrt(var + _LN_EPS)
                    * aux_ref[A_LNW[blk]:A_LNW[blk] + T, :]
                    + aux_ref[A_LNB[blk]:A_LNB[blk] + T, :])

        h = st_block(x_ref[0], 0)            # block1 output stays in VMEM/vregs
        h = st_block(h, 1)                   # block2

        # ---- fused output head: conv1/2/3 (1x1 on 12-step slices) + conv4
        # ((1,2) stride 2) = one row-mix matmul + static slices + two tiny
        # time-selection matmuls for the strided taps.
        c_mh = 2 * WBLK
        rm_ref[...] = jnp.dot(h.astype(_MM_DTYPE), w_ref[:, c_mh:c_mh + 5 * N],
                              preferred_element_type=f32)           # (T, 5N)
        yt = (rm_ref[0:12, 0:N]
              + rm_ref[12:24, N:2 * N]
              + rm_ref[24:36, 2 * N:3 * N]
              + jnp.dot(t_ref[T_P4A:T_P4A + 12, :], rm_ref[:, 3 * N:4 * N],
                        preferred_element_type=f32)
              + jnp.dot(t_ref[T_P4B:T_P4B + 12, :], rm_ref[:, 4 * N:5 * N],
                        preferred_element_type=f32))
        out_ref[0] = yt + aux_ref[A_HB:A_HB + 1, 0:N]

    return kernel


# ----------------------------------------------------------------------------
# Wrapper: fold weights (time-major), pack slabs, launch one pallas_call
# ----------------------------------------------------------------------------
def _fold_block(p, Ls, N, c_out, T, Kt):
    """Fold one ST_BLOCK's params into time-major matrices (column = c*N+n)."""
    CN = c_out * N
    eyeN = np.eye(N, dtype=np.float32)

    W1T = _pad_rows(jnp.kron(p["conv1_w"].T, eyeN), CN)              # (CN, CN)
    WtT = _pad_rows(
        jnp.concatenate([jnp.kron(p["time_w"][:, :, kt].T, eyeN)
                         for kt in range(Kt)], axis=1), CN)          # (CN, Kt*CN)
    # Mg[kt][(c,n),(o,q)] = sum_k gcn_w[o,c,k,kt] * Ls[k][q,n]
    Mg = jnp.einsum("ockt,kqn->tcnoq", p["gcn_w"], Ls).reshape(Kt, CN, 2 * CN)
    MgfT = jnp.concatenate([Mg[kt, :, :CN] for kt in range(Kt)], axis=1)
    MggT = jnp.concatenate([Mg[kt, :, CN:] for kt in range(Kt)], axis=1)
    wcols = jnp.concatenate([W1T, WtT, MgfT, MggT], axis=1)          # (CN, 10*CN)

    # M_att[(c,n),(c',n')] = t_conv1_w[c] * t_w[n,c'] * t_conv2_w[n']
    Matt = jnp.einsum("c,nd,m->cndm", p["t_conv1_w"], p["t_w"],
                      p["t_conv2_w"]).reshape(CN, CN)
    lnw = jnp.transpose(p["ln_w"], (2, 0, 1)).reshape(T, CN)
    lnb = jnp.transpose(p["ln_b"], (2, 0, 1)).reshape(T, CN)
    biases = jnp.stack([jnp.repeat(p["conv1_b"], N),
                        jnp.repeat(p["time_b"], N),
                        jnp.repeat(p["gcn_b"][:c_out], N),
                        jnp.repeat(p["gcn_b"][c_out:], N)], axis=0)  # (4, CN)
    return wcols, Matt, lnw, lnb, biases, p["t_b"], p["t_v"]


def dgcn_mask_forward(params, x_w, x_d, x_r, supports, c_out, K, Kt):
    B, c_in, N, _ = x_w.shape
    # BatchNorm2d(c_in, affine=False) in eval mode: uniform scale.
    x = jnp.concatenate([x_w, x_d, x_r], axis=-1) * _BN_SCALE
    T = x.shape[-1]
    CN = c_out * N
    assert Kt == 3 and T == 60 and c_in <= c_out  # layout assumptions of this kernel

    # masked / normalized adjacency + Chebyshev basis (tiny NxN glue -> XLA)
    A = params["h"] * supports
    d = 1.0 / (jnp.sum(A, -1) + 0.0001)
    A1 = d[:, None] * A                          # == diag_embed(d) @ A
    Ls = [jnp.eye(N, dtype=jnp.float32), A1]
    for _ in range(2, K):
        Ls.append(2.0 * (A1 @ Ls[-1]) - Ls[-2])
    Ls = jnp.stack(Ls, 0)

    # time-major input, (c,n) columns zero-padded up to c_out*N
    x_tm = jnp.transpose(x, (0, 3, 1, 2)).reshape(B, T, c_in * N)
    x_tm = jnp.pad(x_tm, ((0, 0), (0, 0), (0, CN - c_in * N)))

    # ---- pack all weights into 3 slabs --------------------------------------
    f1 = _fold_block(params["block1"], Ls, N, c_out, T, Kt)
    f2 = _fold_block(params["block2"], Ls, N, c_out, T, Kt)
    eyeN = np.eye(N, dtype=np.float32)
    taps = [params["c1_w"], params["c2_w"], params["c3_w"],
            params["c4_w"][:, 0], params["c4_w"][:, 1]]
    MhT = jnp.concatenate([jnp.kron(t.reshape(-1, 1), eyeN) for t in taps], axis=1)
    hb = (params["c1_b"] + params["c2_b"] + params["c3_b"] + params["c4_b"])[0]

    # bf16 matmul slab: [blk1 | blk2 | head row-mix]
    w_slab = jnp.concatenate([f1[0], f2[0], MhT], axis=1).astype(_MM_DTYPE)

    r = _round8(T)
    aux_slab = jnp.concatenate(
        [f1[1], f2[1],                                        # M_att (CN,CN) x2
         _pad_rows(f1[2], r), _pad_rows(f1[3], r),            # lnw1, lnb1
         _pad_rows(f2[2], r), _pad_rows(f2[3], r),            # lnw2, lnb2
         jnp.concatenate([f1[4], f2[4]], axis=0),             # 8 bias rows
         jnp.full((8, CN), hb, jnp.float32)], axis=0)         # head bias row

    # compile-time constant operators (numpy): shift stencils + conv4 selectors
    R0 = np.eye(T, k=-1, dtype=np.float32)
    R2 = np.eye(T, k=1, dtype=np.float32)
    jj, tt = np.arange(12), np.arange(T)
    P4a = (tt[None, :] == (36 + 2 * jj)[:, None]).astype(np.float32)
    P4b = (tt[None, :] == (37 + 2 * jj)[:, None]).astype(np.float32)
    t_slab = jnp.concatenate(
        [_pad_rows(f1[5], r), _pad_rows(f1[6], r),            # t_b1, t_v1
         _pad_rows(f2[5], r), _pad_rows(f2[6], r),            # t_b2, t_v2
         _pad_rows(jnp.asarray(R0), r), _pad_rows(jnp.asarray(R2), r),
         _pad_rows(jnp.asarray(P4a), 16), _pad_rows(jnp.asarray(P4b), 16)], axis=0)

    kernel = _make_kernel(N, T, CN, Kt)
    y_t = pl.pallas_call(
        kernel,
        out_shape=jax.ShapeDtypeStruct((B, 12, N), jnp.float32),
        grid=(B,),
        in_specs=[
            pl.BlockSpec((1, T, CN), lambda b: (b, 0, 0)),
            pl.BlockSpec(w_slab.shape, lambda b: (0, 0)),
            pl.BlockSpec(aux_slab.shape, lambda b: (0, 0)),
            pl.BlockSpec(t_slab.shape, lambda b: (0, 0)),
        ],
        out_specs=pl.BlockSpec((1, 12, N), lambda b: (b, 0, 0)),
        scratch_shapes=[pltpu.VMEM((T, 5 * N), jnp.float32)],
        compiler_params=pltpu.CompilerParams(
            dimension_semantics=("parallel",)),   # B axis -> 2nd TensorCore on v7x
    )(x_tm, w_slab, aux_slab, t_slab)

    # block2 returns its `supports` (= A1) as d_adj; t_adj is unused downstream.
    return jnp.swapaxes(y_t, 1, 2), A1, A1


# ----------------------------------------------------------------------------
# Deterministic synthetic parameters (shapes match the PyTorch module)
# ----------------------------------------------------------------------------
def _uni(key, shape, scale):
    return jax.random.uniform(key, shape, jnp.float32, -scale, scale)


def init_block(key, cin, cout, N, L, K, Kt):
    ks = jax.random.split(key, 10)
    p = {}
    p["conv1_w"] = _uni(ks[0], (cout, cin), 1.0 / math.sqrt(cin))
    p["conv1_b"] = _uni(ks[1], (cout,), 1.0 / math.sqrt(cin))
    p["time_w"] = _uni(ks[2], (cout, cin, Kt), 1.0 / math.sqrt(cin * Kt))
    p["time_b"] = _uni(ks[3], (cout,), 1.0 / math.sqrt(cin * Kt))
    # torch weight (2*cout, K*cout, 1, Kt) with channels (c,k) c-major == (2*cout, cout, K, Kt)
    p["gcn_w"] = _uni(ks[4], (2 * cout, cout, K, Kt), 1.0 / math.sqrt(K * cout * Kt))
    p["gcn_b"] = _uni(ks[5], (2 * cout,), 1.0 / math.sqrt(K * cout * Kt))
    p["t_conv1_w"] = _uni(ks[6], (cout,), 1.0 / math.sqrt(cout))
    p["t_conv2_w"] = _uni(ks[7], (N,), 1.0 / math.sqrt(N))
    p["t_w"] = _uni(ks[8], (N, cout), math.sqrt(6.0 / (N + cout)))    # xavier_uniform
    p["t_b"] = jnp.zeros((L, L), jnp.float32)
    p["t_v"] = _uni(ks[9], (L, L), math.sqrt(6.0 / (2 * L)))          # xavier_uniform
    p["ln_w"] = jnp.ones((cout, N, L), jnp.float32)
    p["ln_b"] = jnp.zeros((cout, N, L), jnp.float32)
    return p


def init_params(key, c_in, c_out, N, L, K, Kt):
    k1, k2, k3, k4, k5, k6, k7 = jax.random.split(key, 7)
    p = {
        "block1": init_block(k1, c_in, c_out, N, L, K, Kt),
        "block2": init_block(k2, c_out, c_out, N, L, K, Kt),
        "h": jax.random.uniform(k3, (N, N), jnp.float32, 0.0, 1e-4),
    }

    def out_conv(k, cin, taps):
        ka, kb = jax.random.split(k)
        s = 1.0 / math.sqrt(cin * taps)
        w = _uni(ka, (cin,) if taps == 1 else (cin, taps), s)
        return w, _uni(kb, (1,), s)

    p["c1_w"], p["c1_b"] = out_conv(k4, c_out, 1)
    p["c2_w"], p["c2_b"] = out_conv(k5, c_out, 1)
    p["c3_w"], p["c3_b"] = out_conv(k6, c_out, 1)
    p["c4_w"], p["c4_b"] = out_conv(k7, c_out, 2)
    return p


# ----------------------------------------------------------------------------
if __name__ == "__main__":
    B, c_in, c_out, N = 2, 2, 8, 16
    week, day, recent = 12, 12, 36      # tem_size = 60 (required by 0:12/.../36:60 slices)
    K, Kt = 3, 3
    L = week + day + recent

    key = jax.random.PRNGKey(0)
    kp, kw, kd, kr, ks = jax.random.split(key, 5)
    params = init_params(kp, c_in, c_out, N, L, K, Kt)

    x_w = jax.random.normal(kw, (B, c_in, N, week), jnp.float32)
    x_d = jax.random.normal(kd, (B, c_in, N, day), jnp.float32)
    x_r = jax.random.normal(kr, (B, c_in, N, recent), jnp.float32)
    supports = jax.random.uniform(ks, (N, N), jnp.float32)

    fwd = jax.jit(functools.partial(dgcn_mask_forward, c_out=c_out, K=K, Kt=Kt))
    out, d_adj, A1 = fwd(params, x_w, x_d, x_r, supports)
    jax.block_until_ready((out, d_adj, A1))

    assert out.shape == (B, N, 12)
    assert d_adj.shape == (N, N) and A1.shape == (N, N)
    print("KERNEL_OK")
</pallas_src>

<mosaic_0001>
module attributes {stable_mosaic.version = 11 : i64} {
  func.func @kernel(%arg0: i32, %arg1: memref<1x60x128xf32, #tpu.memory_space<vmem>>, %arg2: memref<128x2640xbf16, #tpu.memory_space<vmem>>, %arg3: memref<528x128xf32, #tpu.memory_space<vmem>>, %arg4: memref<416x60xf32, #tpu.memory_space<vmem>>, %arg5: memref<1x12x16xf32, #tpu.memory_space<vmem>>, %arg6: memref<60x80xf32, #tpu.memory_space<vmem>>) attributes {dimension_semantics = [#tpu.dimension_semantics<parallel>], iteration_bounds = array<i64: 2>, scalar_prefetch = 0 : i64, scratch_operands = 1 : i64, tpu.core_type = #tpu.core_type<tc>, window_params = [{transform_indices = @transform_0, window_bounds = array<i64: 1, 60, 128>}, {pipeline_mode = #tpu.pipeline_mode<synchronous>, transform_indices = @transform_1, window_bounds = array<i64: 128, 2640>}, {pipeline_mode = #tpu.pipeline_mode<synchronous>, transform_indices = @transform_2, window_bounds = array<i64: 528, 128>}, {pipeline_mode = #tpu.pipeline_mode<synchronous>, transform_indices = @transform_3, window_bounds = array<i64: 416, 60>}, {transform_indices = @transform_4, window_bounds = array<i64: 1, 12, 16>}]} {
    %c256 = arith.constant 256 : index
    %c0 = arith.constant 0 : index
    %0 = vector.load %arg4[%c256, %c0] : memref<416x60xf32, #tpu.memory_space<vmem>>, vector<60x60xf32>
    %c320 = arith.constant 320 : index
    %c0_0 = arith.constant 0 : index
    %1 = vector.load %arg4[%c320, %c0_0] : memref<416x60xf32, #tpu.memory_space<vmem>>, vector<60x60xf32>
    %c0_1 = arith.constant 0 : index
    %c0_2 = arith.constant 0 : index
    %c0_3 = arith.constant 0 : index
    %2 = vector.load %arg1[%c0_1, %c0_2, %c0_3] : memref<1x60x128xf32, #tpu.memory_space<vmem>>, vector<1x60x128xf32>
    %3 = vector.shape_cast %2 : vector<1x60x128xf32> to vector<60x128xf32>
    %4 = arith.truncf %3 : vector<60x128xf32> to vector<60x128xbf16>
    %c0_4 = arith.constant 0 : index
    %c0_5 = arith.constant 0 : index
    %5 = vector.load %arg2[%c0_4, %c0_5] : memref<128x2640xbf16, #tpu.memory_space<vmem>>, vector<128x128xbf16>
    %cst = arith.constant dense<0.000000e+00> : vector<60x128xf32>
    %6 = tpu.matmul %4, %5, %cst {dimension_numbers = #tpu.dot_dimension_numbers<[1], [0], [0], [1], [0, 0, 1, 1], [], []>} : vector<60x128xbf16>, vector<128x128xbf16>, vector<60x128xf32> -> vector<60x128xf32>
    %c512 = arith.constant 512 : index
    %c0_6 = arith.constant 0 : index
    %7 = vector.load %arg3[%c512, %c0_6] : memref<528x128xf32, #tpu.memory_space<vmem>>, vector<1x128xf32>
    %8 = vector.broadcast %7 : vector<1x128xf32> to vector<60x128xf32>
    %9 = arith.addf %6, %8 : vector<60x128xf32>
    %c0_7 = arith.constant 0 : index
    %c128 = arith.constant 128 : index
    %10 = vector.load %arg2[%c0_7, %c128] : memref<128x2640xbf16, #tpu.memory_space<vmem>>, vector<128x384xbf16>
    %cst_8 = arith.constant dense<0.000000e+00> : vector<60x384xf32>
    %11 = tpu.matmul %4, %10, %cst_8 {dimension_numbers = #tpu.dot_dimension_numbers<[1], [0], [0], [1], [0, 0, 1, 1], [], []>} : vector<60x128xbf16>, vector<128x384xbf16>, vector<60x384xf32> -> vector<60x384xf32>
    %12 = vector.extract_strided_slice %11 {offsets = [0, 0], sizes = [60, 128], strides = [1, 1]} : vector<60x384xf32> to vector<60x128xf32>
    %cst_9 = arith.constant dense<0.000000e+00> : vector<60x128xf32>
    %13 = tpu.matmul %0, %12, %cst_9 {dimension_numbers = #tpu.dot_dimension_numbers<[1], [0], [0], [1], [0, 0, 1, 1], [], []>} : vector<60x60xf32>, vector<60x128xf32>, vector<60x128xf32> -> vector<60x128xf32>
    %14 = vector.extract_strided_slice %11 {offsets = [0, 128], sizes = [60, 128], strides = [1, 1]} : vector<60x384xf32> to vector<60x128xf32>
    %15 = arith.addf %13, %14 : vector<60x128xf32>
    %16 = vector.extract_strided_slice %11 {offsets = [0, 256], sizes = [60, 128], strides = [1, 1]} : vector<60x384xf32> to vector<60x128xf32>
    %cst_10 = arith.constant dense<0.000000e+00> : vector<60x128xf32>
    %17 = tpu.matmul %1, %16, %cst_10 {dimension_numbers = #tpu.dot_dimension_numbers<[1], [0], [0], [1], [0, 0, 1, 1], [], []>} : vector<60x60xf32>, vector<60x128xf32>, vector<60x128xf32> -> vector<60x128xf32>
    %18 = arith.addf %15, %17 : vector<60x128xf32>
    %c513 = arith.constant 513 : index
    %c0_11 = arith.constant 0 : index
    %19 = vector.load %arg3[%c513, %c0_11] : memref<528x128xf32, #tpu.memory_space<vmem>>, vector<1x128xf32>
    %20 = vector.broadcast %19 : vector<1x128xf32> to vector<60x128xf32>
    %21 = arith.addf %18, %20 : vector<60x128xf32>
    %cst_12 = arith.constant 0.000000e+00 : f32
    %22 = vector.broadcast %cst_12 : f32 to vector<60x128xf32>
    %23 = arith.cmpf ogt, %21, %22 : vector<60x128xf32>
    %cst_13 = arith.constant 0.00999999977 : f32
    %24 = vector.broadcast %cst_13 : f32 to vector<60x128xf32>
    %25 = arith.mulf %24, %21 : vector<60x128xf32>
    %26 = arith.select %23, %21, %25 : vector<60x128xi1>, vector<60x128xf32>
    %27 = arith.truncf %26 : vector<60x128xf32> to vector<60x128xbf16>
    %c0_14 = arith.constant 0 : index
    %c512_15 = arith.constant 512 : index
    %28 = vector.load %arg2[%c0_14, %c512_15] : memref<128x2640xbf16, #tpu.memory_space<vmem>>, vector<128x384xbf16>
    %cst_16 = arith.constant dense<0.000000e+00> : vector<60x384xf32>
    %29 = tpu.matmul %27, %28, %cst_16 {dimension_numbers = #tpu.dot_dimension_numbers<[1], [0], [0], [1], [0, 0, 1, 1], [], []>} : vector<60x128xbf16>, vector<128x384xbf16>, vector<60x384xf32> -> vector<60x384xf32>
    %30 = vector.extract_strided_slice %29 {offsets = [0, 0], sizes = [60, 128], strides = [1, 1]} : vector<60x384xf32> to vector<60x128xf32>
    %cst_17 = arith.constant dense<0.000000e+00> : vector<60x128xf32>
    %31 = tpu.matmul %0, %30, %cst_17 {dimension_numbers = #tpu.dot_dimension_numbers<[1], [0], [0], [1], [0, 0, 1, 1], [], []>} : vector<60x60xf32>, vector<60x128xf32>, vector<60x128xf32> -> vector<60x128xf32>
    %32 = vector.extract_strided_slice %29 {offsets = [0, 128], sizes = [60, 128], strides = [1, 1]} : vector<60x384xf32> to vector<60x128xf32>
    %33 = arith.addf %31, %32 : vector<60x128xf32>
    %34 = vector.extract_strided_slice %29 {offsets = [0, 256], sizes = [60, 128], strides = [1, 1]} : vector<60x384xf32> to vector<60x128xf32>
    %cst_18 = arith.constant dense<0.000000e+00> : vector<60x128xf32>
    %35 = tpu.matmul %1, %34, %cst_18 {dimension_numbers = #tpu.dot_dimension_numbers<[1], [0], [0], [1], [0, 0, 1, 1], [], []>} : vector<60x60xf32>, vector<60x128xf32>, vector<60x128xf32> -> vector<60x128xf32>
    %36 = arith.addf %33, %35 : vector<60x128xf32>
    %c514 = arith.constant 514 : index
    %c0_19 = arith.constant 0 : index
    %37 = vector.load %arg3[%c514, %c0_19] : memref<528x128xf32, #tpu.memory_space<vmem>>, vector<1x128xf32>
    %38 = vector.broadcast %37 : vector<1x128xf32> to vector<60x128xf32>
    %39 = arith.addf %36, %38 : vector<60x128xf32>
    %cst_20 = arith.constant 0.000000e+00 : f32
    %40 = vector.broadcast %cst_20 : f32 to vector<60x128xf32>
    %41 = arith.cmpf ogt, %39, %40 : vector<60x128xf32>
    %cst_21 = arith.constant 0.00999999977 : f32
    %42 = vector.broadcast %cst_21 : f32 to vector<60x128xf32>
    %43 = arith.mulf %42, %39 : vector<60x128xf32>
    %44 = arith.select %41, %39, %43 : vector<60x128xi1>, vector<60x128xf32>
    %c0_22 = arith.constant 0 : index
    %c896 = arith.constant 896 : index
    %45 = vector.load %arg2[%c0_22, %c896] : memref<128x2640xbf16, #tpu.memory_space<vmem>>, vector<128x384xbf16>
    %cst_23 = arith.constant dense<0.000000e+00> : vector<60x384xf32>
    %46 = tpu.matmul %27, %45, %cst_23 {dimension_numbers = #tpu.dot_dimension_numbers<[1], [0], [0], [1], [0, 0, 1, 1], [], []>} : vector<60x128xbf16>, vector<128x384xbf16>, vector<60x384xf32> -> vector<60x384xf32>
    %47 = vector.extract_strided_slice %46 {offsets = [0, 0], sizes = [60, 128], strides = [1, 1]} : vector<60x384xf32> to vector<60x128xf32>
    %cst_24 = arith.constant dense<0.000000e+00> : vector<60x128xf32>
    %48 = tpu.matmul %0, %47, %cst_24 {dimension_numbers = #tpu.dot_dimension_numbers<[1], [0], [0], [1], [0, 0, 1, 1], [], []>} : vector<60x60xf32>, vector<60x128xf32>, vector<60x128xf32> -> vector<60x128xf32>
    %49 = vector.extract_strided_slice %46 {offsets = [0, 128], sizes = [60, 128], strides = [1, 1]} : vector<60x384xf32> to vector<60x128xf32>
    %50 = arith.addf %48, %49 : vector<60x128xf32>
    %51 = vector.extract_strided_slice %46 {offsets = [0, 256], sizes = [60, 128], strides = [1, 1]} : vector<60x384xf32> to vector<60x128xf32>
    %cst_25 = arith.constant dense<0.000000e+00> : vector<60x128xf32>
    %52 = tpu.matmul %1, %51, %cst_25 {dimension_numbers = #tpu.dot_dimension_numbers<[1], [0], [0], [1], [0, 0, 1, 1], [], []>} : vector<60x60xf32>, vector<60x128xf32>, vector<60x128xf32> -> vector<60x128xf32>
    %53 = arith.addf %50, %52 : vector<60x128xf32>
    %c515 = arith.constant 515 : index
    %c0_26 = arith.constant 0 : index
    %54 = vector.load %arg3[%c515, %c0_26] : memref<528x128xf32, #tpu.memory_space<vmem>>, vector<1x128xf32>
    %55 = vector.broadcast %54 : vector<1x128xf32> to vector<60x128xf32>
    %56 = arith.addf %53, %55 : vector<60x128xf32>
    %cst_27 = arith.constant 5.000000e-01 : f32
    %57 = vector.broadcast %cst_27 : f32 to vector<60x128xf32>
    %58 = arith.mulf %57, %56 : vector<60x128xf32>
    %59 = math.tanh %58 : vector<60x128xf32>
    %cst_28 = arith.constant 1.000000e+00 : f32
    %60 = vector.broadcast %cst_28 : f32 to vector<60x128xf32>
    %61 = arith.addf %59, %60 : vector<60x128xf32>
    %cst_29 = arith.constant 5.000000e-01 : f32
    %62 = vector.broadcast %cst_29 : f32 to vector<60x128xf32>
    %63 = arith.mulf %62, %61 : vector<60x128xf32>
    %64 = arith.mulf %63, %44 : vector<60x128xf32>
    %c0_30 = arith.constant 0 : index
    %c0_31 = arith.constant 0 : index
    %65 = vector.load %arg3[%c0_30, %c0_31] : memref<528x128xf32, #tpu.memory_space<vmem>>, vector<128x128xf32>
    %cst_32 = arith.constant dense<0.000000e+00> : vector<60x128xf32>
    %66 = tpu.matmul %64, %65, %cst_32 {dimension_numbers = #tpu.dot_dimension_numbers<[1], [0], [0], [1], [0, 0, 1, 1], [], []>} : vector<60x128xf32>, vector<128x128xf32>, vector<60x128xf32> -> vector<60x128xf32>
    %cst_33 = arith.constant dense<0.000000e+00> : vector<60x60xf32>
    %67 = tpu.matmul %66, %64, %cst_33 {dimension_numbers = #tpu.dot_dimension_numbers<[1], [1], [0], [0], [0, 0, 1, 0], [], []>} : vector<60x128xf32>, vector<60x128xf32>, vector<60x60xf32> -> vector<60x60xf32>
    %c0_34 = arith.constant 0 : index
    %c0_35 = arith.constant 0 : index
    %68 = vector.load %arg4[%c0_34, %c0_35] : memref<416x60xf32, #tpu.memory_space<vmem>>, vector<60x60xf32>
    %69 = arith.addf %67, %68 : vector<60x60xf32>
    %cst_36 = arith.constant 5.000000e-01 : f32
    %70 = vector.broadcast %cst_36 : f32 to vector<60x60xf32>
    %71 = arith.mulf %70, %69 : vector<60x60xf32>
    %72 = math.tanh %71 : vector<60x60xf32>
    %cst_37 = arith.constant 1.000000e+00 : f32
    %73 = vector.broadcast %cst_37 : f32 to vector<60x60xf32>
    %74 = arith.addf %72, %73 : vector<60x60xf32>
    %cst_38 = arith.constant 5.000000e-01 : f32
    %75 = vector.broadcast %cst_38 : f32 to vector<60x60xf32>
    %76 = arith.mulf %75, %74 : vector<60x60xf32>
    %c64 = arith.constant 64 : index
    %c0_39 = arith.constant 0 : index
    %77 = vector.load %arg4[%c64, %c0_39] : memref<416x60xf32, #tpu.memory_space<vmem>>, vector<60x60xf32>
    %cst_40 = arith.constant dense<0.000000e+00> : vector<60x60xf32>
    %78 = tpu.matmul %77, %76, %cst_40 {dimension_numbers = #tpu.dot_dimension_numbers<[1], [0], [0], [1], [0, 0, 1, 1], [], []>} : vector<60x60xf32>, vector<60x60xf32>, vector<60x60xf32> -> vector<60x60xf32>
    %cst_41 = arith.constant 0.999994993 : f32
    %79 = vector.broadcast %cst_41 : f32 to vector<60x60xf32>
    %80 = arith.mulf %78, %79 : vector<60x60xf32>
    %cst_42 = arith.constant dense<0xFF800000> : vector<60xf32>
    %81 = vector.multi_reduction <maximumf>, %80, %cst_42 [1] : vector<60x60xf32> to vector<60xf32>
    %82 = vector.shape_cast %81 : vector<60xf32> to vector<60x1xf32>
    %83 = vector.broadcast %82 : vector<60x1xf32> to vector<60x60xf32>
    %84 = arith.subf %80, %83 : vector<60x60xf32>
    %85 = math.exp %84 : vector<60x60xf32>
    %cst_43 = arith.constant dense<0.000000e+00> : vector<60xf32>
    %86 = vector.multi_reduction <add>, %85, %cst_43 [1] : vector<60x60xf32> to vector<60xf32>
    %87 = vector.shape_cast %86 : vector<60xf32> to vector<60x1xf32>
    %88 = vector.broadcast %87 : vector<60x1xf32> to vector<60x60xf32>
    %89 = arith.divf %85, %88 : vector<60x60xf32>
    %cst_44 = arith.constant dense<0.000000e+00> : vector<60x128xf32>
    %90 = tpu.matmul %89, %64, %cst_44 {dimension_numbers = #tpu.dot_dimension_numbers<[1], [0], [0], [1], [0, 0, 1, 1], [], []>} : vector<60x60xf32>, vector<60x128xf32>, vector<60x128xf32> -> vector<60x128xf32>
    %cst_45 = arith.constant 0.000000e+00 : f32
    %91 = vector.broadcast %cst_45 : f32 to vector<60x128xf32>
    %92 = arith.cmpf ogt, %90, %91 : vector<60x128xf32>
    %cst_46 = arith.constant 0.00999999977 : f32
    %93 = vector.broadcast %cst_46 : f32 to vector<60x128xf32>
    %94 = arith.mulf %93, %90 : vector<60x128xf32>
    %95 = arith.select %92, %90, %94 : vector<60x128xi1>, vector<60x128xf32>
    %96 = arith.addf %95, %9 : vector<60x128xf32>
    %97 = vector.shape_cast %96 : vector<60x128xf32> to vector<1x60x128xf32>
    %cst_47 = arith.constant dense<0.000000e+00> : vector<1xf32>
    %98 = vector.multi_reduction <add>, %97, %cst_47 [1, 2] : vector<1x60x128xf32> to vector<1xf32>
    %99 = vector.shape_cast %98 : vector<1xf32> to vector<1x1x1xf32>
    %100 = vector.extract %99[0, 0, 0] : f32 from vector<1x1x1xf32>
    %101 = vector.broadcast %100 : f32 to vector<1x1xf32>
    %cst_48 = arith.constant 7.680000e+03 : f32
    %102 = vector.broadcast %cst_48 : f32 to vector<1x1xf32>
    %103 = arith.divf %101, %102 : vector<1x1xf32>
    %104 = vector.broadcast %103 : vector<1x1xf32> to vector<60x128xf32>
    %105 = arith.subf %96, %104 : vector<60x128xf32>
    %106 = arith.mulf %105, %105 : vector<60x128xf32>
    %107 = vector.shape_cast %106 : vector<60x128xf32> to vector<1x60x128xf32>
    %cst_49 = arith.constant dense<0.000000e+00> : vector<1xf32>
    %108 = vector.multi_reduction <add>, %107, %cst_49 [1, 2] : vector<1x60x128xf32> to vector<1xf32>
    %109 = vector.shape_cast %108 : vector<1xf32> to vector<1x1x1xf32>
    %110 = vector.extract %109[0, 0, 0] : f32 from vector<1x1x1xf32>
    %111 = vector.broadcast %110 : f32 to vector<1x1xf32>
    %cst_50 = arith.constant 7.680000e+03 : f32
    %112 = vector.broadcast %cst_50 : f32 to vector<1x1xf32>
    %113 = arith.divf %111, %112 : vector<1x1xf32>
    %114 = vector.broadcast %103 : vector<1x1xf32> to vector<60x128xf32>
    %115 = arith.subf %96, %114 : vector<60x128xf32>
    %cst_51 = arith.constant 9.99999974E-6 : f32
    %116 = vector.broadcast %cst_51 : f32 to vector<1x1xf32>
    %117 = arith.addf %113, %116 : vector<1x1xf32>
    %118 = math.rsqrt %117 : vector<1x1xf32>
    %119 = vector.broadcast %118 : vector<1x1xf32> to vector<60x128xf32>
    %120 = arith.mulf %115, %119 : vector<60x128xf32>
    %c256_52 = arith.constant 256 : index
    %c0_53 = arith.constant 0 : index
    %121 = vector.load %arg3[%c256_52, %c0_53] : memref<528x128xf32, #tpu.memory_space<vmem>>, vector<60x128xf32>
    %122 = arith.mulf %120, %121 : vector<60x128xf32>
    %c320_54 = arith.constant 320 : index
    %c0_55 = arith.constant 0 : index
    %123 = vector.load %arg3[%c320_54, %c0_55] : memref<528x128xf32, #tpu.memory_space<vmem>>, vector<60x128xf32>
    %124 = arith.addf %122, %123 : vector<60x128xf32>
    %125 = arith.truncf %124 : vector<60x128xf32> to vector<60x128xbf16>
    %c0_56 = arith.constant 0 : index
    %c1280 = arith.constant 1280 : index
    %126 = vector.load %arg2[%c0_56, %c1280] : memref<128x2640xbf16, #tpu.memory_space<vmem>>, vector<128x128xbf16>
    %cst_57 = arith.constant dense<0.000000e+00> : vector<60x128xf32>
    %127 = tpu.matmul %125, %126, %cst_57 {dimension_numbers = #tpu.dot_dimension_numbers<[1], [0], [0], [1], [0, 0, 1, 1], [], []>} : vector<60x128xbf16>, vector<128x128xbf16>, vector<60x128xf32> -> vector<60x128xf32>
    %c516 = arith.constant 516 : index
    %c0_58 = arith.constant 0 : index
    %128 = vector.load %arg3[%c516, %c0_58] : memref<528x128xf32, #tpu.memory_space<vmem>>, vector<1x128xf32>
    %129 = vector.broadcast %128 : vector<1x128xf32> to vector<60x128xf32>
    %130 = arith.addf %127, %129 : vector<60x128xf32>
    %c0_59 = arith.constant 0 : index
    %c1408 = arith.constant 1408 : index
    %131 = vector.load %arg2[%c0_59, %c1408] : memref<128x2640xbf16, #tpu.memory_space<vmem>>, vector<128x384xbf16>
    %cst_60 = arith.constant dense<0.000000e+00> : vector<60x384xf32>
    %132 = tpu.matmul %125, %131, %cst_60 {dimension_numbers = #tpu.dot_dimension_numbers<[1], [0], [0], [1], [0, 0, 1, 1], [], []>} : vector<60x128xbf16>, vector<128x384xbf16>, vector<60x384xf32> -> vector<60x384xf32>
    %133 = vector.extract_strided_slice %132 {offsets = [0, 0], sizes = [60, 128], strides = [1, 1]} : vector<60x384xf32> to vector<60x128xf32>
    %cst_61 = arith.constant dense<0.000000e+00> : vector<60x128xf32>
    %134 = tpu.matmul %0, %133, %cst_61 {dimension_numbers = #tpu.dot_dimension_numbers<[1], [0], [0], [1], [0, 0, 1, 1], [], []>} : vector<60x60xf32>, vector<60x128xf32>, vector<60x128xf32> -> vector<60x128xf32>
    %135 = vector.extract_strided_slice %132 {offsets = [0, 128], sizes = [60, 128], strides = [1, 1]} : vector<60x384xf32> to vector<60x128xf32>
    %136 = arith.addf %134, %135 : vector<60x128xf32>
    %137 = vector.extract_strided_slice %132 {offsets = [0, 256], sizes = [60, 128], strides = [1, 1]} : vector<60x384xf32> to vector<60x128xf32>
    %cst_62 = arith.constant dense<0.000000e+00> : vector<60x128xf32>
    %138 = tpu.matmul %1, %137, %cst_62 {dimension_numbers = #tpu.dot_dimension_numbers<[1], [0], [0], [1], [0, 0, 1, 1], [], []>} : vector<60x60xf32>, vector<60x128xf32>, vector<60x128xf32> -> vector<60x128xf32>
    %139 = arith.addf %136, %138 : vector<60x128xf32>
    %c517 = arith.constant 517 : index
    %c0_63 = arith.constant 0 : index
    %140 = vector.load %arg3[%c517, %c0_63] : memref<528x128xf32, #tpu.memory_space<vmem>>, vector<1x128xf32>
    %141 = vector.broadcast %140 : vector<1x128xf32> to vector<60x128xf32>
    %142 = arith.addf %139, %141 : vector<60x128xf32>
    %cst_64 = arith.constant 0.000000e+00 : f32
    %143 = vector.broadcast %cst_64 : f32 to vector<60x128xf32>
    %144 = arith.cmpf ogt, %142, %143 : vector<60x128xf32>
    %cst_65 = arith.constant 0.00999999977 : f32
    %145 = vector.broadcast %cst_65 : f32 to vector<60x128xf32>
    %146 = arith.mulf %145, %142 : vector<60x128xf32>
    %147 = arith.select %144, %142, %146 : vector<60x128xi1>, vector<60x128xf32>
    %148 = arith.truncf %147 : vector<60x128xf32> to vector<60x128xbf16>
    %c0_66 = arith.constant 0 : index
    %c1792 = arith.constant 1792 : index
    %149 = vector.load %arg2[%c0_66, %c1792] : memref<128x2640xbf16, #tpu.memory_space<vmem>>, vector<128x384xbf16>
    %cst_67 = arith.constant dense<0.000000e+00> : vector<60x384xf32>
    %150 = tpu.matmul %148, %149, %cst_67 {dimension_numbers = #tpu.dot_dimension_numbers<[1], [0], [0], [1], [0, 0, 1, 1], [], []>} : vector<60x128xbf16>, vector<128x384xbf16>, vector<60x384xf32> -> vector<60x384xf32>
    %151 = vector.extract_strided_slice %150 {offsets = [0, 0], sizes = [60, 128], strides = [1, 1]} : vector<60x384xf32> to vector<60x128xf32>
    %cst_68 = arith.constant dense<0.000000e+00> : vector<60x128xf32>
    %152 = tpu.matmul %0, %151, %cst_68 {dimension_numbers = #tpu.dot_dimension_numbers<[1], [0], [0], [1], [0, 0, 1, 1], [], []>} : vector<60x60xf32>, vector<60x128xf32>, vector<60x128xf32> -> vector<60x128xf32>
    %153 = vector.extract_strided_slice %150 {offsets = [0, 128], sizes = [60, 128], strides = [1, 1]} : vector<60x384xf32> to vector<60x128xf32>
    %154 = arith.addf %152, %153 : vector<60x128xf32>
    %155 = vector.extract_strided_slice %150 {offsets = [0, 256], sizes = [60, 128], strides = [1, 1]} : vector<60x384xf32> to vector<60x128xf32>
    %cst_69 = arith.constant dense<0.000000e+00> : vector<60x128xf32>
    %156 = tpu.matmul %1, %155, %cst_69 {dimension_numbers = #tpu.dot_dimension_numbers<[1], [0], [0], [1], [0, 0, 1, 1], [], []>} : vector<60x60xf32>, vector<60x128xf32>, vector<60x128xf32> -> vector<60x128xf32>
    %157 = arith.addf %154, %156 : vector<60x128xf32>
    %c518 = arith.constant 518 : index
    %c0_70 = arith.constant 0 : index
    %158 = vector.load %arg3[%c518, %c0_70] : memref<528x128xf32, #tpu.memory_space<vmem>>, vector<1x128xf32>
    %159 = vector.broadcast %158 : vector<1x128xf32> to vector<60x128xf32>
    %160 = arith.addf %157, %159 : vector<60x128xf32>
    %cst_71 = arith.constant 0.000000e+00 : f32
    %161 = vector.broadcast %cst_71 : f32 to vector<60x128xf32>
    %162 = arith.cmpf ogt, %160, %161 : vector<60x128xf32>
    %cst_72 = arith.constant 0.00999999977 : f32
    %163 = vector.broadcast %cst_72 : f32 to vector<60x128xf32>
    %164 = arith.mulf %163, %160 : vector<60x128xf32>
    %165 = arith.select %162, %160, %164 : vector<60x128xi1>, vector<60x128xf32>
    %c0_73 = arith.constant 0 : index
    %c2176 = arith.constant 2176 : index
    %166 = vector.load %arg2[%c0_73, %c2176] : memref<128x2640xbf16, #tpu.memory_space<vmem>>, vector<128x384xbf16>
    %cst_74 = arith.constant dense<0.000000e+00> : vector<60x384xf32>
    %167 = tpu.matmul %148, %166, %cst_74 {dimension_numbers = #tpu.dot_dimension_numbers<[1], [0], [0], [1], [0, 0, 1, 1], [], []>} : vector<60x128xbf16>, vector<128x384xbf16>, vector<60x384xf32> -> vector<60x384xf32>
    %168 = vector.extract_strided_slice %167 {offsets = [0, 0], sizes = [60, 128], strides = [1, 1]} : vector<60x384xf32> to vector<60x128xf32>
    %cst_75 = arith.constant dense<0.000000e+00> : vector<60x128xf32>
    %169 = tpu.matmul %0, %168, %cst_75 {dimension_numbers = #tpu.dot_dimension_numbers<[1], [0], [0], [1], [0, 0, 1, 1], [], []>} : vector<60x60xf32>, vector<60x128xf32>, vector<60x128xf32> -> vector<60x128xf32>
    %170 = vector.extract_strided_slice %167 {offsets = [0, 128], sizes = [60, 128], strides = [1, 1]} : vector<60x384xf32> to vector<60x128xf32>
    %171 = arith.addf %169, %170 : vector<60x128xf32>
    %172 = vector.extract_strided_slice %167 {offsets = [0, 256], sizes = [60, 128], strides = [1, 1]} : vector<60x384xf32> to vector<60x128xf32>
    %cst_76 = arith.constant dense<0.000000e+00> : vector<60x128xf32>
    %173 = tpu.matmul %1, %172, %cst_76 {dimension_numbers = #tpu.dot_dimension_numbers<[1], [0], [0], [1], [0, 0, 1, 1], [], []>} : vector<60x60xf32>, vector<60x128xf32>, vector<60x128xf32> -> vector<60x128xf32>
    %174 = arith.addf %171, %173 : vector<60x128xf32>
    %c519 = arith.constant 519 : index
    %c0_77 = arith.constant 0 : index
    %175 = vector.load %arg3[%c519, %c0_77] : memref<528x128xf32, #tpu.memory_space<vmem>>, vector<1x128xf32>
    %176 = vector.broadcast %175 : vector<1x128xf32> to vector<60x128xf32>
    %177 = arith.addf %174, %176 : vector<60x128xf32>
    %cst_78 = arith.constant 5.000000e-01 : f32
    %178 = vector.broadcast %cst_78 : f32 to vector<60x128xf32>
    %179 = arith.mulf %178, %177 : vector<60x128xf32>
    %180 = math.tanh %179 : vector<60x128xf32>
    %cst_79 = arith.constant 1.000000e+00 : f32
    %181 = vector.broadcast %cst_79 : f32 to vector<60x128xf32>
    %182 = arith.addf %180, %181 : vector<60x128xf32>
    %cst_80 = arith.constant 5.000000e-01 : f32
    %183 = vector.broadcast %cst_80 : f32 to vector<60x128xf32>
    %184 = arith.mulf %183, %182 : vector<60x128xf32>
    %185 = arith.mulf %184, %165 : vector<60x128xf32>
    %c128_81 = arith.constant 128 : index
    %c0_82 = arith.constant 0 : index
    %186 = vector.load %arg3[%c128_81, %c0_82] : memref<528x128xf32, #tpu.memory_space<vmem>>, vector<128x128xf32>
    %cst_83 = arith.constant dense<0.000000e+00> : vector<60x128xf32>
    %187 = tpu.matmul %185, %186, %cst_83 {dimension_numbers = #tpu.dot_dimension_numbers<[1], [0], [0], [1], [0, 0, 1, 1], [], []>} : vector<60x128xf32>, vector<128x128xf32>, vector<60x128xf32> -> vector<60x128xf32>
    %cst_84 = arith.constant dense<0.000000e+00> : vector<60x60xf32>
    %188 = tpu.matmul %187, %185, %cst_84 {dimension_numbers = #tpu.dot_dimension_numbers<[1], [1], [0], [0], [0, 0, 1, 0], [], []>} : vector<60x128xf32>, vector<60x128xf32>, vector<60x60xf32> -> vector<60x60xf32>
    %c128_85 = arith.constant 128 : index
    %c0_86 = arith.constant 0 : index
    %189 = vector.load %arg4[%c128_85, %c0_86] : memref<416x60xf32, #tpu.memory_space<vmem>>, vector<60x60xf32>
    %190 = arith.addf %188, %189 : vector<60x60xf32>
    %cst_87 = arith.constant 5.000000e-01 : f32
    %191 = vector.broadcast %cst_87 : f32 to vector<60x60xf32>
    %192 = arith.mulf %191, %190 : vector<60x60xf32>
    %193 = math.tanh %192 : vector<60x60xf32>
    %cst_88 = arith.constant 1.000000e+00 : f32
    %194 = vector.broadcast %cst_88 : f32 to vector<60x60xf32>
    %195 = arith.addf %193, %194 : vector<60x60xf32>
    %cst_89 = arith.constant 5.000000e-01 : f32
    %196 = vector.broadcast %cst_89 : f32 to vector<60x60xf32>
    %197 = arith.mulf %196, %195 : vector<60x60xf32>
    %c192 = arith.constant 192 : index
    %c0_90 = arith.constant 0 : index
    %198 = vector.load %arg4[%c192, %c0_90] : memref<416x60xf32, #tpu.memory_space<vmem>>, vector<60x60xf32>
    %cst_91 = arith.constant dense<0.000000e+00> : vector<60x60xf32>
    %199 = tpu.matmul %198, %197, %cst_91 {dimension_numbers = #tpu.dot_dimension_numbers<[1], [0], [0], [1], [0, 0, 1, 1], [], []>} : vector<60x60xf32>, vector<60x60xf32>, vector<60x60xf32> -> vector<60x60xf32>
    %cst_92 = arith.constant 0.999994993 : f32
    %200 = vector.broadcast %cst_92 : f32 to vector<60x60xf32>
    %201 = arith.mulf %199, %200 : vector<60x60xf32>
    %cst_93 = arith.constant dense<0xFF800000> : vector<60xf32>
    %202 = vector.multi_reduction <maximumf>, %201, %cst_93 [1] : vector<60x60xf32> to vector<60xf32>
    %203 = vector.shape_cast %202 : vector<60xf32> to vector<60x1xf32>
    %204 = vector.broadcast %203 : vector<60x1xf32> to vector<60x60xf32>
    %205 = arith.subf %201, %204 : vector<60x60xf32>
    %206 = math.exp %205 : vector<60x60xf32>
    %cst_94 = arith.constant dense<0.000000e+00> : vector<60xf32>
    %207 = vector.multi_reduction <add>, %206, %cst_94 [1] : vector<60x60xf32> to vector<60xf32>
    %208 = vector.shape_cast %207 : vector<60xf32> to vector<60x1xf32>
    %209 = vector.broadcast %208 : vector<60x1xf32> to vector<60x60xf32>
    %210 = arith.divf %206, %209 : vector<60x60xf32>
    %cst_95 = arith.constant dense<0.000000e+00> : vector<60x128xf32>
    %211 = tpu.matmul %210, %185, %cst_95 {dimension_numbers = #tpu.dot_dimension_numbers<[1], [0], [0], [1], [0, 0, 1, 1], [], []>} : vector<60x60xf32>, vector<60x128xf32>, vector<60x128xf32> -> vector<60x128xf32>
    %cst_96 = arith.constant 0.000000e+00 : f32
    %212 = vector.broadcast %cst_96 : f32 to vector<60x128xf32>
    %213 = arith.cmpf ogt, %211, %212 : vector<60x128xf32>
    %cst_97 = arith.constant 0.00999999977 : f32
    %214 = vector.broadcast %cst_97 : f32 to vector<60x128xf32>
    %215 = arith.mulf %214, %211 : vector<60x128xf32>
    %216 = arith.select %213, %211, %215 : vector<60x128xi1>, vector<60x128xf32>
    %217 = arith.addf %216, %130 : vector<60x128xf32>
    %218 = vector.shape_cast %217 : vector<60x128xf32> to vector<1x60x128xf32>
    %cst_98 = arith.constant dense<0.000000e+00> : vector<1xf32>
    %219 = vector.multi_reduction <add>, %218, %cst_98 [1, 2] : vector<1x60x128xf32> to vector<1xf32>
    %220 = vector.shape_cast %219 : vector<1xf32> to vector<1x1x1xf32>
    %221 = vector.extract %220[0, 0, 0] : f32 from vector<1x1x1xf32>
    %222 = vector.broadcast %221 : f32 to vector<1x1xf32>
    %cst_99 = arith.constant 7.680000e+03 : f32
    %223 = vector.broadcast %cst_99 : f32 to vector<1x1xf32>
    %224 = arith.divf %222, %223 : vector<1x1xf32>
    %225 = vector.broadcast %224 : vector<1x1xf32> to vector<60x128xf32>
    %226 = arith.subf %217, %225 : vector<60x128xf32>
    %227 = arith.mulf %226, %226 : vector<60x128xf32>
    %228 = vector.shape_cast %227 : vector<60x128xf32> to vector<1x60x128xf32>
    %cst_100 = arith.constant dense<0.000000e+00> : vector<1xf32>
    %229 = vector.multi_reduction <add>, %228, %cst_100 [1, 2] : vector<1x60x128xf32> to vector<1xf32>
    %230 = vector.shape_cast %229 : vector<1xf32> to vector<1x1x1xf32>
    %231 = vector.extract %230[0, 0, 0] : f32 from vector<1x1x1xf32>
    %232 = vector.broadcast %231 : f32 to vector<1x1xf32>
    %cst_101 = arith.constant 7.680000e+03 : f32
    %233 = vector.broadcast %cst_101 : f32 to vector<1x1xf32>
    %234 = arith.divf %232, %233 : vector<1x1xf32>
    %235 = vector.broadcast %224 : vector<1x1xf32> to vector<60x128xf32>
    %236 = arith.subf %217, %235 : vector<60x128xf32>
    %cst_102 = arith.constant 9.99999974E-6 : f32
    %237 = vector.broadcast %cst_102 : f32 to vector<1x1xf32>
    %238 = arith.addf %234, %237 : vector<1x1xf32>
    %239 = math.rsqrt %238 : vector<1x1xf32>
    %240 = vector.broadcast %239 : vector<1x1xf32> to vector<60x128xf32>
    %241 = arith.mulf %236, %240 : vector<60x128xf32>
    %c384 = arith.constant 384 : index
    %c0_103 = arith.constant 0 : index
    %242 = vector.load %arg3[%c384, %c0_103] : memref<528x128xf32, #tpu.memory_space<vmem>>, vector<60x128xf32>
    %243 = arith.mulf %241, %242 : vector<60x128xf32>
    %c448 = arith.constant 448 : index
    %c0_104 = arith.constant 0 : index
    %244 = vector.load %arg3[%c448, %c0_104] : memref<528x128xf32, #tpu.memory_space<vmem>>, vector<60x128xf32>
    %245 = arith.addf %243, %244 : vector<60x128xf32>
    %246 = arith.truncf %245 : vector<60x128xf32> to vector<60x128xbf16>
    %c0_105 = arith.constant 0 : index
    %c2560 = arith.constant 2560 : index
    %247 = vector.load %arg2[%c0_105, %c2560] : memref<128x2640xbf16, #tpu.memory_space<vmem>>, vector<128x80xbf16>
    %cst_106 = arith.constant dense<0.000000e+00> : vector<60x80xf32>
    %248 = tpu.matmul %246, %247, %cst_106 {dimension_numbers = #tpu.dot_dimension_numbers<[1], [0], [0], [1], [0, 0, 1, 1], [], []>} : vector<60x128xbf16>, vector<128x80xbf16>, vector<60x80xf32> -> vector<60x80xf32>
    %c0_107 = arith.constant 0 : index
    %c0_108 = arith.constant 0 : index
    %249 = vector.load %arg6[%c0_107, %c0_108] : memref<60x80xf32, #tpu.memory_space<vmem>>, vector<60x80xf32>
    tpu.vector_store %arg6[%c0_107, %c0_108], %248 {strides = array<i32>} : memref<60x80xf32, #tpu.memory_space<vmem>>, vector<60x80xf32>,
    %c0_109 = arith.constant 0 : index
    %c0_110 = arith.constant 0 : index
    %250 = vector.load %arg6[%c0_109, %c0_110] : memref<60x80xf32, #tpu.memory_space<vmem>>, vector<12x16xf32>
    %c12 = arith.constant 12 : index
    %c16 = arith.constant 16 : index
    %251 = vector.load %arg6[%c12, %c16] : memref<60x80xf32, #tpu.memory_space<vmem>>, vector<12x16xf32>
    %252 = arith.addf %250, %251 : vector<12x16xf32>
    %c24 = arith.constant 24 : index
    %c32 = arith.constant 32 : index
    %253 = vector.load %arg6[%c24, %c32] : memref<60x80xf32, #tpu.memory_space<vmem>>, vector<12x16xf32>
    %254 = arith.addf %252, %253 : vector<12x16xf32>
    %c384_111 = arith.constant 384 : index
    %c0_112 = arith.constant 0 : index
    %255 = vector.load %arg4[%c384_111, %c0_112] : memref<416x60xf32, #tpu.memory_space<vmem>>, vector<12x60xf32>
    %c0_113 = arith.constant 0 : index
    %c48 = arith.constant 48 : index
    %256 = vector.load %arg6[%c0_113, %c48] : memref<60x80xf32, #tpu.memory_space<vmem>>, vector<60x16xf32>
    %cst_114 = arith.constant dense<0.000000e+00> : vector<12x16xf32>
    %257 = tpu.matmul %255, %256, %cst_114 {dimension_numbers = #tpu.dot_dimension_numbers<[1], [0], [0], [1], [0, 0, 1, 1], [], []>} : vector<12x60xf32>, vector<60x16xf32>, vector<12x16xf32> -> vector<12x16xf32>
    %258 = arith.addf %254, %257 : vector<12x16xf32>
    %c400 = arith.constant 400 : index
    %c0_115 = arith.constant 0 : index
    %259 = vector.load %arg4[%c400, %c0_115] : memref<416x60xf32, #tpu.memory_space<vmem>>, vector<12x60xf32>
    %c0_116 = arith.constant 0 : index
    %c64_117 = arith.constant 64 : index
    %260 = vector.load %arg6[%c0_116, %c64_117] : memref<60x80xf32, #tpu.memory_space<vmem>>, vector<60x16xf32>
    %cst_118 = arith.constant dense<0.000000e+00> : vector<12x16xf32>
    %261 = tpu.matmul %259, %260, %cst_118 {dimension_numbers = #tpu.dot_dimension_numbers<[1], [0], [0], [1], [0, 0, 1, 1], [], []>} : vector<12x60xf32>, vector<60x16xf32>, vector<12x16xf32> -> vector<12x16xf32>
    %262 = arith.addf %258, %261 : vector<12x16xf32>
    %c520 = arith.constant 520 : index
    %c0_119 = arith.constant 0 : index
    %263 = vector.load %arg3[%c520, %c0_119] : memref<528x128xf32, #tpu.memory_space<vmem>>, vector<1x16xf32>
    %264 = vector.broadcast %263 : vector<1x16xf32> to vector<12x16xf32>
    %265 = arith.addf %262, %264 : vector<12x16xf32>
    %c0_120 = arith.constant 0 : index
    %c0_121 = arith.constant 0 : index
    %c0_122 = arith.constant 0 : index
    %266 = vector.load %arg5[%c0_120, %c0_121, %c0_122] : memref<1x12x16xf32, #tpu.memory_space<vmem>>, vector<1x12x16xf32>
    %267 = vector.shape_cast %266 : vector<1x12x16xf32> to vector<12x16xf32>
    %268 = vector.shape_cast %265 : vector<12x16xf32> to vector<1x12x16xf32>
    tpu.vector_store %arg5[%c0_120, %c0_121, %c0_122], %268 {strides = array<i32>} : memref<1x12x16xf32, #tpu.memory_space<vmem>>, vector<1x12x16xf32>,
    return
  }
  func.func @transform_0(%arg0: i32) -> (i32, i32, i32) {
    %c0_i32 = arith.constant 0 : i32
    %c0_i32_0 = arith.constant 0 : i32
    %c0_i32_1 = arith.constant 0 : i32
    return %arg0, %c0_i32, %c0_i32_0 : i32, i32, i32
  }
  func.func @transform_1(%arg0: i32) -> (i32, i32) {
    %c0_i32 = arith.constant 0 : i32
    %c0_i32_0 = arith.constant 0 : i32
    %c0_i32_1 = arith.constant 0 : i32
    return %c0_i32, %c0_i32_0 : i32, i32
  }
  func.func @transform_2(%arg0: i32) -> (i32, i32) {
    %c0_i32 = arith.constant 0 : i32
    %c0_i32_0 = arith.constant 0 : i32
    %c0_i32_1 = arith.constant 0 : i32
    return %c0_i32, %c0_i32_0 : i32, i32
  }
  func.func @transform_3(%arg0: i32) -> (i32, i32) {
    %c0_i32 = arith.constant 0 : i32
    %c0_i32_0 = arith.constant 0 : i32
    %c0_i32_1 = arith.constant 0 : i32
    return %c0_i32, %c0_i32_0 : i32, i32
  }
  func.func @transform_4(%arg0: i32) -> (i32, i32, i32) {
    %c0_i32 = arith.constant 0 : i32
    %c0_i32_0 = arith.constant 0 : i32
    %c0_i32_1 = arith.constant 0 : i32
    return %arg0, %c0_i32, %c0_i32_0 : i32, i32, i32
  }
}

</mosaic_0001>

<llo_original>
// kernel: dgcn_mask_forward.1
$region0: #{dgcn_mask_forward.1}
  #allocation0 [shape = 'u32[]', space=smem, size = 0x4, offset = 0x4, fixed_abs, tag = 'smem constant byte address 0x4 - core index']
  #allocation1 [shape = 'u32[72,128]{1,0:T(1,128)}', space=vmem, size = 0x9000, scoped, tag = 'internal scratch']
  #allocation2 [shape = 'f32[60,80]{1,0:T(8,128)}', space=vmem, size = 0x8000, scoped, tag = 'scratch operand']
  %s0 = inlined_call_operand.vmem [shape: f32[2,60,128], index: 0, kind: input, shape index: {}]
  %s1 = inlined_call_operand.vmem [shape: bf16[128,2640], index: 1, kind: input, shape index: {}]
  %s2 = inlined_call_operand.vmem [shape: f32[528,128], index: 2, kind: input, shape index: {}]
  %s3 = inlined_call_operand.vmem [shape: f32[416,60], index: 3, kind: input, shape index: {}]
  %s4 = inlined_call_operand.vmem [shape: f32[2,12,16], index: 4, kind: output, shape index: {}]
  %s5 = sld [smem:[#allocation0]]
  $region49: #{dgcn_mask_forward.1} parent=0
    _
  %s7 = ssub.s32 1, %s5
  %s8 = scalar_select 0, %s7, %s5
  loop: start=0, step=1, limit=4
  $region2: #{dgcn_mask_forward.1} parent=0 // loop_pre_header
    _
  $region3: #{dgcn_mask_forward.1} parent=0 // loop_header
    %s10 = sphi 0, %s14
    %p11 = scmp.ge.s32.totalorder %s10, 4
    %s20 = sphi 0, %s22
    %s23 = sphi 0, %s20
    %s24 = sphi 0, %s23
    %s40 = sphi 0, %s24
    %s44 = sphi 0, %s44
    %s46 = sphi 0, %s44
    %s47 = sphi 0, %s46
    %s61 = sphi 0, %s47
    %s65 = sphi 0, %s65
    %s67 = sphi 0, %s65
    %s68 = sphi 0, %s67
    %s82 = sphi 0, %s68
    %s86 = sphi 0, %s86
    %s88 = sphi 0, %s86
    %s89 = sphi 0, %s88
    %s103 = sphi 0, %s89
    %s109 = sphi 0, %s111
    %s112 = sphi 0, %s109
    %s113 = sphi 0, %s112
    %s129 = sphi 0, %s113
  $region4: #{dgcn_mask_forward.1} parent=0 // loop_header_branch
    %13 = sbr.rel (%p11) target = $region8
  $region5: #{dgcn_mask_forward.1} parent=0 // loop_body
    %s15 = ssub.s32 %s10, 1
    %s16 = ssub.s32 %s10, 2
    %s17 = sadd.s32 %s10, 1
    %s18 = ssub.s32 %s10, %s17
    %p19 = scmp.eq.s32.totalorder %s18, 0
    %s21 = sadd.s32 %s20, 1
    %s22 = scalar_select %p19, %s20, %s21
    %p25 = pneg %p19
    %p26 = scmp.eq.s32.totalorder %s10, 1
    %p27 = por %p25, %p26
    %p28 = scmp.ne.s32.totalorder %s20, %s23
    %p29 = scmp.eq.s32.totalorder %s10, 0
    %p30 = por %p28, %p29
    %p31 = scmp.ne.s32.totalorder %s20, %s23
    %p32 = scmp.eq.s32.totalorder %s15, 1
    %p33 = por %p31, %p32
    %p34 = scmp.ne.s32.totalorder %s23, %s24
    %p35 = scmp.eq.s32.totalorder %s15, 0
    %p36 = por %p34, %p35
    %p37 = scmp.ne.s32.totalorder %s23, %s24
    %p38 = scmp.eq.s32.totalorder %s16, 1
    %p39 = por %p37, %p38
    %p41 = scmp.ne.s32.totalorder %s24, %s40
    %p42 = scmp.eq.s32.totalorder %s16, 0
    %p43 = por %p41, %p42
    %s45 = sadd.s32 %s44, 1
    %p48 = scmp.eq.s32.totalorder %s10, 1
    %p49 = scmp.ne.s32.totalorder %s44, %s46
    %p50 = scmp.eq.s32.totalorder %s10, 0
    %p51 = por %p49, %p50
    %p52 = scmp.ne.s32.totalorder %s44, %s46
    %p53 = scmp.eq.s32.totalorder %s15, 1
    %p54 = por %p52, %p53
    %p55 = scmp.ne.s32.totalorder %s46, %s47
    %p56 = scmp.eq.s32.totalorder %s15, 0
    %p57 = por %p55, %p56
    %p58 = scmp.ne.s32.totalorder %s46, %s47
    %p59 = scmp.eq.s32.totalorder %s16, 1
    %p60 = por %p58, %p59
    %p62 = scmp.ne.s32.totalorder %s47, %s61
    %p63 = scmp.eq.s32.totalorder %s16, 0
    %p64 = por %p62, %p63
    %s66 = sadd.s32 %s65, 1
    %p69 = scmp.eq.s32.totalorder %s10, 1
    %p70 = scmp.ne.s32.totalorder %s65, %s67
    %p71 = scmp.eq.s32.totalorder %s10, 0
    %p72 = por %p70, %p71
    %p73 = scmp.ne.s32.totalorder %s65, %s67
    %p74 = scmp.eq.s32.totalorder %s15, 1
    %p75 = por %p73, %p74
    %p76 = scmp.ne.s32.totalorder %s67, %s68
    %p77 = scmp.eq.s32.totalorder %s15, 0
    %p78 = por %p76, %p77
    %p79 = scmp.ne.s32.totalorder %s67, %s68
    %p80 = scmp.eq.s32.totalorder %s16, 1
    %p81 = por %p79, %p80
    %p83 = scmp.ne.s32.totalorder %s68, %s82
    %p84 = scmp.eq.s32.totalorder %s16, 0
    %p85 = por %p83, %p84
    %s87 = sadd.s32 %s86, 1
    %p90 = scmp.eq.s32.totalorder %s10, 1
    %p91 = scmp.ne.s32.totalorder %s86, %s88
    %p92 = scmp.eq.s32.totalorder %s10, 0
    %p93 = por %p91, %p92
    %p94 = scmp.ne.s32.totalorder %s86, %s88
    %p95 = scmp.eq.s32.totalorder %s15, 1
    %p96 = por %p94, %p95
    %p97 = scmp.ne.s32.totalorder %s88, %s89
    %p98 = scmp.eq.s32.totalorder %s15, 0
    %p99 = por %p97, %p98
    %p100 = scmp.ne.s32.totalorder %s88, %s89
    %p101 = scmp.eq.s32.totalorder %s16, 1
    %p102 = por %p100, %p101
    %p104 = scmp.ne.s32.totalorder %s89, %s103
    %p105 = scmp.eq.s32.totalorder %s16, 0
    %p106 = por %p104, %p105
    %s107 = ssub.s32 %s10, %s17
    %p108 = scmp.eq.s32.totalorder %s107, 0
    %s110 = sadd.s32 %s109, 1
    %s111 = scalar_select %p108, %s109, %s110
    %p114 = pneg %p108
    %p115 = scmp.eq.s32.totalorder %s10, 1
    %p116 = por %p114, %p115
    %p117 = scmp.ne.s32.totalorder %s109, %s112
    %p118 = scmp.eq.s32.totalorder %s10, 0
    %p119 = por %p117, %p118
    %p120 = scmp.ne.s32.totalorder %s109, %s112
    %p121 = scmp.eq.s32.totalorder %s15, 1
    %p122 = por %p120, %p121
    %p123 = scmp.ne.s32.totalorder %s112, %s113
    %p124 = scmp.eq.s32.totalorder %s15, 0
    %p125 = por %p123, %p124
    %p126 = scmp.ne.s32.totalorder %s112, %s113
    %p127 = scmp.eq.s32.totalorder %s16, 1
    %p128 = por %p126, %p127
    %p130 = scmp.ne.s32.totalorder %s113, %s129
    %p131 = scmp.eq.s32.totalorder %s16, 0
    %p132 = por %p130, %p131
    %p133 = scmp.le.s32.totalorder 1, %s10
    %p134 = scmp.lt.s32.totalorder %s10, 3
    %p135 = pnand %p133, %p134
    %p136 = pneg %p135
    // Predicated region
    $region9: #{dgcn_mask_forward.1} parent=5 // pred_check
      _
    $region10: #{dgcn_mask_forward.1} parent=5 // pred_check_branch
      %138 = sbr.rel (%p135) target = $region12
    $region11: #{dgcn_mask_forward.1} parent=5 // pred_region
      %s139 = ssub.s32 %s10, 1
      // Predicated region
      $region13: #{dgcn_mask_forward.1} parent=11 // pred_check
        %p140 = pneg %p57
      $region14: #{dgcn_mask_forward.1} parent=11 // pred_check_branch
        %142 = sbr.rel (%p140) target = $region16
      $region15: #{dgcn_mask_forward.1} parent=11 // pred_region
        _
      $region16: #{dgcn_mask_forward.1} parent=11 // pred_fallthru
        _
      // Predicated region
      $region17: #{dgcn_mask_forward.1} parent=11 // pred_check
        %p143 = pneg %p78
      $region18: #{dgcn_mask_forward.1} parent=11 // pred_check_branch
        %145 = sbr.rel (%p143) target = $region20
      $region19: #{dgcn_mask_forward.1} parent=11 // pred_region
        _
      $region20: #{dgcn_mask_forward.1} parent=11 // pred_fallthru
        _
      // Predicated region
      $region21: #{dgcn_mask_forward.1} parent=11 // pred_check
        %p146 = pneg %p99
      $region22: #{dgcn_mask_forward.1} parent=11 // pred_check_branch
        %148 = sbr.rel (%p146) target = $region24
      $region23: #{dgcn_mask_forward.1} parent=11 // pred_region
        _
      $region24: #{dgcn_mask_forward.1} parent=11 // pred_fallthru
        _
    $region12: #{dgcn_mask_forward.1} parent=5 // pred_fallthru
      _
    %p149 = scmp.lt.s32.totalorder %s10, 2
    // Predicated region
    $region25: #{dgcn_mask_forward.1} parent=5 // pred_check
      %p150 = pneg %p149
    $region26: #{dgcn_mask_forward.1} parent=5 // pred_check_branch
      %152 = sbr.rel (%p150) target = $region28
    $region27: #{dgcn_mask_forward.1} parent=5 // pred_region
      // Predicated region
      $region29: #{dgcn_mask_forward.1} parent=27 // pred_check
        %p153 = pneg %p30
      $region30: #{dgcn_mask_forward.1} parent=27 // pred_check_branch
        %155 = sbr.rel (%p153) target = $region32
      $region31: #{dgcn_mask_forward.1} parent=27 // pred_region
        %p156 = scmp.lt.s32.totalorder %s10, 1
        %s157 = scalar_select %p156, %s10, 1
        %s158 = smul.addr %s157, 8
        %s159 = smul.addr %s158, 8
        %s160 = scalar_lea.vmem %s0, %s159
      $region32: #{dgcn_mask_forward.1} parent=27 // pred_fallthru
        _
    $region28: #{dgcn_mask_forward.1} parent=5 // pred_fallthru
      _
    %p161 = scmp.le.s32.totalorder 1, %s10
    %p162 = scmp.lt.s32.totalorder %s10, 3
    %p163 = pnand %p161, %p162
    %p164 = pneg %p163
    // Predicated region
    $region33: #{dgcn_mask_forward.1} parent=5 // pred_check
      _
    $region34: #{dgcn_mask_forward.1} parent=5 // pred_check_branch
      %166 = sbr.rel (%p163) target = $region36
    $region35: #{dgcn_mask_forward.1} parent=5 // pred_region
      %s167 = ssub.s32 %s10, 1
      %p168 = scmp.lt.s32.totalorder %s15, 1
      %s169 = scalar_select %p168, %s15, 1
      %s170 = smul.addr %s169, 8
      %s171 = smul.addr %s170, 8
      %s172 = scalar_lea.vmem %s0, %s171
      %p173 = pneg %p36
      %p174 = pneg %p33
      %p175 = pneg %p57
      %p176 = pneg %p54
      %p177 = pneg %p78
      %p178 = pneg %p75
      %p179 = pneg %p99
      %p180 = pneg %p96
      %p181 = pneg %p125
      %p182 = pneg %p122
      %p183 = scmp.lt.s32.totalorder %s15, 1
      %s184 = scalar_select %p183, %s15, 1
      %s185 = smul.addr %s184, 2
      %s186 = smul.addr %s185, 8
      %s187 = scalar_lea.vmem %s4, %s186
      %p188 = scmp.lt.s32.totalorder %s15, 1
      %s189 = scalar_select %p188, %s15, 1
      %s190 = smul.addr %s189, 8
      %s191 = smul.addr %s190, 8
      %s192 = scalar_lea.vmem %s0, %s191
      %p193 = scmp.lt.s32.totalorder %s15, 1
      %s194 = scalar_select %p193, %s15, 1
      %s195 = smul.addr %s194, 2
      %s196 = smul.addr %s195, 8
      %s197 = scalar_lea.vmem %s4, %s196
      %v198 = vld [vmem:[%s3 + $0x100] sm:$0xff]
      %v199 = vld [vmem:[%s3 + $0x108] sm:$0xff]
      %v200 = vld [vmem:[%s3 + $0x110] sm:$0xff]
      %v201 = vld [vmem:[%s3 + $0x118] sm:$0xff]
      %v202 = vld [vmem:[%s3 + $0x120] sm:$0xff]
      %v203 = vld [vmem:[%s3 + $0x128] sm:$0xff]
      %v204 = vld [vmem:[%s3 + $0x130] sm:$0xff]
      %v205 = vld [vmem:[%s3 + $0x138] sm:$0xf]
      %v206 = vld [vmem:[%s3 + $0x140] sm:$0xff]
      %v207 = vld [vmem:[%s3 + $0x148] sm:$0xff]
      %v208 = vld [vmem:[%s3 + $0x150] sm:$0xff]
      %v209 = vld [vmem:[%s3 + $0x158] sm:$0xff]
      %v210 = vld [vmem:[%s3 + $0x160] sm:$0xff]
      %v211 = vld [vmem:[%s3 + $0x168] sm:$0xff]
      %v212 = vld [vmem:[%s3 + $0x170] sm:$0xff]
      %v213 = vld [vmem:[%s3 + $0x178] sm:$0xf]
      %v214 = vld [vmem:[%s192] sm:$0xff]
      %v215 = vld [vmem:[%s192 + $0x8] sm:$0xff]
      %v216 = vld [vmem:[%s192 + $0x10] sm:$0xff]
      %v217 = vld [vmem:[%s192 + $0x18] sm:$0xff]
      %v218 = vld [vmem:[%s192 + $0x20] sm:$0xff]
      %v219 = vld [vmem:[%s192 + $0x28] sm:$0xff]
      %v220 = vld [vmem:[%s192 + $0x30] sm:$0xff]
      %v221 = vld [vmem:[%s192 + $0x38] sm:$0xf]
      %v222 = vpack.c.bf16 %v215, %v214
      %v223 = vpack.c.bf16 %v217, %v216
      %v224 = vpack.c.bf16 %v219, %v218
      %v225 = vpack.c.bf16 %v221, %v220
      %v226 = vld [vmem:[%s1] sm:$0xf]
      %v227 = vld [vmem:[%s1 + $0x54] sm:$0xf]
      %v228 = vld [vmem:[%s1 + $0xa8] sm:$0xf]
      %v229 = vld [vmem:[%s1 + $0xfc] sm:$0xf]
      %v230 = vld [vmem:[%s1 + $0x150] sm:$0xf]
      %v231 = vld [vmem:[%s1 + $0x1a4] sm:$0xf]
      %v232 = vld [vmem:[%s1 + $0x1f8] sm:$0xf]
      %v233 = vld [vmem:[%s1 + $0x24c] sm:$0xf]
      %v234 = vld [vmem:[%s1 + $0x2a0] sm:$0xf]
      %v235 = vld [vmem:[%s1 + $0x2f4] sm:$0xf]
      %v236 = vld [vmem:[%s1 + $0x348] sm:$0xf]
      %v237 = vld [vmem:[%s1 + $0x39c] sm:$0xf]
      %v238 = vld [vmem:[%s1 + $0x3f0] sm:$0xf]
      %v239 = vld [vmem:[%s1 + $0x444] sm:$0xf]
      %v240 = vld [vmem:[%s1 + $0x498] sm:$0xf]
      %v241 = vld [vmem:[%s1 + $0x4ec] sm:$0xf]
      %v242 = vld [vmem:[%s2 + $0x200] sm:$0x1]
      %v243 = vperm.slane %v242, 0
      %v260 = vunpack.c.l.b16 %v226
      %v261 = vunpack.c.l.b16 %v227
      %v262 = vunpack.c.l.b16 %v228
      %v263 = vunpack.c.l.b16 %v229
      %v264 = vunpack.c.l.b16 %v230
      %v265 = vunpack.c.l.b16 %v231
      %v266 = vunpack.c.l.b16 %v232
      %v267 = vunpack.c.l.b16 %v233
      %v268 = vunpack.c.l.b16 %v234
      %v269 = vunpack.c.l.b16 %v235
      %v270 = vunpack.c.l.b16 %v236
      %v271 = vunpack.c.l.b16 %v237
      %v272 = vunpack.c.l.b16 %v238
      %v273 = vunpack.c.l.b16 %v239
      %v274 = vunpack.c.l.b16 %v240
      %v275 = vunpack.c.l.b16 %v241
      %v276 = vpack.c.b16 %v261, %v260
      %v277 = vpack.c.b16 %v263, %v262
      %v278 = vpack.c.b16 %v265, %v264
      %v279 = vpack.c.b16 %v267, %v266
      %v280 = vpack.c.b16 %v269, %v268
      %v281 = vpack.c.b16 %v271, %v270
      %v282 = vpack.c.b16 %v273, %v272
      %v283 = vpack.c.b16 %v275, %v274
      %292 = vmatpush.bf16.msra.mxu0 %v283
      %293 = vmatpush.bf16.msra.mxu0 %v282
      %294 = vmatpush.bf16.msra.mxu0 %v281
      %295 = vmatpush.bf16.msra.mxu0 %v280
      %296 = vmatpush.bf16.msra.mxu0 %v279
      %297 = vmatpush.bf16.msra.mxu0 %v278
      %298 = vmatpush.bf16.msra.mxu0 %v277
      %299 = vmatpush.bf16.msra.mxu0 %v276
      %300 = vmatmul.bf16.gmra.mxu0 %v222
      %v301 = vpop.f32.mrf.mxu0
      %v302 = vadd.f32 %v243, %v301
      %v303 = vpop.f32.mrf.mxu0
      %v304 = vadd.f32 %v243, %v303
      %305 = vmatmul.bf16.gmra.mxu0 %v223
      %v306 = vpop.f32.mrf.mxu0
      %v307 = vadd.f32 %v243, %v306
      %v308 = vpop.f32.mrf.mxu0
      %v309 = vadd.f32 %v243, %v308
      %310 = vmatmul.bf16.gmra.mxu0 %v224
      %v311 = vpop.f32.mrf.mxu0
      %v312 = vadd.f32 %v243, %v311
      %v313 = vpop.f32.mrf.mxu0
      %v314 = vadd.f32 %v243, %v313
      %315 = vmatmul.bf16.gmra.mxu0 %v225
      %v316 = vpop.f32.mrf.mxu0
      %v317 = vadd.f32 %v243, %v316
      %v318 = vpop.f32.mrf.mxu0
      %v319 = vadd.f32 %v243, %v318
      %320 = vdwg.mxu0
      %v321 = vld [vmem:[%s1 + $0x4] sm:$0xff]
      %v322 = vld [vmem:[%s1 + $0xc] sm:$0xf]
      %v323 = vld [vmem:[%s1 + $0x58] sm:$0xff]
      %v324 = vld [vmem:[%s1 + $0x60] sm:$0xf]
      %v325 = vld [vmem:[%s1 + $0xac] sm:$0xff]
      %v326 = vld [vmem:[%s1 + $0xb4] sm:$0xf]
      %v327 = vld [vmem:[%s1 + $0x100] sm:$0xff]
      %v328 = vld [vmem:[%s1 + $0x108] sm:$0xf]
      %v329 = vld [vmem:[%s1 + $0x154] sm:$0xff]
      %v330 = vld [vmem:[%s1 + $0x15c] sm:$0xf]
      %v331 = vld [vmem:[%s1 + $0x1a8] sm:$0xff]
      %v332 = vld [vmem:[%s1 + $0x1b0] sm:$0xf]
      %v333 = vld [vmem:[%s1 + $0x1fc] sm:$0xff]
      %v334 = vld [vmem:[%s1 + $0x204] sm:$0xf]
      %v335 = vld [vmem:[%s1 + $0x250] sm:$0xff]
      %v336 = vld [vmem:[%s1 + $0x258] sm:$0xf]
      %v337 = vld [vmem:[%s1 + $0x2a4] sm:$0xff]
      %v338 = vld [vmem:[%s1 + $0x2ac] sm:$0xf]
      %v339 = vld [vmem:[%s1 + $0x2f8] sm:$0xff]
      %v340 = vld [vmem:[%s1 + $0x300] sm:$0xf]
      %v341 = vld [vmem:[%s1 + $0x34c] sm:$0xff]
      %v342 = vld [vmem:[%s1 + $0x354] sm:$0xf]
      %v343 = vld [vmem:[%s1 + $0x3a0] sm:$0xff]
      %v344 = vld [vmem:[%s1 + $0x3a8] sm:$0xf]
      %v345 = vld [vmem:[%s1 + $0x3f4] sm:$0xff]
      %v346 = vld [vmem:[%s1 + $0x3fc] sm:$0xf]
      %v347 = vld [vmem:[%s1 + $0x448] sm:$0xff]
      %v348 = vld [vmem:[%s1 + $0x450] sm:$0xf]
      %v349 = vld [vmem:[%s1 + $0x49c] sm:$0xff]
      %v350 = vld [vmem:[%s1 + $0x4a4] sm:$0xf]
      %v351 = vld [vmem:[%s1 + $0x4f0] sm:$0xff]
      %v352 = vld [vmem:[%s1 + $0x4f8] sm:$0xf]
      %v385 = vunpack.c.l.b16 %v321
      %v386 = vunpack.c.h.b16 %v321
      %v387 = vunpack.c.l.b16 %v322
      %v388 = vunpack.c.l.b16 %v323
      %v389 = vunpack.c.h.b16 %v323
      %v390 = vunpack.c.l.b16 %v324
      %v391 = vunpack.c.l.b16 %v325
      %v392 = vunpack.c.h.b16 %v325
      %v393 = vunpack.c.l.b16 %v326
      %v394 = vunpack.c.l.b16 %v327
      %v395 = vunpack.c.h.b16 %v327
      %v396 = vunpack.c.l.b16 %v328
      %v397 = vunpack.c.l.b16 %v329
      %v398 = vunpack.c.h.b16 %v329
      %v399 = vunpack.c.l.b16 %v330
      %v400 = vunpack.c.l.b16 %v331
      %v401 = vunpack.c.h.b16 %v331
      %v402 = vunpack.c.l.b16 %v332
      %v403 = vunpack.c.l.b16 %v333
      %v404 = vunpack.c.h.b16 %v333
      %v405 = vunpack.c.l.b16 %v334
      %v406 = vunpack.c.l.b16 %v335
      %v407 = vunpack.c.h.b16 %v335
      %v408 = vunpack.c.l.b16 %v336
      %v409 = vunpack.c.l.b16 %v337
      %v410 = vunpack.c.h.b16 %v337
      %v411 = vunpack.c.l.b16 %v338
      %v412 = vunpack.c.l.b16 %v339
      %v413 = vunpack.c.h.b16 %v339
      %v414 = vunpack.c.l.b16 %v340
      %v415 = vunpack.c.l.b16 %v341
      %v416 = vunpack.c.h.b16 %v341
      %v417 = vunpack.c.l.b16 %v342
      %v418 = vunpack.c.l.b16 %v343
      %v419 = vunpack.c.h.b16 %v343
      %v420 = vunpack.c.l.b16 %v344
      %v421 = vunpack.c.l.b16 %v345
      %v422 = vunpack.c.h.b16 %v345
      %v423 = vunpack.c.l.b16 %v346
      %v424 = vunpack.c.l.b16 %v347
      %v425 = vunpack.c.h.b16 %v347
      %v426 = vunpack.c.l.b16 %v348
      %v427 = vunpack.c.l.b16 %v349
      %v428 = vunpack.c.h.b16 %v349
      %v429 = vunpack.c.l.b16 %v350
      %v430 = vunpack.c.l.b16 %v351
      %v431 = vunpack.c.h.b16 %v351
      %v432 = vunpack.c.l.b16 %v352
      %v433 = vpack.c.b16 %v388, %v385
      %v434 = vpack.c.b16 %v389, %v386
      %v435 = vpack.c.b16 %v390, %v387
      %v436 = vpack.c.b16 %v394, %v391
      %v437 = vpack.c.b16 %v395, %v392
      %v438 = vpack.c.b16 %v396, %v393
      %v439 = vpack.c.b16 %v400, %v397
      %v440 = vpack.c.b16 %v401, %v398
      %v441 = vpack.c.b16 %v402, %v399
      %v442 = vpack.c.b16 %v406, %v403
      %v443 = vpack.c.b16 %v407, %v404
      %v444 = vpack.c.b16 %v408, %v405
      %v445 = vpack.c.b16 %v412, %v409
      %v446 = vpack.c.b16 %v413, %v410
      %v447 = vpack.c.b16 %v414, %v411
      %v448 = vpack.c.b16 %v418, %v415
      %v449 = vpack.c.b16 %v419, %v416
      %v450 = vpack.c.b16 %v420, %v417
      %v451 = vpack.c.b16 %v424, %v421
      %v452 = vpack.c.b16 %v425, %v422
      %v453 = vpack.c.b16 %v426, %v423
      %v454 = vpack.c.b16 %v430, %v427
      %v455 = vpack.c.b16 %v431, %v428
      %v456 = vpack.c.b16 %v432, %v429
      %481 = vmatpush.bf16.msra.mxu0 %v454
      %482 = vmatpush.bf16.msra.mxu0 %v451
      %483 = vmatpush.bf16.msra.mxu0 %v448
      %484 = vmatpush.bf16.msra.mxu0 %v445
      %485 = vmatpush.bf16.msra.mxu0 %v442
      %486 = vmatpush.bf16.msra.mxu0 %v439
      %487 = vmatpush.bf16.msra.mxu0 %v436
      %488 = vmatpush.bf16.msra.mxu0 %v433
      %489 = vmatmul.bf16.gmra.mxu0 %v222
      %v490 = vpop.f32.mrf.mxu0
      %v491 = vadd.f32 0.0, %v490
      %v492 = vpop.f32.mrf.mxu0
      %v493 = vadd.f32 0.0, %v492
      %494 = vmatmul.bf16.gmra.mxu0 %v223
      %v495 = vpop.f32.mrf.mxu0
      %v496 = vadd.f32 0.0, %v495
      %v497 = vpop.f32.mrf.mxu0
      %v498 = vadd.f32 0.0, %v497
      %499 = vmatmul.bf16.gmra.mxu0 %v224
      %v500 = vpop.f32.mrf.mxu0
      %v501 = vadd.f32 0.0, %v500
      %v502 = vpop.f32.mrf.mxu0
      %v503 = vadd.f32 0.0, %v502
      %504 = vmatmul.bf16.gmra.mxu0 %v225
      %v505 = vpop.f32.mrf.mxu0
      %v506 = vadd.f32 0.0, %v505
      %v507 = vpop.f32.mrf.mxu0
      %v508 = vadd.f32 0.0, %v507
      %509 = vdwg.mxu0
      %510 = vmatpush.bf16.msra.mxu0 %v455
      %511 = vmatpush.bf16.msra.mxu0 %v452
      %512 = vmatpush.bf16.msra.mxu0 %v449
      %513 = vmatpush.bf16.msra.mxu0 %v446
      %514 = vmatpush.bf16.msra.mxu0 %v443
      %515 = vmatpush.bf16.msra.mxu0 %v440
      %516 = vmatpush.bf16.msra.mxu0 %v437
      %517 = vmatpush.bf16.msra.mxu0 %v434
      %518 = vmatmul.bf16.gmra.mxu0 %v222
      %v519 = vpop.f32.mrf.mxu0
      %v520 = vadd.f32 0.0, %v519
      %v521 = vpop.f32.mrf.mxu0
      %v522 = vadd.f32 0.0, %v521
      %523 = vmatmul.bf16.gmra.mxu0 %v223
      %v524 = vpop.f32.mrf.mxu0
      %v525 = vadd.f32 0.0, %v524
      %v526 = vpop.f32.mrf.mxu0
      %v527 = vadd.f32 0.0, %v526
      %528 = vmatmul.bf16.gmra.mxu0 %v224
      %v529 = vpop.f32.mrf.mxu0
      %v530 = vadd.f32 0.0, %v529
      %v531 = vpop.f32.mrf.mxu0
      %v532 = vadd.f32 0.0, %v531
      %533 = vmatmul.bf16.gmra.mxu0 %v225
      %v534 = vpop.f32.mrf.mxu0
      %v535 = vadd.f32 0.0, %v534
      %v536 = vpop.f32.mrf.mxu0
      %v537 = vadd.f32 0.0, %v536
      %538 = vdwg.mxu0
      %539 = vmatpush.bf16.msra.mxu0 %v456
      %540 = vmatpush.bf16.msra.mxu0 %v453
      %541 = vmatpush.bf16.msra.mxu0 %v450
      %542 = vmatpush.bf16.msra.mxu0 %v447
      %543 = vmatpush.bf16.msra.mxu0 %v444
      %544 = vmatpush.bf16.msra.mxu0 %v441
      %545 = vmatpush.bf16.msra.mxu0 %v438
      %546 = vmatpush.bf16.msra.mxu0 %v435
      %547 = vmatmul.bf16.gmra.mxu0 %v222
      %v548 = vpop.f32.mrf.mxu0
      %v549 = vadd.f32 0.0, %v548
      %v550 = vpop.f32.mrf.mxu0
      %v551 = vadd.f32 0.0, %v550
      %552 = vmatmul.bf16.gmra.mxu0 %v223
      %v553 = vpop.f32.mrf.mxu0
      %v554 = vadd.f32 0.0, %v553
      %v555 = vpop.f32.mrf.mxu0
      %v556 = vadd.f32 0.0, %v555
      %557 = vmatmul.bf16.gmra.mxu0 %v224
      %v558 = vpop.f32.mrf.mxu0
      %v559 = vadd.f32 0.0, %v558
      %v560 = vpop.f32.mrf.mxu0
      %v561 = vadd.f32 0.0, %v560
      %562 = vmatmul.bf16.gmra.mxu0 %v225
      %v563 = vpop.f32.mrf.mxu0
      %v564 = vadd.f32 0.0, %v563
      %v565 = vpop.f32.mrf.mxu0
      %v566 = vadd.f32 0.0, %v565
      %567 = vdwg.mxu0
      %vm568 = vcmask 490496
      %v570 = vsel %vm568, %v198, 0
      %v573 = vsel %vm568, %v199, 0
      %v576 = vsel %vm568, %v200, 0
      %v579 = vsel %vm568, %v201, 0
      %v582 = vsel %vm568, %v202, 0
      %v585 = vsel %vm568, %v203, 0
      %v588 = vsel %vm568, %v204, 0
      %v591 = vsel %vm568, %v205, 0
      %vm593 = vcmask 1043456
      %v595 = vsel %vm593, %v508, 0
      %597 = vmatpush.msra.mxu0 0.0
      %598 = vmatpush.msra.mxu0 0.0
      %599 = vmatpush.msra.mxu0 0.0
      %600 = vmatpush.msra.mxu0 0.0
      %601 = vmatpush.msra.mxu0 0.0
      %602 = vmatpush.msra.mxu0 0.0
      %603 = vmatpush.msra.mxu0 0.0
      %604 = vmatpush.msra.mxu0 0.0
      %605 = vmatpush.msra.mxu0 %v595
      %606 = vmatpush.msra.mxu0 %v506
      %607 = vmatpush.msra.mxu0 %v503
      %608 = vmatpush.msra.mxu0 %v501
      %609 = vmatpush.msra.mxu0 %v498
      %610 = vmatpush.msra.mxu0 %v496
      %611 = vmatpush.msra.mxu0 %v493
      %612 = vmatpush.msra.mxu0 %v491
      %613 = vmatmul.f32.gmra.mxu0 %v570
      %v614 = vpop.f32.mrf.mxu0
      %v615 = vadd.f32 %v520, %v614
      %616 = vmatmul.f32.gmra.mxu0 %v573
      %v617 = vpop.f32.mrf.mxu0
      %v618 = vadd.f32 %v522, %v617
      %619 = vmatmul.f32.gmra.mxu0 %v576
      %v620 = vpop.f32.mrf.mxu0
      %v621 = vadd.f32 %v525, %v620
      %622 = vmatmul.f32.gmra.mxu0 %v579
      %v623 = vpop.f32.mrf.mxu0
      %v624 = vadd.f32 %v527, %v623
      %625 = vmatmul.f32.gmra.mxu0 %v582
      %v626 = vpop.f32.mrf.mxu0
      %v627 = vadd.f32 %v530, %v626
      %628 = vmatmul.f32.gmra.mxu0 %v585
      %v629 = vpop.f32.mrf.mxu0
      %v630 = vadd.f32 %v532, %v629
      %631 = vmatmul.f32.gmra.mxu0 %v588
      %v632 = vpop.f32.mrf.mxu0
      %v633 = vadd.f32 %v535, %v632
      %634 = vmatmul.f32.gmra.mxu0 %v591
      %v635 = vpop.f32.mrf.mxu0
      %v636 = vadd.f32 %v537, %v635
      %637 = vdwg.mxu0
      %v639 = vsel %vm568, %v206, 0
      %v642 = vsel %vm568, %v207, 0
      %v645 = vsel %vm568, %v208, 0
      %v648 = vsel %vm568, %v209, 0
      %v651 = vsel %vm568, %v210, 0
      %v654 = vsel %vm568, %v211, 0
      %v657 = vsel %vm568, %v212, 0
      %v660 = vsel %vm568, %v213, 0
      %v663 = vsel %vm593, %v566, 0
      %665 = vmatpush.msra.mxu0 0.0
      %666 = vmatpush.msra.mxu0 0.0
      %667 = vmatpush.msra.mxu0 0.0
      %668 = vmatpush.msra.mxu0 0.0
      %669 = vmatpush.msra.mxu0 0.0
      %670 = vmatpush.msra.mxu0 0.0
      %671 = vmatpush.msra.mxu0 0.0
      %672 = vmatpush.msra.mxu0 0.0
      %673 = vmatpush.msra.mxu0 %v663
      %674 = vmatpush.msra.mxu0 %v564
      %675 = vmatpush.msra.mxu0 %v561
      %676 = vmatpush.msra.mxu0 %v559
      %677 = vmatpush.msra.mxu0 %v556
      %678 = vmatpush.msra.mxu0 %v554
      %679 = vmatpush.msra.mxu0 %v551
      %680 = vmatpush.msra.mxu0 %v549
      %681 = vmatmul.f32.gmra.mxu0 %v639
      %v682 = vpop.f32.mrf.mxu0
      %v683 = vadd.f32 0.0, %v682
      %684 = vmatmul.f32.gmra.mxu0 %v642
      %v685 = vpop.f32.mrf.mxu0
      %v686 = vadd.f32 0.0, %v685
      %687 = vmatmul.f32.gmra.mxu0 %v645
      %v688 = vpop.f32.mrf.mxu0
      %v689 = vadd.f32 0.0, %v688
      %690 = vmatmul.f32.gmra.mxu0 %v648
      %v691 = vpop.f32.mrf.mxu0
      %v692 = vadd.f32 0.0, %v691
      %693 = vmatmul.f32.gmra.mxu0 %v651
      %v694 = vpop.f32.mrf.mxu0
      %v695 = vadd.f32 0.0, %v694
      %696 = vmatmul.f32.gmra.mxu0 %v654
      %v697 = vpop.f32.mrf.mxu0
      %v698 = vadd.f32 0.0, %v697
      %699 = vmatmul.f32.gmra.mxu0 %v657
      %v700 = vpop.f32.mrf.mxu0
      %v701 = vadd.f32 0.0, %v700
      %702 = vmatmul.f32.gmra.mxu0 %v660
      %v703 = vpop.f32.mrf.mxu0
      %v704 = vadd.f32 0.0, %v703
      %705 = vdwg.mxu0
      %v706 = vadd.f32 %v615, %v683
      %v707 = vadd.f32 %v618, %v686
      %v708 = vadd.f32 %v621, %v689
      %v709 = vadd.f32 %v624, %v692
      %v710 = vadd.f32 %v627, %v695
      %v711 = vadd.f32 %v630, %v698
      %v712 = vadd.f32 %v633, %v701
      %v713 = vadd.f32 %v636, %v704
      %v714 = vld [vmem:[%s2 + $0x201] sm:$0x1]
      %v715 = vperm.slane %v714, 0
      %v716 = vadd.f32 %v706, %v715
      %v717 = vadd.f32 %v707, %v715
      %v718 = vadd.f32 %v708, %v715
      %v719 = vadd.f32 %v709, %v715
      %v720 = vadd.f32 %v710, %v715
      %v721 = vadd.f32 %v711, %v715
      %v722 = vadd.f32 %v712, %v715
      %v723 = vadd.f32 %v713, %v715
      %vm724 = vcmp.gt.f32.partialorder %v716, 0.0
      %vm725 = vcmp.gt.f32.partialorder %v717, 0.0
      %vm726 = vcmp.gt.f32.partialorder %v718, 0.0
      %vm727 = vcmp.gt.f32.partialorder %v719, 0.0
      %vm728 = vcmp.gt.f32.partialorder %v720, 0.0
      %vm729 = vcmp.gt.f32.partialorder %v721, 0.0
      %vm730 = vcmp.gt.f32.partialorder %v722, 0.0
      %vm731 = vcmp.gt.f32.partialorder %v723, 0.0
      %v732 = vmul.f32 %v716, 0.01
      %v733 = vmul.f32 %v717, 0.01
      %v734 = vmul.f32 %v718, 0.01
      %v735 = vmul.f32 %v719, 0.01
      %v736 = vmul.f32 %v720, 0.01
      %v737 = vmul.f32 %v721, 0.01
      %v738 = vmul.f32 %v722, 0.01
      %v739 = vmul.f32 %v723, 0.01
      %v740 = vsel %vm724, %v716, %v732
      %v741 = vsel %vm725, %v717, %v733
      %v742 = vsel %vm726, %v718, %v734
      %v743 = vsel %vm727, %v719, %v735
      %v744 = vsel %vm728, %v720, %v736
      %v745 = vsel %vm729, %v721, %v737
      %v746 = vsel %vm730, %v722, %v738
      %v747 = vsel %vm731, %v723, %v739
      %v748 = vpack.c.bf16 %v741, %v740
      %v749 = vpack.c.bf16 %v743, %v742
      %v750 = vpack.c.bf16 %v745, %v744
      %v751 = vpack.c.bf16 %v747, %v746
      %v752 = vld [vmem:[%s1 + $0x10] sm:$0xff]
      %v753 = vld [vmem:[%s1 + $0x18] sm:$0xf]
      %v754 = vld [vmem:[%s1 + $0x64] sm:$0xff]
      %v755 = vld [vmem:[%s1 + $0x6c] sm:$0xf]
      %v756 = vld [vmem:[%s1 + $0xb8] sm:$0xff]
      %v757 = vld [vmem:[%s1 + $0xc0] sm:$0xf]
      %v758 = vld [vmem:[%s1 + $0x10c] sm:$0xff]
      %v759 = vld [vmem:[%s1 + $0x114] sm:$0xf]
      %v760 = vld [vmem:[%s1 + $0x160] sm:$0xff]
      %v761 = vld [vmem:[%s1 + $0x168] sm:$0xf]
      %v762 = vld [vmem:[%s1 + $0x1b4] sm:$0xff]
      %v763 = vld [vmem:[%s1 + $0x1bc] sm:$0xf]
      %v764 = vld [vmem:[%s1 + $0x208] sm:$0xff]
      %v765 = vld [vmem:[%s1 + $0x210] sm:$0xf]
      %v766 = vld [vmem:[%s1 + $0x25c] sm:$0xff]
      %v767 = vld [vmem:[%s1 + $0x264] sm:$0xf]
      %v768 = vld [vmem:[%s1 + $0x2b0] sm:$0xff]
      %v769 = vld [vmem:[%s1 + $0x2b8] sm:$0xf]
      %v770 = vld [vmem:[%s1 + $0x304] sm:$0xff]
      %v771 = vld [vmem:[%s1 + $0x30c] sm:$0xf]
      %v772 = vld [vmem:[%s1 + $0x358] sm:$0xff]
      %v773 = vld [vmem:[%s1 + $0x360] sm:$0xf]
      %v774 = vld [vmem:[%s1 + $0x3ac] sm:$0xff]
      %v775 = vld [vmem:[%s1 + $0x3b4] sm:$0xf]
      %v776 = vld [vmem:[%s1 + $0x400] sm:$0xff]
      %v777 = vld [vmem:[%s1 + $0x408] sm:$0xf]
      %v778 = vld [vmem:[%s1 + $0x454] sm:$0xff]
      %v779 = vld [vmem:[%s1 + $0x45c] sm:$0xf]
      %v780 = vld [vmem:[%s1 + $0x4a8] sm:$0xff]
      %v781 = vld [vmem:[%s1 + $0x4b0] sm:$0xf]
      %v782 = vld [vmem:[%s1 + $0x4fc] sm:$0xff]
      %v783 = vld [vmem:[%s1 + $0x504] sm:$0xf]
      %v816 = vunpack.c.l.b16 %v752
      %v817 = vunpack.c.h.b16 %v752
      %v818 = vunpack.c.l.b16 %v753
      %v819 = vunpack.c.l.b16 %v754
      %v820 = vunpack.c.h.b16 %v754
      %v821 = vunpack.c.l.b16 %v755
      %v822 = vunpack.c.l.b16 %v756
      %v823 = vunpack.c.h.b16 %v756
      %v824 = vunpack.c.l.b16 %v757
      %v825 = vunpack.c.l.b16 %v758
      %v826 = vunpack.c.h.b16 %v758
      %v827 = vunpack.c.l.b16 %v759
      %v828 = vunpack.c.l.b16 %v760
      %v829 = vunpack.c.h.b16 %v760
      %v830 = vunpack.c.l.b16 %v761
      %v831 = vunpack.c.l.b16 %v762
      %v832 = vunpack.c.h.b16 %v762
      %v833 = vunpack.c.l.b16 %v763
      %v834 = vunpack.c.l.b16 %v764
      %v835 = vunpack.c.h.b16 %v764
      %v836 = vunpack.c.l.b16 %v765
      %v837 = vunpack.c.l.b16 %v766
      %v838 = vunpack.c.h.b16 %v766
      %v839 = vunpack.c.l.b16 %v767
      %v840 = vunpack.c.l.b16 %v768
      %v841 = vunpack.c.h.b16 %v768
      %v842 = vunpack.c.l.b16 %v769
      %v843 = vunpack.c.l.b16 %v770
      %v844 = vunpack.c.h.b16 %v770
      %v845 = vunpack.c.l.b16 %v771
      %v846 = vunpack.c.l.b16 %v772
      %v847 = vunpack.c.h.b16 %v772
      %v848 = vunpack.c.l.b16 %v773
      %v849 = vunpack.c.l.b16 %v774
      %v850 = vunpack.c.h.b16 %v774
      %v851 = vunpack.c.l.b16 %v775
      %v852 = vunpack.c.l.b16 %v776
      %v853 = vunpack.c.h.b16 %v776
      %v854 = vunpack.c.l.b16 %v777
      %v855 = vunpack.c.l.b16 %v778
      %v856 = vunpack.c.h.b16 %v778
      %v857 = vunpack.c.l.b16 %v779
      %v858 = vunpack.c.l.b16 %v780
      %v859 = vunpack.c.h.b16 %v780
      %v860 = vunpack.c.l.b16 %v781
      %v861 = vunpack.c.l.b16 %v782
      %v862 = vunpack.c.h.b16 %v782
      %v863 = vunpack.c.l.b16 %v783
      %v864 = vpack.c.b16 %v819, %v816
      %v865 = vpack.c.b16 %v820, %v817
      %v866 = vpack.c.b16 %v821, %v818
      %v867 = vpack.c.b16 %v825, %v822
      %v868 = vpack.c.b16 %v826, %v823
      %v869 = vpack.c.b16 %v827, %v824
      %v870 = vpack.c.b16 %v831, %v828
      %v871 = vpack.c.b16 %v832, %v829
      %v872 = vpack.c.b16 %v833, %v830
      %v873 = vpack.c.b16 %v837, %v834
      %v874 = vpack.c.b16 %v838, %v835
      %v875 = vpack.c.b16 %v839, %v836
      %v876 = vpack.c.b16 %v843, %v840
      %v877 = vpack.c.b16 %v844, %v841
      %v878 = vpack.c.b16 %v845, %v842
      %v879 = vpack.c.b16 %v849, %v846
      %v880 = vpack.c.b16 %v850, %v847
      %v881 = vpack.c.b16 %v851, %v848
      %v882 = vpack.c.b16 %v855, %v852
      %v883 = vpack.c.b16 %v856, %v853
      %v884 = vpack.c.b16 %v857, %v854
      %v885 = vpack.c.b16 %v861, %v858
      %v886 = vpack.c.b16 %v862, %v859
      %v887 = vpack.c.b16 %v863, %v860
      %912 = vmatpush.bf16.msra.mxu0 %v885
      %913 = vmatpush.bf16.msra.mxu0 %v882
      %914 = vmatpush.bf16.msra.mxu0 %v879
      %915 = vmatpush.bf16.msra.mxu0 %v876
      %916 = vmatpush.bf16.msra.mxu0 %v873
      %917 = vmatpush.bf16.msra.mxu0 %v870
      %918 = vmatpush.bf16.msra.mxu0 %v867
      %919 = vmatpush.bf16.msra.mxu0 %v864
      %920 = vmatmul.bf16.gmra.mxu0 %v748
      %v921 = vpop.f32.mrf.mxu0
      %v922 = vadd.f32 0.0, %v921
      %v923 = vpop.f32.mrf.mxu0
      %v924 = vadd.f32 0.0, %v923
      %925 = vmatmul.bf16.gmra.mxu0 %v749
      %v926 = vpop.f32.mrf.mxu0
      %v927 = vadd.f32 0.0, %v926
      %v928 = vpop.f32.mrf.mxu0
      %v929 = vadd.f32 0.0, %v928
      %930 = vmatmul.bf16.gmra.mxu0 %v750
      %v931 = vpop.f32.mrf.mxu0
      %v932 = vadd.f32 0.0, %v931
      %v933 = vpop.f32.mrf.mxu0
      %v934 = vadd.f32 0.0, %v933
      %935 = vmatmul.bf16.gmra.mxu0 %v751
      %v936 = vpop.f32.mrf.mxu0
      %v937 = vadd.f32 0.0, %v936
      %v938 = vpop.f32.mrf.mxu0
      %v939 = vadd.f32 0.0, %v938
      %940 = vdwg.mxu0
      %941 = vmatpush.bf16.msra.mxu0 %v886
      %942 = vmatpush.bf16.msra.mxu0 %v883
      %943 = vmatpush.bf16.msra.mxu0 %v880
      %944 = vmatpush.bf16.msra.mxu0 %v877
      %945 = vmatpush.bf16.msra.mxu0 %v874
      %946 = vmatpush.bf16.msra.mxu0 %v871
      %947 = vmatpush.bf16.msra.mxu0 %v868
      %948 = vmatpush.bf16.msra.mxu0 %v865
      %949 = vmatmul.bf16.gmra.mxu0 %v748
      %v950 = vpop.f32.mrf.mxu0
      %v951 = vadd.f32 0.0, %v950
      %v952 = vpop.f32.mrf.mxu0
      %v953 = vadd.f32 0.0, %v952
      %954 = vmatmul.bf16.gmra.mxu0 %v749
      %v955 = vpop.f32.mrf.mxu0
      %v956 = vadd.f32 0.0, %v955
      %v957 = vpop.f32.mrf.mxu0
      %v958 = vadd.f32 0.0, %v957
      %959 = vmatmul.bf16.gmra.mxu0 %v750
      %v960 = vpop.f32.mrf.mxu0
      %v961 = vadd.f32 0.0, %v960
      %v962 = vpop.f32.mrf.mxu0
      %v963 = vadd.f32 0.0, %v962
      %964 = vmatmul.bf16.gmra.mxu0 %v751
      %v965 = vpop.f32.mrf.mxu0
      %v966 = vadd.f32 0.0, %v965
      %v967 = vpop.f32.mrf.mxu0
      %v968 = vadd.f32 0.0, %v967
      %969 = vdwg.mxu0
      %970 = vmatpush.bf16.msra.mxu0 %v887
      %971 = vmatpush.bf16.msra.mxu0 %v884
      %972 = vmatpush.bf16.msra.mxu0 %v881
      %973 = vmatpush.bf16.msra.mxu0 %v878
      %974 = vmatpush.bf16.msra.mxu0 %v875
      %975 = vmatpush.bf16.msra.mxu0 %v872
      %976 = vmatpush.bf16.msra.mxu0 %v869
      %977 = vmatpush.bf16.msra.mxu0 %v866
      %978 = vmatmul.bf16.gmra.mxu0 %v748
      %v979 = vpop.f32.mrf.mxu0
      %v980 = vadd.f32 0.0, %v979
      %v981 = vpop.f32.mrf.mxu0
      %v982 = vadd.f32 0.0, %v981
      %983 = vmatmul.bf16.gmra.mxu0 %v749
      %v984 = vpop.f32.mrf.mxu0
      %v985 = vadd.f32 0.0, %v984
      %v986 = vpop.f32.mrf.mxu0
      %v987 = vadd.f32 0.0, %v986
      %988 = vmatmul.bf16.gmra.mxu0 %v750
      %v989 = vpop.f32.mrf.mxu0
      %v990 = vadd.f32 0.0, %v989
      %v991 = vpop.f32.mrf.mxu0
      %v992 = vadd.f32 0.0, %v991
      %993 = vmatmul.bf16.gmra.mxu0 %v751
      %v994 = vpop.f32.mrf.mxu0
      %v995 = vadd.f32 0.0, %v994
      %v996 = vpop.f32.mrf.mxu0
      %v997 = vadd.f32 0.0, %v996
      %998 = vdwg.mxu0
      %v1000 = vsel %vm593, %v939, 0
      %1002 = vmatpush.msra.mxu0 0.0
      %1003 = vmatpush.msra.mxu0 0.0
      %1004 = vmatpush.msra.mxu0 0.0
      %1005 = vmatpush.msra.mxu0 0.0
      %1006 = vmatpush.msra.mxu0 0.0
      %1007 = vmatpush.msra.mxu0 0.0
      %1008 = vmatpush.msra.mxu0 0.0
      %1009 = vmatpush.msra.mxu0 0.0
      %1010 = vmatpush.msra.mxu0 %v1000
      %1011 = vmatpush.msra.mxu0 %v937
      %1012 = vmatpush.msra.mxu0 %v934
      %1013 = vmatpush.msra.mxu0 %v932
      %1014 = vmatpush.msra.mxu0 %v929
      %1015 = vmatpush.msra.mxu0 %v927
      %1016 = vmatpush.msra.mxu0 %v924
      %1017 = vmatpush.msra.mxu0 %v922
      %1018 = vmatmul.f32.gmra.mxu0 %v570
      %v1019 = vpop.f32.mrf.mxu0
      %v1020 = vadd.f32 %v951, %v1019
      %1021 = vmatmul.f32.gmra.mxu0 %v573
      %v1022 = vpop.f32.mrf.mxu0
      %v1023 = vadd.f32 %v953, %v1022
      %1024 = vmatmul.f32.gmra.mxu0 %v576
      %v1025 = vpop.f32.mrf.mxu0
      %v1026 = vadd.f32 %v956, %v1025
      %1027 = vmatmul.f32.gmra.mxu0 %v579
      %v1028 = vpop.f32.mrf.mxu0
      %v1029 = vadd.f32 %v958, %v1028
      %1030 = vmatmul.f32.gmra.mxu0 %v582
      %v1031 = vpop.f32.mrf.mxu0
      %v1032 = vadd.f32 %v961, %v1031
      %1033 = vmatmul.f32.gmra.mxu0 %v585
      %v1034 = vpop.f32.mrf.mxu0
      %v1035 = vadd.f32 %v963, %v1034
      %1036 = vmatmul.f32.gmra.mxu0 %v588
      %v1037 = vpop.f32.mrf.mxu0
      %v1038 = vadd.f32 %v966, %v1037
      %1039 = vmatmul.f32.gmra.mxu0 %v591
      %v1040 = vpop.f32.mrf.mxu0
      %v1041 = vadd.f32 %v968, %v1040
      %1042 = vdwg.mxu0
      %v1044 = vsel %vm593, %v997, 0
      %1046 = vmatpush.msra.mxu0 0.0
      %1047 = vmatpush.msra.mxu0 0.0
      %1048 = vmatpush.msra.mxu0 0.0
      %1049 = vmatpush.msra.mxu0 0.0
      %1050 = vmatpush.msra.mxu0 0.0
      %1051 = vmatpush.msra.mxu0 0.0
      %1052 = vmatpush.msra.mxu0 0.0
      %1053 = vmatpush.msra.mxu0 0.0
      %1054 = vmatpush.msra.mxu0 %v1044
      %1055 = vmatpush.msra.mxu0 %v995
      %1056 = vmatpush.msra.mxu0 %v992
      %1057 = vmatpush.msra.mxu0 %v990
      %1058 = vmatpush.msra.mxu0 %v987
      %1059 = vmatpush.msra.mxu0 %v985
      %1060 = vmatpush.msra.mxu0 %v982
      %1061 = vmatpush.msra.mxu0 %v980
      %1062 = vmatmul.f32.gmra.mxu0 %v639
      %v1063 = vpop.f32.mrf.mxu0
      %v1064 = vadd.f32 0.0, %v1063
      %1065 = vmatmul.f32.gmra.mxu0 %v642
      %v1066 = vpop.f32.mrf.mxu0
      %v1067 = vadd.f32 0.0, %v1066
      %1068 = vmatmul.f32.gmra.mxu0 %v645
      %v1069 = vpop.f32.mrf.mxu0
      %v1070 = vadd.f32 0.0, %v1069
      %1071 = vmatmul.f32.gmra.mxu0 %v648
      %v1072 = vpop.f32.mrf.mxu0
      %v1073 = vadd.f32 0.0, %v1072
      %1074 = vmatmul.f32.gmra.mxu0 %v651
      %v1075 = vpop.f32.mrf.mxu0
      %v1076 = vadd.f32 0.0, %v1075
      %1077 = vmatmul.f32.gmra.mxu0 %v654
      %v1078 = vpop.f32.mrf.mxu0
      %v1079 = vadd.f32 0.0, %v1078
      %1080 = vmatmul.f32.gmra.mxu0 %v657
      %v1081 = vpop.f32.mrf.mxu0
      %v1082 = vadd.f32 0.0, %v1081
      %1083 = vmatmul.f32.gmra.mxu0 %v660
      %v1084 = vpop.f32.mrf.mxu0
      %v1085 = vadd.f32 0.0, %v1084
      %1086 = vdwg.mxu0
      %v1087 = vadd.f32 %v1020, %v1064
      %v1088 = vadd.f32 %v1023, %v1067
      %v1089 = vadd.f32 %v1026, %v1070
      %v1090 = vadd.f32 %v1029, %v1073
      %v1091 = vadd.f32 %v1032, %v1076
      %v1092 = vadd.f32 %v1035, %v1079
      %v1093 = vadd.f32 %v1038, %v1082
      %v1094 = vadd.f32 %v1041, %v1085
      %v1095 = vld [vmem:[%s2 + $0x202] sm:$0x1]
      %v1096 = vperm.slane %v1095, 0
      %v1097 = vadd.f32 %v1087, %v1096
      %v1098 = vadd.f32 %v1088, %v1096
      %v1099 = vadd.f32 %v1089, %v1096
      %v1100 = vadd.f32 %v1090, %v1096
      %v1101 = vadd.f32 %v1091, %v1096
      %v1102 = vadd.f32 %v1092, %v1096
      %v1103 = vadd.f32 %v1093, %v1096
      %v1104 = vadd.f32 %v1094, %v1096
      %vm1105 = vcmp.gt.f32.partialorder %v1097, 0.0
      %vm1106 = vcmp.gt.f32.partialorder %v1098, 0.0
      %vm1107 = vcmp.gt.f32.partialorder %v1099, 0.0
      %vm1108 = vcmp.gt.f32.partialorder %v1100, 0.0
      %vm1109 = vcmp.gt.f32.partialorder %v1101, 0.0
      %vm1110 = vcmp.gt.f32.partialorder %v1102, 0.0
      %vm1111 = vcmp.gt.f32.partialorder %v1103, 0.0
      %vm1112 = vcmp.gt.f32.partialorder %v1104, 0.0
      %v1113 = vmul.f32 %v1097, 0.01
      %v1114 = vmul.f32 %v1098, 0.01
      %v1115 = vmul.f32 %v1099, 0.01
      %v1116 = vmul.f32 %v1100, 0.01
      %v1117 = vmul.f32 %v1101, 0.01
      %v1118 = vmul.f32 %v1102, 0.01
      %v1119 = vmul.f32 %v1103, 0.01
      %v1120 = vmul.f32 %v1104, 0.01
      %v1121 = vsel %vm1105, %v1097, %v1113
      %v1122 = vsel %vm1106, %v1098, %v1114
      %v1123 = vsel %vm1107, %v1099, %v1115
      %v1124 = vsel %vm1108, %v1100, %v1116
      %v1125 = vsel %vm1109, %v1101, %v1117
      %v1126 = vsel %vm1110, %v1102, %v1118
      %v1127 = vsel %vm1111, %v1103, %v1119
      %v1128 = vsel %vm1112, %v1104, %v1120
      %v1129 = vld [vmem:[%s1 + $0x1c] sm:$0xff]
      %v1130 = vld [vmem:[%s1 + $0x24] sm:$0xf]
      %v1131 = vld [vmem:[%s1 + $0x70] sm:$0xff]
      %v1132 = vld [vmem:[%s1 + $0x78] sm:$0xf]
      %v1133 = vld [vmem:[%s1 + $0xc4] sm:$0xff]
      %v1134 = vld [vmem:[%s1 + $0xcc] sm:$0xf]
      %v1135 = vld [vmem:[%s1 + $0x118] sm:$0xff]
      %v1136 = vld [vmem:[%s1 + $0x120] sm:$0xf]
      %v1137 = vld [vmem:[%s1 + $0x16c] sm:$0xff]
      %v1138 = vld [vmem:[%s1 + $0x174] sm:$0xf]
      %v1139 = vld [vmem:[%s1 + $0x1c0] sm:$0xff]
      %v1140 = vld [vmem:[%s1 + $0x1c8] sm:$0xf]
      %v1141 = vld [vmem:[%s1 + $0x214] sm:$0xff]
      %v1142 = vld [vmem:[%s1 + $0x21c] sm:$0xf]
      %v1143 = vld [vmem:[%s1 + $0x268] sm:$0xff]
      %v1144 = vld [vmem:[%s1 + $0x270] sm:$0xf]
      %v1145 = vld [vmem:[%s1 + $0x2bc] sm:$0xff]
      %v1146 = vld [vmem:[%s1 + $0x2c4] sm:$0xf]
      %v1147 = vld [vmem:[%s1 + $0x310] sm:$0xff]
      %v1148 = vld [vmem:[%s1 + $0x318] sm:$0xf]
      %v1149 = vld [vmem:[%s1 + $0x364] sm:$0xff]
      %v1150 = vld [vmem:[%s1 + $0x36c] sm:$0xf]
      %v1151 = vld [vmem:[%s1 + $0x3b8] sm:$0xff]
      %v1152 = vld [vmem:[%s1 + $0x3c0] sm:$0xf]
      %v1153 = vld [vmem:[%s1 + $0x40c] sm:$0xff]
      %v1154 = vld [vmem:[%s1 + $0x414] sm:$0xf]
      %v1155 = vld [vmem:[%s1 + $0x460] sm:$0xff]
      %v1156 = vld [vmem:[%s1 + $0x468] sm:$0xf]
      %v1157 = vld [vmem:[%s1 + $0x4b4] sm:$0xff]
      %v1158 = vld [vmem:[%s1 + $0x4bc] sm:$0xf]
      %v1159 = vld [vmem:[%s1 + $0x508] sm:$0xff]
      %v1160 = vld [vmem:[%s1 + $0x510] sm:$0xf]
      %v1193 = vunpack.c.l.b16 %v1129
      %v1194 = vunpack.c.h.b16 %v1129
      %v1195 = vunpack.c.l.b16 %v1130
      %v1196 = vunpack.c.l.b16 %v1131
      %v1197 = vunpack.c.h.b16 %v1131
      %v1198 = vunpack.c.l.b16 %v1132
      %v1199 = vunpack.c.l.b16 %v1133
      %v1200 = vunpack.c.h.b16 %v1133
      %v1201 = vunpack.c.l.b16 %v1134
      %v1202 = vunpack.c.l.b16 %v1135
      %v1203 = vunpack.c.h.b16 %v1135
      %v1204 = vunpack.c.l.b16 %v1136
      %v1205 = vunpack.c.l.b16 %v1137
      %v1206 = vunpack.c.h.b16 %v1137
      %v1207 = vunpack.c.l.b16 %v1138
      %v1208 = vunpack.c.l.b16 %v1139
      %v1209 = vunpack.c.h.b16 %v1139
      %v1210 = vunpack.c.l.b16 %v1140
      %v1211 = vunpack.c.l.b16 %v1141
      %v1212 = vunpack.c.h.b16 %v1141
      %v1213 = vunpack.c.l.b16 %v1142
      %v1214 = vunpack.c.l.b16 %v1143
      %v1215 = vunpack.c.h.b16 %v1143
      %v1216 = vunpack.c.l.b16 %v1144
      %v1217 = vunpack.c.l.b16 %v1145
      %v1218 = vunpack.c.h.b16 %v1145
      %v1219 = vunpack.c.l.b16 %v1146
      %v1220 = vunpack.c.l.b16 %v1147
      %v1221 = vunpack.c.h.b16 %v1147
      %v1222 = vunpack.c.l.b16 %v1148
      %v1223 = vunpack.c.l.b16 %v1149
      %v1224 = vunpack.c.h.b16 %v1149
      %v1225 = vunpack.c.l.b16 %v1150
      %v1226 = vunpack.c.l.b16 %v1151
      %v1227 = vunpack.c.h.b16 %v1151
      %v1228 = vunpack.c.l.b16 %v1152
      %v1229 = vunpack.c.l.b16 %v1153
      %v1230 = vunpack.c.h.b16 %v1153
      %v1231 = vunpack.c.l.b16 %v1154
      %v1232 = vunpack.c.l.b16 %v1155
      %v1233 = vunpack.c.h.b16 %v1155
      %v1234 = vunpack.c.l.b16 %v1156
      %v1235 = vunpack.c.l.b16 %v1157
      %v1236 = vunpack.c.h.b16 %v1157
      %v1237 = vunpack.c.l.b16 %v1158
      %v1238 = vunpack.c.l.b16 %v1159
      %v1239 = vunpack.c.h.b16 %v1159
      %v1240 = vunpack.c.l.b16 %v1160
      %v1241 = vpack.c.b16 %v1196, %v1193
      %v1242 = vpack.c.b16 %v1197, %v1194
      %v1243 = vpack.c.b16 %v1198, %v1195
      %v1244 = vpack.c.b16 %v1202, %v1199
      %v1245 = vpack.c.b16 %v1203, %v1200
      %v1246 = vpack.c.b16 %v1204, %v1201
      %v1247 = vpack.c.b16 %v1208, %v1205
      %v1248 = vpack.c.b16 %v1209, %v1206
      %v1249 = vpack.c.b16 %v1210, %v1207
      %v1250 = vpack.c.b16 %v1214, %v1211
      %v1251 = vpack.c.b16 %v1215, %v1212
      %v1252 = vpack.c.b16 %v1216, %v1213
      %v1253 = vpack.c.b16 %v1220, %v1217
      %v1254 = vpack.c.b16 %v1221, %v1218
      %v1255 = vpack.c.b16 %v1222, %v1219
      %v1256 = vpack.c.b16 %v1226, %v1223
      %v1257 = vpack.c.b16 %v1227, %v1224
      %v1258 = vpack.c.b16 %v1228, %v1225
      %v1259 = vpack.c.b16 %v1232, %v1229
      %v1260 = vpack.c.b16 %v1233, %v1230
      %v1261 = vpack.c.b16 %v1234, %v1231
      %v1262 = vpack.c.b16 %v1238, %v1235
      %v1263 = vpack.c.b16 %v1239, %v1236
      %v1264 = vpack.c.b16 %v1240, %v1237
      %1289 = vmatpush.bf16.msra.mxu0 %v1262
      %1290 = vmatpush.bf16.msra.mxu0 %v1259
      %1291 = vmatpush.bf16.msra.mxu0 %v1256
      %1292 = vmatpush.bf16.msra.mxu0 %v1253
      %1293 = vmatpush.bf16.msra.mxu0 %v1250
      %1294 = vmatpush.bf16.msra.mxu0 %v1247
      %1295 = vmatpush.bf16.msra.mxu0 %v1244
      %1296 = vmatpush.bf16.msra.mxu0 %v1241
      %1297 = vmatmul.bf16.gmra.mxu0 %v748
      %v1298 = vpop.f32.mrf.mxu0
      %v1299 = vadd.f32 0.0, %v1298
      %v1300 = vpop.f32.mrf.mxu0
      %v1301 = vadd.f32 0.0, %v1300
      %1302 = vmatmul.bf16.gmra.mxu0 %v749
      %v1303 = vpop.f32.mrf.mxu0
      %v1304 = vadd.f32 0.0, %v1303
      %v1305 = vpop.f32.mrf.mxu0
      %v1306 = vadd.f32 0.0, %v1305
      %1307 = vmatmul.bf16.gmra.mxu0 %v750
      %v1308 = vpop.f32.mrf.mxu0
      %v1309 = vadd.f32 0.0, %v1308
      %v1310 = vpop.f32.mrf.mxu0
      %v1311 = vadd.f32 0.0, %v1310
      %1312 = vmatmul.bf16.gmra.mxu0 %v751
      %v1313 = vpop.f32.mrf.mxu0
      %v1314 = vadd.f32 0.0, %v1313
      %v1315 = vpop.f32.mrf.mxu0
      %v1316 = vadd.f32 0.0, %v1315
      %1317 = vdwg.mxu0
      %1318 = vmatpush.bf16.msra.mxu0 %v1263
      %1319 = vmatpush.bf16.msra.mxu0 %v1260
      %1320 = vmatpush.bf16.msra.mxu0 %v1257
      %1321 = vmatpush.bf16.msra.mxu0 %v1254
      %1322 = vmatpush.bf16.msra.mxu0 %v1251
      %1323 = vmatpush.bf16.msra.mxu0 %v1248
      %1324 = vmatpush.bf16.msra.mxu0 %v1245
      %1325 = vmatpush.bf16.msra.mxu0 %v1242
      %1326 = vmatmul.bf16.gmra.mxu0 %v748
      %v1327 = vpop.f32.mrf.mxu0
      %v1328 = vadd.f32 0.0, %v1327
      %v1329 = vpop.f32.mrf.mxu0
      %v1330 = vadd.f32 0.0, %v1329
      %1331 = vmatmul.bf16.gmra.mxu0 %v749
      %v1332 = vpop.f32.mrf.mxu0
      %v1333 = vadd.f32 0.0, %v1332
      %v1334 = vpop.f32.mrf.mxu0
      %v1335 = vadd.f32 0.0, %v1334
      %1336 = vmatmul.bf16.gmra.mxu0 %v750
      %v1337 = vpop.f32.mrf.mxu0
      %v1338 = vadd.f32 0.0, %v1337
      %v1339 = vpop.f32.mrf.mxu0
      %v1340 = vadd.f32 0.0, %v1339
      %1341 = vmatmul.bf16.gmra.mxu0 %v751
      %v1342 = vpop.f32.mrf.mxu0
      %v1343 = vadd.f32 0.0, %v1342
      %v1344 = vpop.f32.mrf.mxu0
      %v1345 = vadd.f32 0.0, %v1344
      %1346 = vdwg.mxu0
      %1347 = vmatpush.bf16.msra.mxu0 %v1264
      %1348 = vmatpush.bf16.msra.mxu0 %v1261
      %1349 = vmatpush.bf16.msra.mxu0 %v1258
      %1350 = vmatpush.bf16.msra.mxu0 %v1255
      %1351 = vmatpush.bf16.msra.mxu0 %v1252
      %1352 = vmatpush.bf16.msra.mxu0 %v1249
      %1353 = vmatpush.bf16.msra.mxu0 %v1246
      %1354 = vmatpush.bf16.msra.mxu0 %v1243
      %1355 = vmatmul.bf16.gmra.mxu0 %v748
      %v1356 = vpop.f32.mrf.mxu0
      %v1357 = vadd.f32 0.0, %v1356
      %v1358 = vpop.f32.mrf.mxu0
      %v1359 = vadd.f32 0.0, %v1358
      %1360 = vmatmul.bf16.gmra.mxu0 %v749
      %v1361 = vpop.f32.mrf.mxu0
      %v1362 = vadd.f32 0.0, %v1361
      %v1363 = vpop.f32.mrf.mxu0
      %v1364 = vadd.f32 0.0, %v1363
      %1365 = vmatmul.bf16.gmra.mxu0 %v750
      %v1366 = vpop.f32.mrf.mxu0
      %v1367 = vadd.f32 0.0, %v1366
      %v1368 = vpop.f32.mrf.mxu0
      %v1369 = vadd.f32 0.0, %v1368
      %1370 = vmatmul.bf16.gmra.mxu0 %v751
      %v1371 = vpop.f32.mrf.mxu0
      %v1372 = vadd.f32 0.0, %v1371
      %v1373 = vpop.f32.mrf.mxu0
      %v1374 = vadd.f32 0.0, %v1373
      %1375 = vdwg.mxu0
      %v1377 = vsel %vm593, %v1316, 0
      %1379 = vmatpush.msra.mxu0 0.0
      %1380 = vmatpush.msra.mxu0 0.0
      %1381 = vmatpush.msra.mxu0 0.0
      %1382 = vmatpush.msra.mxu0 0.0
      %1383 = vmatpush.msra.mxu0 0.0
      %1384 = vmatpush.msra.mxu0 0.0
      %1385 = vmatpush.msra.mxu0 0.0
      %1386 = vmatpush.msra.mxu0 0.0
      %1387 = vmatpush.msra.mxu0 %v1377
      %1388 = vmatpush.msra.mxu0 %v1314
      %1389 = vmatpush.msra.mxu0 %v1311
      %1390 = vmatpush.msra.mxu0 %v1309
      %1391 = vmatpush.msra.mxu0 %v1306
      %1392 = vmatpush.msra.mxu0 %v1304
      %1393 = vmatpush.msra.mxu0 %v1301
      %1394 = vmatpush.msra.mxu0 %v1299
      %1395 = vmatmul.f32.gmra.mxu0 %v570
      %v1396 = vpop.f32.mrf.mxu0
      %v1397 = vadd.f32 %v1328, %v1396
      %1398 = vmatmul.f32.gmra.mxu0 %v573
      %v1399 = vpop.f32.mrf.mxu0
      %v1400 = vadd.f32 %v1330, %v1399
      %1401 = vmatmul.f32.gmra.mxu0 %v576
      %v1402 = vpop.f32.mrf.mxu0
      %v1403 = vadd.f32 %v1333, %v1402
      %1404 = vmatmul.f32.gmra.mxu0 %v579
      %v1405 = vpop.f32.mrf.mxu0
      %v1406 = vadd.f32 %v1335, %v1405
      %1407 = vmatmul.f32.gmra.mxu0 %v582
      %v1408 = vpop.f32.mrf.mxu0
      %v1409 = vadd.f32 %v1338, %v1408
      %1410 = vmatmul.f32.gmra.mxu0 %v585
      %v1411 = vpop.f32.mrf.mxu0
      %v1412 = vadd.f32 %v1340, %v1411
      %1413 = vmatmul.f32.gmra.mxu0 %v588
      %v1414 = vpop.f32.mrf.mxu0
      %v1415 = vadd.f32 %v1343, %v1414
      %1416 = vmatmul.f32.gmra.mxu0 %v591
      %v1417 = vpop.f32.mrf.mxu0
      %v1418 = vadd.f32 %v1345, %v1417
      %1419 = vdwg.mxu0
      %v1421 = vsel %vm593, %v1374, 0
      %1423 = vmatpush.msra.mxu0 0.0
      %1424 = vmatpush.msra.mxu0 0.0
      %1425 = vmatpush.msra.mxu0 0.0
      %1426 = vmatpush.msra.mxu0 0.0
      %1427 = vmatpush.msra.mxu0 0.0
      %1428 = vmatpush.msra.mxu0 0.0
      %1429 = vmatpush.msra.mxu0 0.0
      %1430 = vmatpush.msra.mxu0 0.0
      %1431 = vmatpush.msra.mxu0 %v1421
      %1432 = vmatpush.msra.mxu0 %v1372
      %1433 = vmatpush.msra.mxu0 %v1369
      %1434 = vmatpush.msra.mxu0 %v1367
      %1435 = vmatpush.msra.mxu0 %v1364
      %1436 = vmatpush.msra.mxu0 %v1362
      %1437 = vmatpush.msra.mxu0 %v1359
      %1438 = vmatpush.msra.mxu0 %v1357
      %1439 = vmatmul.f32.gmra.mxu0 %v639
      %v1440 = vpop.f32.mrf.mxu0
      %v1441 = vadd.f32 0.0, %v1440
      %1442 = vmatmul.f32.gmra.mxu0 %v642
      %v1443 = vpop.f32.mrf.mxu0
      %v1444 = vadd.f32 0.0, %v1443
      %1445 = vmatmul.f32.gmra.mxu0 %v645
      %v1446 = vpop.f32.mrf.mxu0
      %v1447 = vadd.f32 0.0, %v1446
      %1448 = vmatmul.f32.gmra.mxu0 %v648
      %v1449 = vpop.f32.mrf.mxu0
      %v1450 = vadd.f32 0.0, %v1449
      %1451 = vmatmul.f32.gmra.mxu0 %v651
      %v1452 = vpop.f32.mrf.mxu0
      %v1453 = vadd.f32 0.0, %v1452
      %1454 = vmatmul.f32.gmra.mxu0 %v654
      %v1455 = vpop.f32.mrf.mxu0
      %v1456 = vadd.f32 0.0, %v1455
      %1457 = vmatmul.f32.gmra.mxu0 %v657
      %v1458 = vpop.f32.mrf.mxu0
      %v1459 = vadd.f32 0.0, %v1458
      %1460 = vmatmul.f32.gmra.mxu0 %v660
      %v1461 = vpop.f32.mrf.mxu0
      %v1462 = vadd.f32 0.0, %v1461
      %1463 = vdwg.mxu0
      %v1464 = vadd.f32 %v1397, %v1441
      %v1465 = vadd.f32 %v1400, %v1444
      %v1466 = vadd.f32 %v1403, %v1447
      %v1467 = vadd.f32 %v1406, %v1450
      %v1468 = vadd.f32 %v1409, %v1453
      %v1469 = vadd.f32 %v1412, %v1456
      %v1470 = vadd.f32 %v1415, %v1459
      %v1471 = vadd.f32 %v1418, %v1462
      %v1472 = vld [vmem:[%s2 + $0x203] sm:$0x1]
      %v1473 = vperm.slane %v1472, 0
      %v1474 = vadd.f32 %v1464, %v1473
      %v1475 = vadd.f32 %v1465, %v1473
      %v1476 = vadd.f32 %v1466, %v1473
      %v1477 = vadd.f32 %v1467, %v1473
      %v1478 = vadd.f32 %v1468, %v1473
      %v1479 = vadd.f32 %v1469, %v1473
      %v1480 = vadd.f32 %v1470, %v1473
      %v1481 = vadd.f32 %v1471, %v1473
      %v1482 = vmul.f32 %v1474, 0.5
      %v1483 = vmul.f32 %v1475, 0.5
      %v1484 = vmul.f32 %v1476, 0.5
      %v1485 = vmul.f32 %v1477, 0.5
      %v1486 = vmul.f32 %v1478, 0.5
      %v1487 = vmul.f32 %v1479, 0.5
      %v1488 = vmul.f32 %v1480, 0.5
      %v1489 = vmul.f32 %v1481, 0.5
      %v1490 = vtanh.pop %v1482
      %v1491 = vtanh.pop %v1483
      %v1492 = vtanh.pop %v1484
      %v1493 = vtanh.pop %v1485
      %v1494 = vtanh.pop %v1486
      %v1495 = vtanh.pop %v1487
      %v1496 = vtanh.pop %v1488
      %v1497 = vtanh.pop %v1489
      %v1498 = vadd.f32 %v1490, 1.0
      %v1499 = vadd.f32 %v1491, 1.0
      %v1500 = vadd.f32 %v1492, 1.0
      %v1501 = vadd.f32 %v1493, 1.0
      %v1502 = vadd.f32 %v1494, 1.0
      %v1503 = vadd.f32 %v1495, 1.0
      %v1504 = vadd.f32 %v1496, 1.0
      %v1505 = vadd.f32 %v1497, 1.0
      %v1506 = vmul.f32 %v1498, 0.5
      %v1507 = vmul.f32 %v1499, 0.5
      %v1508 = vmul.f32 %v1500, 0.5
      %v1509 = vmul.f32 %v1501, 0.5
      %v1510 = vmul.f32 %v1502, 0.5
      %v1511 = vmul.f32 %v1503, 0.5
      %v1512 = vmul.f32 %v1504, 0.5
      %v1513 = vmul.f32 %v1505, 0.5
      %v1514 = vmul.f32 %v1506, %v1121
      %v1515 = vmul.f32 %v1507, %v1122
      %v1516 = vmul.f32 %v1508, %v1123
      %v1517 = vmul.f32 %v1509, %v1124
      %v1518 = vmul.f32 %v1510, %v1125
      %v1519 = vmul.f32 %v1511, %v1126
      %v1520 = vmul.f32 %v1512, %v1127
      %v1521 = vmul.f32 %v1513, %v1128
      %v1522 = vld [vmem:[%s2] sm:$0xff]
      %v1523 = vld [vmem:[%s2 + $0x8] sm:$0xff]
      %v1524 = vld [vmem:[%s2 + $0x10] sm:$0xff]
      %v1525 = vld [vmem:[%s2 + $0x18] sm:$0xff]
      %v1526 = vld [vmem:[%s2 + $0x20] sm:$0xff]
      %v1527 = vld [vmem:[%s2 + $0x28] sm:$0xff]
      %v1528 = vld [vmem:[%s2 + $0x30] sm:$0xff]
      %v1529 = vld [vmem:[%s2 + $0x38] sm:$0xff]
      %v1530 = vld [vmem:[%s2 + $0x40] sm:$0xff]
      %v1531 = vld [vmem:[%s2 + $0x48] sm:$0xff]
      %v1532 = vld [vmem:[%s2 + $0x50] sm:$0xff]
      %v1533 = vld [vmem:[%s2 + $0x58] sm:$0xff]
      %v1534 = vld [vmem:[%s2 + $0x60] sm:$0xff]
      %v1535 = vld [vmem:[%s2 + $0x68] sm:$0xff]
      %v1536 = vld [vmem:[%s2 + $0x70] sm:$0xff]
      %v1537 = vld [vmem:[%s2 + $0x78] sm:$0xff]
      %1538 = vmatpush.msra.mxu0 %v1537
      %1539 = vmatpush.msra.mxu0 %v1536
      %1540 = vmatpush.msra.mxu0 %v1535
      %1541 = vmatpush.msra.mxu0 %v1534
      %1542 = vmatpush.msra.mxu0 %v1533
      %1543 = vmatpush.msra.mxu0 %v1532
      %1544 = vmatpush.msra.mxu0 %v1531
      %1545 = vmatpush.msra.mxu0 %v1530
      %1546 = vmatpush.msra.mxu0 %v1529
      %1547 = vmatpush.msra.mxu0 %v1528
      %1548 = vmatpush.msra.mxu0 %v1527
      %1549 = vmatpush.msra.mxu0 %v1526
      %1550 = vmatpush.msra.mxu0 %v1525
      %1551 = vmatpush.msra.mxu0 %v1524
      %1552 = vmatpush.msra.mxu0 %v1523
      %1553 = vmatpush.msra.mxu0 %v1522
      %1554 = vmatmul.f32.gmra.mxu0 %v1514
      %v1555 = vpop.f32.mrf.mxu0
      %v1556 = vadd.f32 0.0, %v1555
      %1557 = vmatmul.f32.gmra.mxu0 %v1515
      %v1558 = vpop.f32.mrf.mxu0
      %v1559 = vadd.f32 0.0, %v1558
      %1560 = vmatmul.f32.gmra.mxu0 %v1516
      %v1561 = vpop.f32.mrf.mxu0
      %v1562 = vadd.f32 0.0, %v1561
      %1563 = vmatmul.f32.gmra.mxu0 %v1517
      %v1564 = vpop.f32.mrf.mxu0
      %v1565 = vadd.f32 0.0, %v1564
      %1566 = vmatmul.f32.gmra.mxu0 %v1518
      %v1567 = vpop.f32.mrf.mxu0
      %v1568 = vadd.f32 0.0, %v1567
      %1569 = vmatmul.f32.gmra.mxu0 %v1519
      %v1570 = vpop.f32.mrf.mxu0
      %v1571 = vadd.f32 0.0, %v1570
      %1572 = vmatmul.f32.gmra.mxu0 %v1520
      %v1573 = vpop.f32.mrf.mxu0
      %v1574 = vadd.f32 0.0, %v1573
      %1575 = vmatmul.f32.gmra.mxu0 %v1521
      %v1576 = vpop.f32.mrf.mxu0
      %v1577 = vadd.f32 0.0, %v1576
      %1578 = vdwg.mxu0
      %v1579 = vld [vmem:[%s3] sm:$0xff]
      %v1580 = vld [vmem:[%s3 + $0x8] sm:$0xff]
      %v1581 = vld [vmem:[%s3 + $0x10] sm:$0xff]
      %v1582 = vld [vmem:[%s3 + $0x18] sm:$0xff]
      %v1583 = vld [vmem:[%s3 + $0x20] sm:$0xff]
      %v1584 = vld [vmem:[%s3 + $0x28] sm:$0xff]
      %v1585 = vld [vmem:[%s3 + $0x30] sm:$0xff]
      %v1586 = vld [vmem:[%s3 + $0x38] sm:$0xf]
      %1587 = vmatpush.xpose.msra.mxu0 0.0
      %1588 = vmatpush.xpose.msra.mxu0 0.0
      %1589 = vmatpush.xpose.msra.mxu0 0.0
      %1590 = vmatpush.xpose.msra.mxu0 0.0
      %1591 = vmatpush.xpose.msra.mxu0 0.0
      %1592 = vmatpush.xpose.msra.mxu0 0.0
      %1593 = vmatpush.xpose.msra.mxu0 0.0
      %1594 = vmatpush.xpose.msra.mxu0 0.0
      %1595 = vmatpush.xpose.msra.mxu0 %v1521
      %1596 = vmatpush.xpose.msra.mxu0 %v1520
      %1597 = vmatpush.xpose.msra.mxu0 %v1519
      %1598 = vmatpush.xpose.msra.mxu0 %v1518
      %1599 = vmatpush.xpose.msra.mxu0 %v1517
      %1600 = vmatpush.xpose.msra.mxu0 %v1516
      %1601 = vmatpush.xpose.msra.mxu0 %v1515
      %1602 = vmatpush.xpose.msra.mxu0 %v1514
      %1603 = vmatmul.f32.gmra.mxu0 %v1556
      %v1604 = vpop.f32.mrf.mxu0
      %v1605 = vadd.f32 %v1579, %v1604
      %1606 = vmatmul.f32.gmra.mxu0 %v1559
      %v1607 = vpop.f32.mrf.mxu0
      %v1608 = vadd.f32 %v1580, %v1607
      %1609 = vmatmul.f32.gmra.mxu0 %v1562
      %v1610 = vpop.f32.mrf.mxu0
      %v1611 = vadd.f32 %v1581, %v1610
      %1612 = vmatmul.f32.gmra.mxu0 %v1565
      %v1613 = vpop.f32.mrf.mxu0
      %v1614 = vadd.f32 %v1582, %v1613
      %1615 = vmatmul.f32.gmra.mxu0 %v1568
      %v1616 = vpop.f32.mrf.mxu0
      %v1617 = vadd.f32 %v1583, %v1616
      %1618 = vmatmul.f32.gmra.mxu0 %v1571
      %v1619 = vpop.f32.mrf.mxu0
      %v1620 = vadd.f32 %v1584, %v1619
      %1621 = vmatmul.f32.gmra.mxu0 %v1574
      %v1622 = vpop.f32.mrf.mxu0
      %v1623 = vadd.f32 %v1585, %v1622
      %1624 = vmatmul.f32.gmra.mxu0 %v1577
      %v1625 = vpop.f32.mrf.mxu0
      %v1626 = vadd.f32 %v1586, %v1625
      %1627 = vdwg.mxu0
      %v1628 = vmul.f32 %v1605, 0.5
      %v1629 = vmul.f32 %v1608, 0.5
      %v1630 = vmul.f32 %v1611, 0.5
      %v1631 = vmul.f32 %v1614, 0.5
      %v1632 = vmul.f32 %v1617, 0.5
      %v1633 = vmul.f32 %v1620, 0.5
      %v1634 = vmul.f32 %v1623, 0.5
      %v1635 = vmul.f32 %v1626, 0.5
      %v1636 = vtanh.pop %v1628
      %v1637 = vtanh.pop %v1629
      %v1638 = vtanh.pop %v1630
      %v1639 = vtanh.pop %v1631
      %v1640 = vtanh.pop %v1632
      %v1641 = vtanh.pop %v1633
      %v1642 = vtanh.pop %v1634
      %v1643 = vtanh.pop %v1635
      %v1644 = vadd.f32 %v1636, 1.0
      %v1645 = vadd.f32 %v1637, 1.0
      %v1646 = vadd.f32 %v1638, 1.0
      %v1647 = vadd.f32 %v1639, 1.0
      %v1648 = vadd.f32 %v1640, 1.0
      %v1649 = vadd.f32 %v1641, 1.0
      %v1650 = vadd.f32 %v1642, 1.0
      %v1651 = vadd.f32 %v1643, 1.0
      %v1652 = vmul.f32 %v1644, 0.5
      %v1653 = vmul.f32 %v1645, 0.5
      %v1654 = vmul.f32 %v1646, 0.5
      %v1655 = vmul.f32 %v1647, 0.5
      %v1656 = vmul.f32 %v1648, 0.5
      %v1657 = vmul.f32 %v1649, 0.5
      %v1658 = vmul.f32 %v1650, 0.5
      %v1659 = vmul.f32 %v1651, 0.5
      %v1660 = vld [vmem:[%s3 + $0x40] sm:$0xff]
      %v1661 = vld [vmem:[%s3 + $0x48] sm:$0xff]
      %v1662 = vld [vmem:[%s3 + $0x50] sm:$0xff]
      %v1663 = vld [vmem:[%s3 + $0x58] sm:$0xff]
      %v1664 = vld [vmem:[%s3 + $0x60] sm:$0xff]
      %v1665 = vld [vmem:[%s3 + $0x68] sm:$0xff]
      %v1666 = vld [vmem:[%s3 + $0x70] sm:$0xff]
      %v1667 = vld [vmem:[%s3 + $0x78] sm:$0xf]
      %v1669 = vsel %vm568, %v1660, 0
      %v1672 = vsel %vm568, %v1661, 0
      %v1675 = vsel %vm568, %v1662, 0
      %v1678 = vsel %vm568, %v1663, 0
      %v1681 = vsel %vm568, %v1664, 0
      %v1684 = vsel %vm568, %v1665, 0
      %v1687 = vsel %vm568, %v1666, 0
      %v1690 = vsel %vm568, %v1667, 0
      %v1693 = vsel %vm593, %v1659, 0
      %1695 = vmatpush.msra.mxu0 0.0
      %1696 = vmatpush.msra.mxu0 0.0
      %1697 = vmatpush.msra.mxu0 0.0
      %1698 = vmatpush.msra.mxu0 0.0
      %1699 = vmatpush.msra.mxu0 0.0
      %1700 = vmatpush.msra.mxu0 0.0
      %1701 = vmatpush.msra.mxu0 0.0
      %1702 = vmatpush.msra.mxu0 0.0
      %1703 = vmatpush.msra.mxu0 %v1693
      %1704 = vmatpush.msra.mxu0 %v1658
      %1705 = vmatpush.msra.mxu0 %v1657
      %1706 = vmatpush.msra.mxu0 %v1656
      %1707 = vmatpush.msra.mxu0 %v1655
      %1708 = vmatpush.msra.mxu0 %v1654
      %1709 = vmatpush.msra.mxu0 %v1653
      %1710 = vmatpush.msra.mxu0 %v1652
      %1711 = vmatmul.f32.gmra.mxu0 %v1669
      %v1712 = vpop.f32.mrf.mxu0
      %v1713 = vadd.f32 0.0, %v1712
      %1714 = vmatmul.f32.gmra.mxu0 %v1672
      %v1715 = vpop.f32.mrf.mxu0
      %v1716 = vadd.f32 0.0, %v1715
      %1717 = vmatmul.f32.gmra.mxu0 %v1675
      %v1718 = vpop.f32.mrf.mxu0
      %v1719 = vadd.f32 0.0, %v1718
      %1720 = vmatmul.f32.gmra.mxu0 %v1678
      %v1721 = vpop.f32.mrf.mxu0
      %v1722 = vadd.f32 0.0, %v1721
      %1723 = vmatmul.f32.gmra.mxu0 %v1681
      %v1724 = vpop.f32.mrf.mxu0
      %v1725 = vadd.f32 0.0, %v1724
      %1726 = vmatmul.f32.gmra.mxu0 %v1684
      %v1727 = vpop.f32.mrf.mxu0
      %v1728 = vadd.f32 0.0, %v1727
      %1729 = vmatmul.f32.gmra.mxu0 %v1687
      %v1730 = vpop.f32.mrf.mxu0
      %v1731 = vadd.f32 0.0, %v1730
      %1732 = vmatmul.f32.gmra.mxu0 %v1690
      %v1733 = vpop.f32.mrf.mxu0
      %v1734 = vadd.f32 0.0, %v1733
      %1735 = vdwg.mxu0
      %v1736 = vmul.f32 %v1713, 0.999995
      %v1737 = vmul.f32 %v1716, 0.999995
      %v1738 = vmul.f32 %v1719, 0.999995
      %v1739 = vmul.f32 %v1722, 0.999995
      %v1740 = vmul.f32 %v1725, 0.999995
      %v1741 = vmul.f32 %v1728, 0.999995
      %v1742 = vmul.f32 %v1731, 0.999995
      %v1743 = vmul.f32 %v1734, 0.999995
      %v1744 = vsel %vm568, %v1736, -inf
      %1745 = vmax.xlane.f32.xlu0 %v1744
      %v1746 = vpop.xlane.xlu0 %1745
      %v1747 = vsel %vm568, %v1737, -inf
      %1748 = vmax.xlane.f32.xlu0 %v1747
      %v1749 = vpop.xlane.xlu0 %1748
      %v1750 = vsel %vm568, %v1738, -inf
      %1751 = vmax.xlane.f32.xlu0 %v1750
      %v1752 = vpop.xlane.xlu0 %1751
      %v1753 = vsel %vm568, %v1739, -inf
      %1754 = vmax.xlane.f32.xlu0 %v1753
      %v1755 = vpop.xlane.xlu0 %1754
      %v1756 = vsel %vm568, %v1740, -inf
      %1757 = vmax.xlane.f32.xlu0 %v1756
      %v1758 = vpop.xlane.xlu0 %1757
      %v1759 = vsel %vm568, %v1741, -inf
      %1760 = vmax.xlane.f32.xlu0 %v1759
      %v1761 = vpop.xlane.xlu0 %1760
      %v1762 = vsel %vm568, %v1742, -inf
      %1763 = vmax.xlane.f32.xlu0 %v1762
      %v1764 = vpop.xlane.xlu0 %1763
      %vm1765 = vcmask 486400
      %v1766 = vsel %vm1765, %v1743, -inf
      %1767 = vmax.xlane.f32.xlu0 %v1766
      %v1768 = vpop.xlane.xlu0 %1767
      %v1769 = vsub.f32 %v1736, %v1746
      %v1770 = vsub.f32 %v1737, %v1749
      %v1771 = vsub.f32 %v1738, %v1752
      %v1772 = vsub.f32 %v1739, %v1755
      %v1773 = vsub.f32 %v1740, %v1758
      %v1774 = vsub.f32 %v1741, %v1761
      %v1775 = vsub.f32 %v1742, %v1764
      %v1776 = vsub.f32 %v1743, %v1768
      %v1777 = vmul.f32 %v1769, 1.442695
      %v1778 = vpow.pop %v1777
      %v1779 = vmul.f32 %v1770, 1.442695
      %v1780 = vpow.pop %v1779
      %v1781 = vmul.f32 %v1771, 1.442695
      %v1782 = vpow.pop %v1781
      %v1783 = vmul.f32 %v1772, 1.442695
      %v1784 = vpow.pop %v1783
      %v1785 = vmul.f32 %v1773, 1.442695
      %v1786 = vpow.pop %v1785
      %v1787 = vmul.f32 %v1774, 1.442695
      %v1788 = vpow.pop %v1787
      %v1789 = vmul.f32 %v1775, 1.442695
      %v1790 = vpow.pop %v1789
      %v1791 = vmul.f32 %v1776, 1.442695
      %v1792 = vpow.pop %v1791
      %v1793 = vsel %vm568, %v1778, 0.0
      %1794 = vadd.xlane.f32.xlu0 %v1793
      %v1795 = vpop.xlane.xlu0 %1794
      %v1796 = vsel %vm568, %v1780, 0.0
      %1797 = vadd.xlane.f32.xlu0 %v1796
      %v1798 = vpop.xlane.xlu0 %1797
      %v1799 = vsel %vm568, %v1782, 0.0
      %1800 = vadd.xlane.f32.xlu0 %v1799
      %v1801 = vpop.xlane.xlu0 %1800
      %v1802 = vsel %vm568, %v1784, 0.0
      %1803 = vadd.xlane.f32.xlu0 %v1802
      %v1804 = vpop.xlane.xlu0 %1803
      %v1805 = vsel %vm568, %v1786, 0.0
      %1806 = vadd.xlane.f32.xlu0 %v1805
      %v1807 = vpop.xlane.xlu0 %1806
      %v1808 = vsel %vm568, %v1788, 0.0
      %1809 = vadd.xlane.f32.xlu0 %v1808
      %v1810 = vpop.xlane.xlu0 %1809
      %v1811 = vsel %vm568, %v1790, 0.0
      %1812 = vadd.xlane.f32.xlu0 %v1811
      %v1813 = vpop.xlane.xlu0 %1812
      %v1814 = vsel %vm1765, %v1792, 0.0
      %1815 = vadd.xlane.f32.xlu0 %v1814
      %v1816 = vpop.xlane.xlu0 %1815
      %v1817 = vrcp.pop %v1795
      %v1818 = vmul.f32 %v1795, %v1817
      %v1819 = vsub.f32 1.0, %v1818
      %v1820 = vmul.f32 %v1817, %v1819
      %v1821 = vadd.f32 %v1817, %v1820
      %vm1822 = vweird.f32 %v1795
      %vm1823 = vweird.f32 %v1817
      %vm1824 = vmor %vm1822, %vm1823
      %v1825 = vsel %vm1824, %v1817, %v1821
      %v1826 = vand.u32 2147483647, %v1795
      %vm1827 = vcmp.eq.f32.partialorder %v1826, 8.507059e+37
      %v1828 = vand.u32 %v1795, 2147483648
      %v1829 = vor.u32 1.1754944e-38, %v1828
      %v1830 = vsel %vm1827, %v1829, %v1825
      %v1831 = vmul.f32 %v1778, %v1830
      %v1832 = vrcp.pop %v1798
      %v1833 = vmul.f32 %v1798, %v1832
      %v1834 = vsub.f32 1.0, %v1833
      %v1835 = vmul.f32 %v1832, %v1834
      %v1836 = vadd.f32 %v1832, %v1835
      %vm1837 = vweird.f32 %v1798
      %vm1838 = vweird.f32 %v1832
      %vm1839 = vmor %vm1837, %vm1838
      %v1840 = vsel %vm1839, %v1832, %v1836
      %v1841 = vand.u32 2147483647, %v1798
      %vm1842 = vcmp.eq.f32.partialorder %v1841, 8.507059e+37
      %v1843 = vand.u32 %v1798, 2147483648
      %v1844 = vor.u32 1.1754944e-38, %v1843
      %v1845 = vsel %vm1842, %v1844, %v1840
      %v1846 = vmul.f32 %v1780, %v1845
      %v1847 = vrcp.pop %v1801
      %v1848 = vmul.f32 %v1801, %v1847
      %v1849 = vsub.f32 1.0, %v1848
      %v1850 = vmul.f32 %v1847, %v1849
      %v1851 = vadd.f32 %v1847, %v1850
      %vm1852 = vweird.f32 %v1801
      %vm1853 = vweird.f32 %v1847
      %vm1854 = vmor %vm1852, %vm1853
      %v1855 = vsel %vm1854, %v1847, %v1851
      %v1856 = vand.u32 2147483647, %v1801
      %vm1857 = vcmp.eq.f32.partialorder %v1856, 8.507059e+37
      %v1858 = vand.u32 %v1801, 2147483648
      %v1859 = vor.u32 1.1754944e-38, %v1858
      %v1860 = vsel %vm1857, %v1859, %v1855
      %v1861 = vmul.f32 %v1782, %v1860
      %v1862 = vrcp.pop %v1804
      %v1863 = vmul.f32 %v1804, %v1862
      %v1864 = vsub.f32 1.0, %v1863
      %v1865 = vmul.f32 %v1862, %v1864
      %v1866 = vadd.f32 %v1862, %v1865
      %vm1867 = vweird.f32 %v1804
      %vm1868 = vweird.f32 %v1862
      %vm1869 = vmor %vm1867, %vm1868
      %v1870 = vsel %vm1869, %v1862, %v1866
      %v1871 = vand.u32 2147483647, %v1804
      %vm1872 = vcmp.eq.f32.partialorder %v1871, 8.507059e+37
      %v1873 = vand.u32 %v1804, 2147483648
      %v1874 = vor.u32 1.1754944e-38, %v1873
      %v1875 = vsel %vm1872, %v1874, %v1870
      %v1876 = vmul.f32 %v1784, %v1875
      %v1877 = vrcp.pop %v1807
      %v1878 = vmul.f32 %v1807, %v1877
      %v1879 = vsub.f32 1.0, %v1878
      %v1880 = vmul.f32 %v1877, %v1879
      %v1881 = vadd.f32 %v1877, %v1880
      %vm1882 = vweird.f32 %v1807
      %vm1883 = vweird.f32 %v1877
      %vm1884 = vmor %vm1882, %vm1883
      %v1885 = vsel %vm1884, %v1877, %v1881
      %v1886 = vand.u32 2147483647, %v1807
      %vm1887 = vcmp.eq.f32.partialorder %v1886, 8.507059e+37
      %v1888 = vand.u32 %v1807, 2147483648
      %v1889 = vor.u32 1.1754944e-38, %v1888
      %v1890 = vsel %vm1887, %v1889, %v1885
      %v1891 = vmul.f32 %v1786, %v1890
      %v1892 = vrcp.pop %v1810
      %v1893 = vmul.f32 %v1810, %v1892
      %v1894 = vsub.f32 1.0, %v1893
      %v1895 = vmul.f32 %v1892, %v1894
      %v1896 = vadd.f32 %v1892, %v1895
      %vm1897 = vweird.f32 %v1810
      %vm1898 = vweird.f32 %v1892
      %vm1899 = vmor %vm1897, %vm1898
      %v1900 = vsel %vm1899, %v1892, %v1896
      %v1901 = vand.u32 2147483647, %v1810
      %vm1902 = vcmp.eq.f32.partialorder %v1901, 8.507059e+37
      %v1903 = vand.u32 %v1810, 2147483648
      %v1904 = vor.u32 1.1754944e-38, %v1903
      %v1905 = vsel %vm1902, %v1904, %v1900
      %v1906 = vmul.f32 %v1788, %v1905
      %v1907 = vrcp.pop %v1813
      %v1908 = vmul.f32 %v1813, %v1907
      %v1909 = vsub.f32 1.0, %v1908
      %v1910 = vmul.f32 %v1907, %v1909
      %v1911 = vadd.f32 %v1907, %v1910
      %vm1912 = vweird.f32 %v1813
      %vm1913 = vweird.f32 %v1907
      %vm1914 = vmor %vm1912, %vm1913
      %v1915 = vsel %vm1914, %v1907, %v1911
      %v1916 = vand.u32 2147483647, %v1813
      %vm1917 = vcmp.eq.f32.partialorder %v1916, 8.507059e+37
      %v1918 = vand.u32 %v1813, 2147483648
      %v1919 = vor.u32 1.1754944e-38, %v1918
      %v1920 = vsel %vm1917, %v1919, %v1915
      %v1921 = vmul.f32 %v1790, %v1920
      %v1922 = vrcp.pop %v1816
      %v1923 = vmul.f32 %v1816, %v1922
      %v1924 = vsub.f32 1.0, %v1923
      %v1925 = vmul.f32 %v1922, %v1924
      %v1926 = vadd.f32 %v1922, %v1925
      %vm1927 = vweird.f32 %v1816
      %vm1928 = vweird.f32 %v1922
      %vm1929 = vmor %vm1927, %vm1928
      %v1930 = vsel %vm1929, %v1922, %v1926
      %v1931 = vand.u32 2147483647, %v1816
      %vm1932 = vcmp.eq.f32.partialorder %v1931, 8.507059e+37
      %v1933 = vand.u32 %v1816, 2147483648
      %v1934 = vor.u32 1.1754944e-38, %v1933
      %v1935 = vsel %vm1932, %v1934, %v1930
      %v1936 = vmul.f32 %v1792, %v1935
      %v1938 = vsel %vm568, %v1831, 0
      %v1941 = vsel %vm568, %v1846, 0
      %v1944 = vsel %vm568, %v1861, 0
      %v1947 = vsel %vm568, %v1876, 0
      %v1950 = vsel %vm568, %v1891, 0
      %v1953 = vsel %vm568, %v1906, 0
      %v1956 = vsel %vm568, %v1921, 0
      %v1959 = vsel %vm568, %v1936, 0
      %v1962 = vsel %vm593, %v1521, 0
      %1964 = vmatpush.msra.mxu0 0.0
      %1965 = vmatpush.msra.mxu0 0.0
      %1966 = vmatpush.msra.mxu0 0.0
      %1967 = vmatpush.msra.mxu0 0.0
      %1968 = vmatpush.msra.mxu0 0.0
      %1969 = vmatpush.msra.mxu0 0.0
      %1970 = vmatpush.msra.mxu0 0.0
      %1971 = vmatpush.msra.mxu0 0.0
      %1972 = vmatpush.msra.mxu0 %v1962
      %1973 = vmatpush.msra.mxu0 %v1520
      %1974 = vmatpush.msra.mxu0 %v1519
      %1975 = vmatpush.msra.mxu0 %v1518
      %1976 = vmatpush.msra.mxu0 %v1517
      %1977 = vmatpush.msra.mxu0 %v1516
      %1978 = vmatpush.msra.mxu0 %v1515
      %1979 = vmatpush.msra.mxu0 %v1514
      %1980 = vmatmul.f32.gmra.mxu0 %v1938
      %v1981 = vpop.f32.mrf.mxu0
      %v1982 = vadd.f32 0.0, %v1981
      %1983 = vmatmul.f32.gmra.mxu0 %v1941
      %v1984 = vpop.f32.mrf.mxu0
      %v1985 = vadd.f32 0.0, %v1984
      %1986 = vmatmul.f32.gmra.mxu0 %v1944
      %v1987 = vpop.f32.mrf.mxu0
      %v1988 = vadd.f32 0.0, %v1987
      %1989 = vmatmul.f32.gmra.mxu0 %v1947
      %v1990 = vpop.f32.mrf.mxu0
      %v1991 = vadd.f32 0.0, %v1990
      %1992 = vmatmul.f32.gmra.mxu0 %v1950
      %v1993 = vpop.f32.mrf.mxu0
      %v1994 = vadd.f32 0.0, %v1993
      %1995 = vmatmul.f32.gmra.mxu0 %v1953
      %v1996 = vpop.f32.mrf.mxu0
      %v1997 = vadd.f32 0.0, %v1996
      %1998 = vmatmul.f32.gmra.mxu0 %v1956
      %v1999 = vpop.f32.mrf.mxu0
      %v2000 = vadd.f32 0.0, %v1999
      %2001 = vmatmul.f32.gmra.mxu0 %v1959
      %v2002 = vpop.f32.mrf.mxu0
      %v2003 = vadd.f32 0.0, %v2002
      %2004 = vdwg.mxu0
      %vm2005 = vcmp.gt.f32.partialorder %v1982, 0.0
      %vm2006 = vcmp.gt.f32.partialorder %v1985, 0.0
      %vm2007 = vcmp.gt.f32.partialorder %v1988, 0.0
      %vm2008 = vcmp.gt.f32.partialorder %v1991, 0.0
      %vm2009 = vcmp.gt.f32.partialorder %v1994, 0.0
      %vm2010 = vcmp.gt.f32.partialorder %v1997, 0.0
      %vm2011 = vcmp.gt.f32.partialorder %v2000, 0.0
      %vm2012 = vcmp.gt.f32.partialorder %v2003, 0.0
      %v2013 = vmul.f32 %v1982, 0.01
      %v2014 = vmul.f32 %v1985, 0.01
      %v2015 = vmul.f32 %v1988, 0.01
      %v2016 = vmul.f32 %v1991, 0.01
      %v2017 = vmul.f32 %v1994, 0.01
      %v2018 = vmul.f32 %v1997, 0.01
      %v2019 = vmul.f32 %v2000, 0.01
      %v2020 = vmul.f32 %v2003, 0.01
      %v2021 = vsel %vm2005, %v1982, %v2013
      %v2022 = vsel %vm2006, %v1985, %v2014
      %v2023 = vsel %vm2007, %v1988, %v2015
      %v2024 = vsel %vm2008, %v1991, %v2016
      %v2025 = vsel %vm2009, %v1994, %v2017
      %v2026 = vsel %vm2010, %v1997, %v2018
      %v2027 = vsel %vm2011, %v2000, %v2019
      %v2028 = vsel %vm2012, %v2003, %v2020
      %v2029 = vadd.f32 %v2021, %v302
      %v2030 = vadd.f32 %v2022, %v304
      %v2031 = vadd.f32 %v2023, %v307
      %v2032 = vadd.f32 %v2024, %v309
      %v2033 = vadd.f32 %v2025, %v312
      %v2034 = vadd.f32 %v2026, %v314
      %v2035 = vadd.f32 %v2027, %v317
      %v2036 = vadd.f32 %v2028, %v319
      %v2037 = vadd.f32 %v2029, %v2030
      %v2038 = vadd.f32 %v2037, %v2031
      %v2039 = vadd.f32 %v2038, %v2032
      %v2040 = vadd.f32 %v2039, %v2033
      %v2041 = vadd.f32 %v2040, %v2034
      %v2042 = vadd.f32 %v2041, %v2035
      %v2043 = vsel %vm593, %v2036, 0.0
      %v2044 = vadd.f32 %v2042, %v2043
      %2045 = vadd.xlane.f32.xlu0 %v2044
      %v2046 = vpop.xlane.xlu0 %2045
      %v2047 = vrot.slane %v2046, 4
      %v2048 = vadd.f32 %v2046, %v2047
      %v2049 = vrot.slane %v2048, 2
      %v2050 = vadd.f32 %v2048, %v2049
      %v2051 = vrot.slane %v2050, 1
      %v2052 = vadd.f32 %v2050, %v2051
      %s2053 = vtos %v2052
      %v2054 = vstv %s2053
      %v2055 = vrcp.pop 7680.0
      %v2056 = vmul.f32 7680.0, %v2055
      %v2057 = vsub.f32 1.0, %v2056
      %v2058 = vmul.f32 %v2055, %v2057
      %v2059 = vadd.f32 %v2055, %v2058
      %vm2060 = vweird.f32 %v2055
      %v2061 = vsel %vm2060, %v2055, %v2059
      %v2062 = vmul.f32 %v2054, %v2061
      %v2063 = vsub.f32 %v2029, %v2062
      %v2064 = vsub.f32 %v2030, %v2062
      %v2065 = vsub.f32 %v2031, %v2062
      %v2066 = vsub.f32 %v2032, %v2062
      %v2067 = vsub.f32 %v2033, %v2062
      %v2068 = vsub.f32 %v2034, %v2062
      %v2069 = vsub.f32 %v2035, %v2062
      %v2070 = vsub.f32 %v2036, %v2062
      %v2071 = vmul.f32 %v2063, %v2063
      %v2072 = vmul.f32 %v2064, %v2064
      %v2073 = vmul.f32 %v2065, %v2065
      %v2074 = vmul.f32 %v2066, %v2066
      %v2075 = vmul.f32 %v2067, %v2067
      %v2076 = vmul.f32 %v2068, %v2068
      %v2077 = vmul.f32 %v2069, %v2069
      %v2078 = vmul.f32 %v2070, %v2070
      %v2079 = vadd.f32 %v2071, %v2072
      %v2080 = vadd.f32 %v2079, %v2073
      %v2081 = vadd.f32 %v2080, %v2074
      %v2082 = vadd.f32 %v2081, %v2075
      %v2083 = vadd.f32 %v2082, %v2076
      %v2084 = vadd.f32 %v2083, %v2077
      %v2085 = vsel %vm593, %v2078, 0.0
      %v2086 = vadd.f32 %v2084, %v2085
      %2087 = vadd.xlane.f32.xlu0 %v2086
      %v2088 = vpop.xlane.xlu0 %2087
      %v2089 = vrot.slane %v2088, 4
      %v2090 = vadd.f32 %v2088, %v2089
      %v2091 = vrot.slane %v2090, 2
      %v2092 = vadd.f32 %v2090, %v2091
      %v2093 = vrot.slane %v2092, 1
      %v2094 = vadd.f32 %v2092, %v2093
      %s2095 = vtos %v2094
      %v2096 = vstv %s2095
      %v2097 = vmul.f32 %v2096, %v2061
      %v2098 = vadd.f32 %v2097, 1e-05
      %v2099 = vrsqrt.pop %v2098
      %v2100 = vmul.f32 %v2099, %v2098
      %v2101 = vmul.f32 %v2100, %v2099
      %v2102 = vmul.f32 0.5, %v2101
      %v2103 = vsub.f32 1.5, %v2102
      %v2104 = vmul.f32 %v2099, %v2103
      %vm2105 = vweird.f32 %v2098
      %vm2106 = vweird.f32 %v2099
      %vm2107 = vmor %vm2105, %vm2106
      %v2108 = vsel %vm2107, %v2099, %v2104
      %v2109 = vmul.f32 %v2063, %v2108
      %v2110 = vmul.f32 %v2064, %v2108
      %v2111 = vmul.f32 %v2065, %v2108
      %v2112 = vmul.f32 %v2066, %v2108
      %v2113 = vmul.f32 %v2067, %v2108
      %v2114 = vmul.f32 %v2068, %v2108
      %v2115 = vmul.f32 %v2069, %v2108
      %v2116 = vmul.f32 %v2070, %v2108
      %v2117 = vld [vmem:[%s2 + $0x100] sm:$0xff]
      %v2118 = vld [vmem:[%s2 + $0x108] sm:$0xff]
      %v2119 = vld [vmem:[%s2 + $0x110] sm:$0xff]
      %v2120 = vld [vmem:[%s2 + $0x118] sm:$0xff]
      %v2121 = vld [vmem:[%s2 + $0x120] sm:$0xff]
      %v2122 = vld [vmem:[%s2 + $0x128] sm:$0xff]
      %v2123 = vld [vmem:[%s2 + $0x130] sm:$0xff]
      %v2124 = vld [vmem:[%s2 + $0x138] sm:$0xf]
      %v2125 = vmul.f32 %v2109, %v2117
      %v2126 = vmul.f32 %v2110, %v2118
      %v2127 = vmul.f32 %v2111, %v2119
      %v2128 = vmul.f32 %v2112, %v2120
      %v2129 = vmul.f32 %v2113, %v2121
      %v2130 = vmul.f32 %v2114, %v2122
      %v2131 = vmul.f32 %v2115, %v2123
      %v2132 = vmul.f32 %v2116, %v2124
      %v2133 = vld [vmem:[%s2 + $0x140] sm:$0xff]
      %v2134 = vld [vmem:[%s2 + $0x148] sm:$0xff]
      %v2135 = vld [vmem:[%s2 + $0x150] sm:$0xff]
      %v2136 = vld [vmem:[%s2 + $0x158] sm:$0xff]
      %v2137 = vld [vmem:[%s2 + $0x160] sm:$0xff]
      %v2138 = vld [vmem:[%s2 + $0x168] sm:$0xff]
      %v2139 = vld [vmem:[%s2 + $0x170] sm:$0xff]
      %v2140 = vld [vmem:[%s2 + $0x178] sm:$0xf]
      %v2141 = vadd.f32 %v2125, %v2133
      %v2142 = vadd.f32 %v2126, %v2134
      %v2143 = vadd.f32 %v2127, %v2135
      %v2144 = vadd.f32 %v2128, %v2136
      %v2145 = vadd.f32 %v2129, %v2137
      %v2146 = vadd.f32 %v2130, %v2138
      %v2147 = vadd.f32 %v2131, %v2139
      %v2148 = vadd.f32 %v2132, %v2140
      %v2149 = vpack.c.bf16 %v2142, %v2141
      %v2150 = vpack.c.bf16 %v2144, %v2143
      %v2151 = vpack.c.bf16 %v2146, %v2145
      %v2152 = vpack.c.bf16 %v2148, %v2147
      %v2153 = vld [vmem:[%s1 + $0x28] sm:$0xf]
      %v2154 = vld [vmem:[%s1 + $0x7c] sm:$0xf]
      %v2155 = vld [vmem:[%s1 + $0xd0] sm:$0xf]
      %v2156 = vld [vmem:[%s1 + $0x124] sm:$0xf]
      %v2157 = vld [vmem:[%s1 + $0x178] sm:$0xf]
      %v2158 = vld [vmem:[%s1 + $0x1cc] sm:$0xf]
      %v2159 = vld [vmem:[%s1 + $0x220] sm:$0xf]
      %v2160 = vld [vmem:[%s1 + $0x274] sm:$0xf]
      %v2161 = vld [vmem:[%s1 + $0x2c8] sm:$0xf]
      %v2162 = vld [vmem:[%s1 + $0x31c] sm:$0xf]
      %v2163 = vld [vmem:[%s1 + $0x370] sm:$0xf]
      %v2164 = vld [vmem:[%s1 + $0x3c4] sm:$0xf]
      %v2165 = vld [vmem:[%s1 + $0x418] sm:$0xf]
      %v2166 = vld [vmem:[%s1 + $0x46c] sm:$0xf]
      %v2167 = vld [vmem:[%s1 + $0x4c0] sm:$0xf]
      %v2168 = vld [vmem:[%s1 + $0x514] sm:$0xf]
      %v2169 = vld [vmem:[%s2 + $0x204] sm:$0x1]
      %v2170 = vperm.slane %v2169, 0
      %v2187 = vunpack.c.l.b16 %v2153
      %v2188 = vunpack.c.l.b16 %v2154
      %v2189 = vunpack.c.l.b16 %v2155
      %v2190 = vunpack.c.l.b16 %v2156
      %v2191 = vunpack.c.l.b16 %v2157
      %v2192 = vunpack.c.l.b16 %v2158
      %v2193 = vunpack.c.l.b16 %v2159
      %v2194 = vunpack.c.l.b16 %v2160
      %v2195 = vunpack.c.l.b16 %v2161
      %v2196 = vunpack.c.l.b16 %v2162
      %v2197 = vunpack.c.l.b16 %v2163
      %v2198 = vunpack.c.l.b16 %v2164
      %v2199 = vunpack.c.l.b16 %v2165
      %v2200 = vunpack.c.l.b16 %v2166
      %v2201 = vunpack.c.l.b16 %v2167
      %v2202 = vunpack.c.l.b16 %v2168
      %v2203 = vpack.c.b16 %v2188, %v2187
      %v2204 = vpack.c.b16 %v2190, %v2189
      %v2205 = vpack.c.b16 %v2192, %v2191
      %v2206 = vpack.c.b16 %v2194, %v2193
      %v2207 = vpack.c.b16 %v2196, %v2195
      %v2208 = vpack.c.b16 %v2198, %v2197
      %v2209 = vpack.c.b16 %v2200, %v2199
      %v2210 = vpack.c.b16 %v2202, %v2201
      %2219 = vmatpush.bf16.msra.mxu0 %v2210
      %2220 = vmatpush.bf16.msra.mxu0 %v2209
      %2221 = vmatpush.bf16.msra.mxu0 %v2208
      %2222 = vmatpush.bf16.msra.mxu0 %v2207
      %2223 = vmatpush.bf16.msra.mxu0 %v2206
      %2224 = vmatpush.bf16.msra.mxu0 %v2205
      %2225 = vmatpush.bf16.msra.mxu0 %v2204
      %2226 = vmatpush.bf16.msra.mxu0 %v2203
      %2227 = vmatmul.bf16.gmra.mxu0 %v2149
      %v2228 = vpop.f32.mrf.mxu0
      %v2229 = vadd.f32 %v2170, %v2228
      %v2230 = vpop.f32.mrf.mxu0
      %v2231 = vadd.f32 %v2170, %v2230
      %2232 = vmatmul.bf16.gmra.mxu0 %v2150
      %v2233 = vpop.f32.mrf.mxu0
      %v2234 = vadd.f32 %v2170, %v2233
      %v2235 = vpop.f32.mrf.mxu0
      %v2236 = vadd.f32 %v2170, %v2235
      %2237 = vmatmul.bf16.gmra.mxu0 %v2151
      %v2238 = vpop.f32.mrf.mxu0
      %v2239 = vadd.f32 %v2170, %v2238
      %v2240 = vpop.f32.mrf.mxu0
      %v2241 = vadd.f32 %v2170, %v2240
      %2242 = vmatmul.bf16.gmra.mxu0 %v2152
      %v2243 = vpop.f32.mrf.mxu0
      %v2244 = vadd.f32 %v2170, %v2243
      %v2245 = vpop.f32.mrf.mxu0
      %v2246 = vadd.f32 %v2170, %v2245
      %2247 = vdwg.mxu0
      %v2248 = vld [vmem:[%s1 + $0x2c] sm:$0xff]
      %v2249 = vld [vmem:[%s1 + $0x34] sm:$0xf]
      %v2250 = vld [vmem:[%s1 + $0x80] sm:$0xff]
      %v2251 = vld [vmem:[%s1 + $0x88] sm:$0xf]
      %v2252 = vld [vmem:[%s1 + $0xd4] sm:$0xff]
      %v2253 = vld [vmem:[%s1 + $0xdc] sm:$0xf]
      %v2254 = vld [vmem:[%s1 + $0x128] sm:$0xff]
      %v2255 = vld [vmem:[%s1 + $0x130] sm:$0xf]
      %v2256 = vld [vmem:[%s1 + $0x17c] sm:$0xff]
      %v2257 = vld [vmem:[%s1 + $0x184] sm:$0xf]
      %v2258 = vld [vmem:[%s1 + $0x1d0] sm:$0xff]
      %v2259 = vld [vmem:[%s1 + $0x1d8] sm:$0xf]
      %v2260 = vld [vmem:[%s1 + $0x224] sm:$0xff]
      %v2261 = vld [vmem:[%s1 + $0x22c] sm:$0xf]
      %v2262 = vld [vmem:[%s1 + $0x278] sm:$0xff]
      %v2263 = vld [vmem:[%s1 + $0x280] sm:$0xf]
      %v2264 = vld [vmem:[%s1 + $0x2cc] sm:$0xff]
      %v2265 = vld [vmem:[%s1 + $0x2d4] sm:$0xf]
      %v2266 = vld [vmem:[%s1 + $0x320] sm:$0xff]
      %v2267 = vld [vmem:[%s1 + $0x328] sm:$0xf]
      %v2268 = vld [vmem:[%s1 + $0x374] sm:$0xff]
      %v2269 = vld [vmem:[%s1 + $0x37c] sm:$0xf]
      %v2270 = vld [vmem:[%s1 + $0x3c8] sm:$0xff]
      %v2271 = vld [vmem:[%s1 + $0x3d0] sm:$0xf]
      %v2272 = vld [vmem:[%s1 + $0x41c] sm:$0xff]
      %v2273 = vld [vmem:[%s1 + $0x424] sm:$0xf]
      %v2274 = vld [vmem:[%s1 + $0x470] sm:$0xff]
      %v2275 = vld [vmem:[%s1 + $0x478] sm:$0xf]
      %v2276 = vld [vmem:[%s1 + $0x4c4] sm:$0xff]
      %v2277 = vld [vmem:[%s1 + $0x4cc] sm:$0xf]
      %v2278 = vld [vmem:[%s1 + $0x518] sm:$0xff]
      %v2279 = vld [vmem:[%s1 + $0x520] sm:$0xf]
      %v2312 = vunpack.c.l.b16 %v2248
      %v2313 = vunpack.c.h.b16 %v2248
      %v2314 = vunpack.c.l.b16 %v2249
      %v2315 = vunpack.c.l.b16 %v2250
      %v2316 = vunpack.c.h.b16 %v2250
      %v2317 = vunpack.c.l.b16 %v2251
      %v2318 = vunpack.c.l.b16 %v2252
      %v2319 = vunpack.c.h.b16 %v2252
      %v2320 = vunpack.c.l.b16 %v2253
      %v2321 = vunpack.c.l.b16 %v2254
      %v2322 = vunpack.c.h.b16 %v2254
      %v2323 = vunpack.c.l.b16 %v2255
      %v2324 = vunpack.c.l.b16 %v2256
      %v2325 = vunpack.c.h.b16 %v2256
      %v2326 = vunpack.c.l.b16 %v2257
      %v2327 = vunpack.c.l.b16 %v2258
      %v2328 = vunpack.c.h.b16 %v2258
      %v2329 = vunpack.c.l.b16 %v2259
      %v2330 = vunpack.c.l.b16 %v2260
      %v2331 = vunpack.c.h.b16 %v2260
      %v2332 = vunpack.c.l.b16 %v2261
      %v2333 = vunpack.c.l.b16 %v2262
      %v2334 = vunpack.c.h.b16 %v2262
      %v2335 = vunpack.c.l.b16 %v2263
      %v2336 = vunpack.c.l.b16 %v2264
      %v2337 = vunpack.c.h.b16 %v2264
      %v2338 = vunpack.c.l.b16 %v2265
      %v2339 = vunpack.c.l.b16 %v2266
      %v2340 = vunpack.c.h.b16 %v2266
      %v2341 = vunpack.c.l.b16 %v2267
      %v2342 = vunpack.c.l.b16 %v2268
      %v2343 = vunpack.c.h.b16 %v2268
      %v2344 = vunpack.c.l.b16 %v2269
      %v2345 = vunpack.c.l.b16 %v2270
      %v2346 = vunpack.c.h.b16 %v2270
      %v2347 = vunpack.c.l.b16 %v2271
      %v2348 = vunpack.c.l.b16 %v2272
      %v2349 = vunpack.c.h.b16 %v2272
      %v2350 = vunpack.c.l.b16 %v2273
      %v2351 = vunpack.c.l.b16 %v2274
      %v2352 = vunpack.c.h.b16 %v2274
      %v2353 = vunpack.c.l.b16 %v2275
      %v2354 = vunpack.c.l.b16 %v2276
      %v2355 = vunpack.c.h.b16 %v2276
      %v2356 = vunpack.c.l.b16 %v2277
      %v2357 = vunpack.c.l.b16 %v2278
      %v2358 = vunpack.c.h.b16 %v2278
      %v2359 = vunpack.c.l.b16 %v2279
      %v2360 = vpack.c.b16 %v2315, %v2312
      %v2361 = vpack.c.b16 %v2316, %v2313
      %v2362 = vpack.c.b16 %v2317, %v2314
      %v2363 = vpack.c.b16 %v2321, %v2318
      %v2364 = vpack.c.b16 %v2322, %v2319
      %v2365 = vpack.c.b16 %v2323, %v2320
      %v2366 = vpack.c.b16 %v2327, %v2324
      %v2367 = vpack.c.b16 %v2328, %v2325
      %v2368 = vpack.c.b16 %v2329, %v2326
      %v2369 = vpack.c.b16 %v2333, %v2330
      %v2370 = vpack.c.b16 %v2334, %v2331
      %v2371 = vpack.c.b16 %v2335, %v2332
      %v2372 = vpack.c.b16 %v2339, %v2336
      %v2373 = vpack.c.b16 %v2340, %v2337
      %v2374 = vpack.c.b16 %v2341, %v2338
      %v2375 = vpack.c.b16 %v2345, %v2342
      %v2376 = vpack.c.b16 %v2346, %v2343
      %v2377 = vpack.c.b16 %v2347, %v2344
      %v2378 = vpack.c.b16 %v2351, %v2348
      %v2379 = vpack.c.b16 %v2352, %v2349
      %v2380 = vpack.c.b16 %v2353, %v2350
      %v2381 = vpack.c.b16 %v2357, %v2354
      %v2382 = vpack.c.b16 %v2358, %v2355
      %v2383 = vpack.c.b16 %v2359, %v2356
      %2408 = vmatpush.bf16.msra.mxu0 %v2381
      %2409 = vmatpush.bf16.msra.mxu0 %v2378
      %2410 = vmatpush.bf16.msra.mxu0 %v2375
      %2411 = vmatpush.bf16.msra.mxu0 %v2372
      %2412 = vmatpush.bf16.msra.mxu0 %v2369
      %2413 = vmatpush.bf16.msra.mxu0 %v2366
      %2414 = vmatpush.bf16.msra.mxu0 %v2363
      %2415 = vmatpush.bf16.msra.mxu0 %v2360
      %2416 = vmatmul.bf16.gmra.mxu0 %v2149
      %v2417 = vpop.f32.mrf.mxu0
      %v2418 = vadd.f32 0.0, %v2417
      %v2419 = vpop.f32.mrf.mxu0
      %v2420 = vadd.f32 0.0, %v2419
      %2421 = vmatmul.bf16.gmra.mxu0 %v2150
      %v2422 = vpop.f32.mrf.mxu0
      %v2423 = vadd.f32 0.0, %v2422
      %v2424 = vpop.f32.mrf.mxu0
      %v2425 = vadd.f32 0.0, %v2424
      %2426 = vmatmul.bf16.gmra.mxu0 %v2151
      %v2427 = vpop.f32.mrf.mxu0
      %v2428 = vadd.f32 0.0, %v2427
      %v2429 = vpop.f32.mrf.mxu0
      %v2430 = vadd.f32 0.0, %v2429
      %2431 = vmatmul.bf16.gmra.mxu0 %v2152
      %v2432 = vpop.f32.mrf.mxu0
      %v2433 = vadd.f32 0.0, %v2432
      %v2434 = vpop.f32.mrf.mxu0
      %v2435 = vadd.f32 0.0, %v2434
      %2436 = vdwg.mxu0
      %2437 = vmatpush.bf16.msra.mxu0 %v2382
      %2438 = vmatpush.bf16.msra.mxu0 %v2379
      %2439 = vmatpush.bf16.msra.mxu0 %v2376
      %2440 = vmatpush.bf16.msra.mxu0 %v2373
      %2441 = vmatpush.bf16.msra.mxu0 %v2370
      %2442 = vmatpush.bf16.msra.mxu0 %v2367
      %2443 = vmatpush.bf16.msra.mxu0 %v2364
      %2444 = vmatpush.bf16.msra.mxu0 %v2361
      %2445 = vmatmul.bf16.gmra.mxu0 %v2149
      %v2446 = vpop.f32.mrf.mxu0
      %v2447 = vadd.f32 0.0, %v2446
      %v2448 = vpop.f32.mrf.mxu0
      %v2449 = vadd.f32 0.0, %v2448
      %2450 = vmatmul.bf16.gmra.mxu0 %v2150
      %v2451 = vpop.f32.mrf.mxu0
      %v2452 = vadd.f32 0.0, %v2451
      %v2453 = vpop.f32.mrf.mxu0
      %v2454 = vadd.f32 0.0, %v2453
      %2455 = vmatmul.bf16.gmra.mxu0 %v2151
      %v2456 = vpop.f32.mrf.mxu0
      %v2457 = vadd.f32 0.0, %v2456
      %v2458 = vpop.f32.mrf.mxu0
      %v2459 = vadd.f32 0.0, %v2458
      %2460 = vmatmul.bf16.gmra.mxu0 %v2152
      %v2461 = vpop.f32.mrf.mxu0
      %v2462 = vadd.f32 0.0, %v2461
      %v2463 = vpop.f32.mrf.mxu0
      %v2464 = vadd.f32 0.0, %v2463
      %2465 = vdwg.mxu0
      %2466 = vmatpush.bf16.msra.mxu0 %v2383
      %2467 = vmatpush.bf16.msra.mxu0 %v2380
      %2468 = vmatpush.bf16.msra.mxu0 %v2377
      %2469 = vmatpush.bf16.msra.mxu0 %v2374
      %2470 = vmatpush.bf16.msra.mxu0 %v2371
      %2471 = vmatpush.bf16.msra.mxu0 %v2368
      %2472 = vmatpush.bf16.msra.mxu0 %v2365
      %2473 = vmatpush.bf16.msra.mxu0 %v2362
      %2474 = vmatmul.bf16.gmra.mxu0 %v2149
      %v2475 = vpop.f32.mrf.mxu0
      %v2476 = vadd.f32 0.0, %v2475
      %v2477 = vpop.f32.mrf.mxu0
      %v2478 = vadd.f32 0.0, %v2477
      %2479 = vmatmul.bf16.gmra.mxu0 %v2150
      %v2480 = vpop.f32.mrf.mxu0
      %v2481 = vadd.f32 0.0, %v2480
      %v2482 = vpop.f32.mrf.mxu0
      %v2483 = vadd.f32 0.0, %v2482
      %2484 = vmatmul.bf16.gmra.mxu0 %v2151
      %v2485 = vpop.f32.mrf.mxu0
      %v2486 = vadd.f32 0.0, %v2485
      %v2487 = vpop.f32.mrf.mxu0
      %v2488 = vadd.f32 0.0, %v2487
      %2489 = vmatmul.bf16.gmra.mxu0 %v2152
      %v2490 = vpop.f32.mrf.mxu0
      %v2491 = vadd.f32 0.0, %v2490
      %v2492 = vpop.f32.mrf.mxu0
      %v2493 = vadd.f32 0.0, %v2492
      %2494 = vdwg.mxu0
      %v2496 = vsel %vm593, %v2435, 0
      %2498 = vmatpush.msra.mxu0 0.0
      %2499 = vmatpush.msra.mxu0 0.0
      %2500 = vmatpush.msra.mxu0 0.0
      %2501 = vmatpush.msra.mxu0 0.0
      %2502 = vmatpush.msra.mxu0 0.0
      %2503 = vmatpush.msra.mxu0 0.0
      %2504 = vmatpush.msra.mxu0 0.0
      %2505 = vmatpush.msra.mxu0 0.0
      %2506 = vmatpush.msra.mxu0 %v2496
      %2507 = vmatpush.msra.mxu0 %v2433
      %2508 = vmatpush.msra.mxu0 %v2430
      %2509 = vmatpush.msra.mxu0 %v2428
      %2510 = vmatpush.msra.mxu0 %v2425
      %2511 = vmatpush.msra.mxu0 %v2423
      %2512 = vmatpush.msra.mxu0 %v2420
      %2513 = vmatpush.msra.mxu0 %v2418
      %2514 = vmatmul.f32.gmra.mxu0 %v570
      %v2515 = vpop.f32.mrf.mxu0
      %v2516 = vadd.f32 %v2447, %v2515
      %2517 = vmatmul.f32.gmra.mxu0 %v573
      %v2518 = vpop.f32.mrf.mxu0
      %v2519 = vadd.f32 %v2449, %v2518
      %2520 = vmatmul.f32.gmra.mxu0 %v576
      %v2521 = vpop.f32.mrf.mxu0
      %v2522 = vadd.f32 %v2452, %v2521
      %2523 = vmatmul.f32.gmra.mxu0 %v579
      %v2524 = vpop.f32.mrf.mxu0
      %v2525 = vadd.f32 %v2454, %v2524
      %2526 = vmatmul.f32.gmra.mxu0 %v582
      %v2527 = vpop.f32.mrf.mxu0
      %v2528 = vadd.f32 %v2457, %v2527
      %2529 = vmatmul.f32.gmra.mxu0 %v585
      %v2530 = vpop.f32.mrf.mxu0
      %v2531 = vadd.f32 %v2459, %v2530
      %2532 = vmatmul.f32.gmra.mxu0 %v588
      %v2533 = vpop.f32.mrf.mxu0
      %v2534 = vadd.f32 %v2462, %v2533
      %2535 = vmatmul.f32.gmra.mxu0 %v591
      %v2536 = vpop.f32.mrf.mxu0
      %v2537 = vadd.f32 %v2464, %v2536
      %2538 = vdwg.mxu0
      %v2540 = vsel %vm593, %v2493, 0
      %2542 = vmatpush.msra.mxu0 0.0
      %2543 = vmatpush.msra.mxu0 0.0
      %2544 = vmatpush.msra.mxu0 0.0
      %2545 = vmatpush.msra.mxu0 0.0
      %2546 = vmatpush.msra.mxu0 0.0
      %2547 = vmatpush.msra.mxu0 0.0
      %2548 = vmatpush.msra.mxu0 0.0
      %2549 = vmatpush.msra.mxu0 0.0
      %2550 = vmatpush.msra.mxu0 %v2540
      %2551 = vmatpush.msra.mxu0 %v2491
      %2552 = vmatpush.msra.mxu0 %v2488
      %2553 = vmatpush.msra.mxu0 %v2486
      %2554 = vmatpush.msra.mxu0 %v2483
      %2555 = vmatpush.msra.mxu0 %v2481
      %2556 = vmatpush.msra.mxu0 %v2478
      %2557 = vmatpush.msra.mxu0 %v2476
      %2558 = vmatmul.f32.gmra.mxu0 %v639
      %v2559 = vpop.f32.mrf.mxu0
      %v2560 = vadd.f32 0.0, %v2559
      %2561 = vmatmul.f32.gmra.mxu0 %v642
      %v2562 = vpop.f32.mrf.mxu0
      %v2563 = vadd.f32 0.0, %v2562
      %2564 = vmatmul.f32.gmra.mxu0 %v645
      %v2565 = vpop.f32.mrf.mxu0
      %v2566 = vadd.f32 0.0, %v2565
      %2567 = vmatmul.f32.gmra.mxu0 %v648
      %v2568 = vpop.f32.mrf.mxu0
      %v2569 = vadd.f32 0.0, %v2568
      %2570 = vmatmul.f32.gmra.mxu0 %v651
      %v2571 = vpop.f32.mrf.mxu0
      %v2572 = vadd.f32 0.0, %v2571
      %2573 = vmatmul.f32.gmra.mxu0 %v654
      %v2574 = vpop.f32.mrf.mxu0
      %v2575 = vadd.f32 0.0, %v2574
      %2576 = vmatmul.f32.gmra.mxu0 %v657
      %v2577 = vpop.f32.mrf.mxu0
      %v2578 = vadd.f32 0.0, %v2577
      %2579 = vmatmul.f32.gmra.mxu0 %v660
      %v2580 = vpop.f32.mrf.mxu0
      %v2581 = vadd.f32 0.0, %v2580
      %2582 = vdwg.mxu0
      %v2583 = vadd.f32 %v2516, %v2560
      %v2584 = vadd.f32 %v2519, %v2563
      %v2585 = vadd.f32 %v2522, %v2566
      %v2586 = vadd.f32 %v2525, %v2569
      %v2587 = vadd.f32 %v2528, %v2572
      %v2588 = vadd.f32 %v2531, %v2575
      %v2589 = vadd.f32 %v2534, %v2578
      %v2590 = vadd.f32 %v2537, %v2581
      %v2591 = vld [vmem:[%s2 + $0x205] sm:$0x1]
      %v2592 = vperm.slane %v2591, 0
      %v2593 = vadd.f32 %v2583, %v2592
      %v2594 = vadd.f32 %v2584, %v2592
      %v2595 = vadd.f32 %v2585, %v2592
      %v2596 = vadd.f32 %v2586, %v2592
      %v2597 = vadd.f32 %v2587, %v2592
      %v2598 = vadd.f32 %v2588, %v2592
      %v2599 = vadd.f32 %v2589, %v2592
      %v2600 = vadd.f32 %v2590, %v2592
      %vm2601 = vcmp.gt.f32.partialorder %v2593, 0.0
      %vm2602 = vcmp.gt.f32.partialorder %v2594, 0.0
      %vm2603 = vcmp.gt.f32.partialorder %v2595, 0.0
      %vm2604 = vcmp.gt.f32.partialorder %v2596, 0.0
      %vm2605 = vcmp.gt.f32.partialorder %v2597, 0.0
      %vm2606 = vcmp.gt.f32.partialorder %v2598, 0.0
      %vm2607 = vcmp.gt.f32.partialorder %v2599, 0.0
      %vm2608 = vcmp.gt.f32.partialorder %v2600, 0.0
      %v2609 = vmul.f32 %v2593, 0.01
      %v2610 = vmul.f32 %v2594, 0.01
      %v2611 = vmul.f32 %v2595, 0.01
      %v2612 = vmul.f32 %v2596, 0.01
      %v2613 = vmul.f32 %v2597, 0.01
      %v2614 = vmul.f32 %v2598, 0.01
      %v2615 = vmul.f32 %v2599, 0.01
      %v2616 = vmul.f32 %v2600, 0.01
      %v2617 = vsel %vm2601, %v2593, %v2609
      %v2618 = vsel %vm2602, %v2594, %v2610
      %v2619 = vsel %vm2603, %v2595, %v2611
      %v2620 = vsel %vm2604, %v2596, %v2612
      %v2621 = vsel %vm2605, %v2597, %v2613
      %v2622 = vsel %vm2606, %v2598, %v2614
      %v2623 = vsel %vm2607, %v2599, %v2615
      %v2624 = vsel %vm2608, %v2600, %v2616
      %v2625 = vpack.c.bf16 %v2618, %v2617
      %v2626 = vpack.c.bf16 %v2620, %v2619
      %v2627 = vpack.c.bf16 %v2622, %v2621
      %v2628 = vpack.c.bf16 %v2624, %v2623
      %v2629 = vld [vmem:[%s1 + $0x38] sm:$0xff]
      %v2630 = vld [vmem:[%s1 + $0x40] sm:$0xf]
      %v2631 = vld [vmem:[%s1 + $0x8c] sm:$0xff]
      %v2632 = vld [vmem:[%s1 + $0x94] sm:$0xf]
      %v2633 = vld [vmem:[%s1 + $0xe0] sm:$0xff]
      %v2634 = vld [vmem:[%s1 + $0xe8] sm:$0xf]
      %v2635 = vld [vmem:[%s1 + $0x134] sm:$0xff]
      %v2636 = vld [vmem:[%s1 + $0x13c] sm:$0xf]
      %v2637 = vld [vmem:[%s1 + $0x188] sm:$0xff]
      %v2638 = vld [vmem:[%s1 + $0x190] sm:$0xf]
      %v2639 = vld [vmem:[%s1 + $0x1dc] sm:$0xff]
      %v2640 = vld [vmem:[%s1 + $0x1e4] sm:$0xf]
      %v2641 = vld [vmem:[%s1 + $0x230] sm:$0xff]
      %v2642 = vld [vmem:[%s1 + $0x238] sm:$0xf]
      %v2643 = vld [vmem:[%s1 + $0x284] sm:$0xff]
      %v2644 = vld [vmem:[%s1 + $0x28c] sm:$0xf]
      %v2645 = vld [vmem:[%s1 + $0x2d8] sm:$0xff]
      %v2646 = vld [vmem:[%s1 + $0x2e0] sm:$0xf]
      %v2647 = vld [vmem:[%s1 + $0x32c] sm:$0xff]
      %v2648 = vld [vmem:[%s1 + $0x334] sm:$0xf]
      %v2649 = vld [vmem:[%s1 + $0x380] sm:$0xff]
      %v2650 = vld [vmem:[%s1 + $0x388] sm:$0xf]
      %v2651 = vld [vmem:[%s1 + $0x3d4] sm:$0xff]
      %v2652 = vld [vmem:[%s1 + $0x3dc] sm:$0xf]
      %v2653 = vld [vmem:[%s1 + $0x428] sm:$0xff]
      %v2654 = vld [vmem:[%s1 + $0x430] sm:$0xf]
      %v2655 = vld [vmem:[%s1 + $0x47c] sm:$0xff]
      %v2656 = vld [vmem:[%s1 + $0x484] sm:$0xf]
      %v2657 = vld [vmem:[%s1 + $0x4d0] sm:$0xff]
      %v2658 = vld [vmem:[%s1 + $0x4d8] sm:$0xf]
      %v2659 = vld [vmem:[%s1 + $0x524] sm:$0xff]
      %v2660 = vld [vmem:[%s1 + $0x52c] sm:$0xf]
      %v2693 = vunpack.c.l.b16 %v2629
      %v2694 = vunpack.c.h.b16 %v2629
      %v2695 = vunpack.c.l.b16 %v2630
      %v2696 = vunpack.c.l.b16 %v2631
      %v2697 = vunpack.c.h.b16 %v2631
      %v2698 = vunpack.c.l.b16 %v2632
      %v2699 = vunpack.c.l.b16 %v2633
      %v2700 = vunpack.c.h.b16 %v2633
      %v2701 = vunpack.c.l.b16 %v2634
      %v2702 = vunpack.c.l.b16 %v2635
      %v2703 = vunpack.c.h.b16 %v2635
      %v2704 = vunpack.c.l.b16 %v2636
      %v2705 = vunpack.c.l.b16 %v2637
      %v2706 = vunpack.c.h.b16 %v2637
      %v2707 = vunpack.c.l.b16 %v2638
      %v2708 = vunpack.c.l.b16 %v2639
      %v2709 = vunpack.c.h.b16 %v2639
      %v2710 = vunpack.c.l.b16 %v2640
      %v2711 = vunpack.c.l.b16 %v2641
      %v2712 = vunpack.c.h.b16 %v2641
      %v2713 = vunpack.c.l.b16 %v2642
      %v2714 = vunpack.c.l.b16 %v2643
      %v2715 = vunpack.c.h.b16 %v2643
      %v2716 = vunpack.c.l.b16 %v2644
      %v2717 = vunpack.c.l.b16 %v2645
      %v2718 = vunpack.c.h.b16 %v2645
      %v2719 = vunpack.c.l.b16 %v2646
      %v2720 = vunpack.c.l.b16 %v2647
      %v2721 = vunpack.c.h.b16 %v2647
      %v2722 = vunpack.c.l.b16 %v2648
      %v2723 = vunpack.c.l.b16 %v2649
      %v2724 = vunpack.c.h.b16 %v2649
      %v2725 = vunpack.c.l.b16 %v2650
      %v2726 = vunpack.c.l.b16 %v2651
      %v2727 = vunpack.c.h.b16 %v2651
      %v2728 = vunpack.c.l.b16 %v2652
      %v2729 = vunpack.c.l.b16 %v2653
      %v2730 = vunpack.c.h.b16 %v2653
      %v2731 = vunpack.c.l.b16 %v2654
      %v2732 = vunpack.c.l.b16 %v2655
      %v2733 = vunpack.c.h.b16 %v2655
      %v2734 = vunpack.c.l.b16 %v2656
      %v2735 = vunpack.c.l.b16 %v2657
      %v2736 = vunpack.c.h.b16 %v2657
      %v2737 = vunpack.c.l.b16 %v2658
      %v2738 = vunpack.c.l.b16 %v2659
      %v2739 = vunpack.c.h.b16 %v2659
      %v2740 = vunpack.c.l.b16 %v2660
      %v2741 = vpack.c.b16 %v2696, %v2693
      %v2742 = vpack.c.b16 %v2697, %v2694
      %v2743 = vpack.c.b16 %v2698, %v2695
      %v2744 = vpack.c.b16 %v2702, %v2699
      %v2745 = vpack.c.b16 %v2703, %v2700
      %v2746 = vpack.c.b16 %v2704, %v2701
      %v2747 = vpack.c.b16 %v2708, %v2705
      %v2748 = vpack.c.b16 %v2709, %v2706
      %v2749 = vpack.c.b16 %v2710, %v2707
      %v2750 = vpack.c.b16 %v2714, %v2711
      %v2751 = vpack.c.b16 %v2715, %v2712
      %v2752 = vpack.c.b16 %v2716, %v2713
      %v2753 = vpack.c.b16 %v2720, %v2717
      %v2754 = vpack.c.b16 %v2721, %v2718
      %v2755 = vpack.c.b16 %v2722, %v2719
      %v2756 = vpack.c.b16 %v2726, %v2723
      %v2757 = vpack.c.b16 %v2727, %v2724
      %v2758 = vpack.c.b16 %v2728, %v2725
      %v2759 = vpack.c.b16 %v2732, %v2729
      %v2760 = vpack.c.b16 %v2733, %v2730
      %v2761 = vpack.c.b16 %v2734, %v2731
      %v2762 = vpack.c.b16 %v2738, %v2735
      %v2763 = vpack.c.b16 %v2739, %v2736
      %v2764 = vpack.c.b16 %v2740, %v2737
      %2789 = vmatpush.bf16.msra.mxu0 %v2762
      %2790 = vmatpush.bf16.msra.mxu0 %v2759
      %2791 = vmatpush.bf16.msra.mxu0 %v2756
      %2792 = vmatpush.bf16.msra.mxu0 %v2753
      %2793 = vmatpush.bf16.msra.mxu0 %v2750
      %2794 = vmatpush.bf16.msra.mxu0 %v2747
      %2795 = vmatpush.bf16.msra.mxu0 %v2744
      %2796 = vmatpush.bf16.msra.mxu0 %v2741
      %2797 = vmatmul.bf16.gmra.mxu0 %v2625
      %v2798 = vpop.f32.mrf.mxu0
      %v2799 = vadd.f32 0.0, %v2798
      %v2800 = vpop.f32.mrf.mxu0
      %v2801 = vadd.f32 0.0, %v2800
      %2802 = vmatmul.bf16.gmra.mxu0 %v2626
      %v2803 = vpop.f32.mrf.mxu0
      %v2804 = vadd.f32 0.0, %v2803
      %v2805 = vpop.f32.mrf.mxu0
      %v2806 = vadd.f32 0.0, %v2805
      %2807 = vmatmul.bf16.gmra.mxu0 %v2627
      %v2808 = vpop.f32.mrf.mxu0
      %v2809 = vadd.f32 0.0, %v2808
      %v2810 = vpop.f32.mrf.mxu0
      %v2811 = vadd.f32 0.0, %v2810
      %2812 = vmatmul.bf16.gmra.mxu0 %v2628
      %v2813 = vpop.f32.mrf.mxu0
      %v2814 = vadd.f32 0.0, %v2813
      %v2815 = vpop.f32.mrf.mxu0
      %v2816 = vadd.f32 0.0, %v2815
      %2817 = vdwg.mxu0
      %2818 = vmatpush.bf16.msra.mxu0 %v2763
      %2819 = vmatpush.bf16.msra.mxu0 %v2760
      %2820 = vmatpush.bf16.msra.mxu0 %v2757
      %2821 = vmatpush.bf16.msra.mxu0 %v2754
      %2822 = vmatpush.bf16.msra.mxu0 %v2751
      %2823 = vmatpush.bf16.msra.mxu0 %v2748
      %2824 = vmatpush.bf16.msra.mxu0 %v2745
      %2825 = vmatpush.bf16.msra.mxu0 %v2742
      %2826 = vmatmul.bf16.gmra.mxu0 %v2625
      %v2827 = vpop.f32.mrf.mxu0
      %v2828 = vadd.f32 0.0, %v2827
      %v2829 = vpop.f32.mrf.mxu0
      %v2830 = vadd.f32 0.0, %v2829
      %2831 = vmatmul.bf16.gmra.mxu0 %v2626
      %v2832 = vpop.f32.mrf.mxu0
      %v2833 = vadd.f32 0.0, %v2832
      %v2834 = vpop.f32.mrf.mxu0
      %v2835 = vadd.f32 0.0, %v2834
      %2836 = vmatmul.bf16.gmra.mxu0 %v2627
      %v2837 = vpop.f32.mrf.mxu0
      %v2838 = vadd.f32 0.0, %v2837
      %v2839 = vpop.f32.mrf.mxu0
      %v2840 = vadd.f32 0.0, %v2839
      %2841 = vmatmul.bf16.gmra.mxu0 %v2628
      %v2842 = vpop.f32.mrf.mxu0
      %v2843 = vadd.f32 0.0, %v2842
      %v2844 = vpop.f32.mrf.mxu0
      %v2845 = vadd.f32 0.0, %v2844
      %2846 = vdwg.mxu0
      %2847 = vmatpush.bf16.msra.mxu0 %v2764
      %2848 = vmatpush.bf16.msra.mxu0 %v2761
      %2849 = vmatpush.bf16.msra.mxu0 %v2758
      %2850 = vmatpush.bf16.msra.mxu0 %v2755
      %2851 = vmatpush.bf16.msra.mxu0 %v2752
      %2852 = vmatpush.bf16.msra.mxu0 %v2749
      %2853 = vmatpush.bf16.msra.mxu0 %v2746
      %2854 = vmatpush.bf16.msra.mxu0 %v2743
      %2855 = vmatmul.bf16.gmra.mxu0 %v2625
      %v2856 = vpop.f32.mrf.mxu0
      %v2857 = vadd.f32 0.0, %v2856
      %v2858 = vpop.f32.mrf.mxu0
      %v2859 = vadd.f32 0.0, %v2858
      %2860 = vmatmul.bf16.gmra.mxu0 %v2626
      %v2861 = vpop.f32.mrf.mxu0
      %v2862 = vadd.f32 0.0, %v2861
      %v2863 = vpop.f32.mrf.mxu0
      %v2864 = vadd.f32 0.0, %v2863
      %2865 = vmatmul.bf16.gmra.mxu0 %v2627
      %v2866 = vpop.f32.mrf.mxu0
      %v2867 = vadd.f32 0.0, %v2866
      %v2868 = vpop.f32.mrf.mxu0
      %v2869 = vadd.f32 0.0, %v2868
      %2870 = vmatmul.bf16.gmra.mxu0 %v2628
      %v2871 = vpop.f32.mrf.mxu0
      %v2872 = vadd.f32 0.0, %v2871
      %v2873 = vpop.f32.mrf.mxu0
      %v2874 = vadd.f32 0.0, %v2873
      %2875 = vdwg.mxu0
      %v2877 = vsel %vm593, %v2816, 0
      %2879 = vmatpush.msra.mxu0 0.0
      %2880 = vmatpush.msra.mxu0 0.0
      %2881 = vmatpush.msra.mxu0 0.0
      %2882 = vmatpush.msra.mxu0 0.0
      %2883 = vmatpush.msra.mxu0 0.0
      %2884 = vmatpush.msra.mxu0 0.0
      %2885 = vmatpush.msra.mxu0 0.0
      %2886 = vmatpush.msra.mxu0 0.0
      %2887 = vmatpush.msra.mxu0 %v2877
      %2888 = vmatpush.msra.mxu0 %v2814
      %2889 = vmatpush.msra.mxu0 %v2811
      %2890 = vmatpush.msra.mxu0 %v2809
      %2891 = vmatpush.msra.mxu0 %v2806
      %2892 = vmatpush.msra.mxu0 %v2804
      %2893 = vmatpush.msra.mxu0 %v2801
      %2894 = vmatpush.msra.mxu0 %v2799
      %2895 = vmatmul.f32.gmra.mxu0 %v570
      %v2896 = vpop.f32.mrf.mxu0
      %v2897 = vadd.f32 %v2828, %v2896
      %2898 = vmatmul.f32.gmra.mxu0 %v573
      %v2899 = vpop.f32.mrf.mxu0
      %v2900 = vadd.f32 %v2830, %v2899
      %2901 = vmatmul.f32.gmra.mxu0 %v576
      %v2902 = vpop.f32.mrf.mxu0
      %v2903 = vadd.f32 %v2833, %v2902
      %2904 = vmatmul.f32.gmra.mxu0 %v579
      %v2905 = vpop.f32.mrf.mxu0
      %v2906 = vadd.f32 %v2835, %v2905
      %2907 = vmatmul.f32.gmra.mxu0 %v582
      %v2908 = vpop.f32.mrf.mxu0
      %v2909 = vadd.f32 %v2838, %v2908
      %2910 = vmatmul.f32.gmra.mxu0 %v585
      %v2911 = vpop.f32.mrf.mxu0
      %v2912 = vadd.f32 %v2840, %v2911
      %2913 = vmatmul.f32.gmra.mxu0 %v588
      %v2914 = vpop.f32.mrf.mxu0
      %v2915 = vadd.f32 %v2843, %v2914
      %2916 = vmatmul.f32.gmra.mxu0 %v591
      %v2917 = vpop.f32.mrf.mxu0
      %v2918 = vadd.f32 %v2845, %v2917
      %2919 = vdwg.mxu0
      %v2921 = vsel %vm593, %v2874, 0
      %2923 = vmatpush.msra.mxu0 0.0
      %2924 = vmatpush.msra.mxu0 0.0
      %2925 = vmatpush.msra.mxu0 0.0
      %2926 = vmatpush.msra.mxu0 0.0
      %2927 = vmatpush.msra.mxu0 0.0
      %2928 = vmatpush.msra.mxu0 0.0
      %2929 = vmatpush.msra.mxu0 0.0
      %2930 = vmatpush.msra.mxu0 0.0
      %2931 = vmatpush.msra.mxu0 %v2921
      %2932 = vmatpush.msra.mxu0 %v2872
      %2933 = vmatpush.msra.mxu0 %v2869
      %2934 = vmatpush.msra.mxu0 %v2867
      %2935 = vmatpush.msra.mxu0 %v2864
      %2936 = vmatpush.msra.mxu0 %v2862
      %2937 = vmatpush.msra.mxu0 %v2859
      %2938 = vmatpush.msra.mxu0 %v2857
      %2939 = vmatmul.f32.gmra.mxu0 %v639
      %v2940 = vpop.f32.mrf.mxu0
      %v2941 = vadd.f32 0.0, %v2940
      %2942 = vmatmul.f32.gmra.mxu0 %v642
      %v2943 = vpop.f32.mrf.mxu0
      %v2944 = vadd.f32 0.0, %v2943
      %2945 = vmatmul.f32.gmra.mxu0 %v645
      %v2946 = vpop.f32.mrf.mxu0
      %v2947 = vadd.f32 0.0, %v2946
      %2948 = vmatmul.f32.gmra.mxu0 %v648
      %v2949 = vpop.f32.mrf.mxu0
      %v2950 = vadd.f32 0.0, %v2949
      %2951 = vmatmul.f32.gmra.mxu0 %v651
      %v2952 = vpop.f32.mrf.mxu0
      %v2953 = vadd.f32 0.0, %v2952
      %2954 = vmatmul.f32.gmra.mxu0 %v654
      %v2955 = vpop.f32.mrf.mxu0
      %v2956 = vadd.f32 0.0, %v2955
      %2957 = vmatmul.f32.gmra.mxu0 %v657
      %v2958 = vpop.f32.mrf.mxu0
      %v2959 = vadd.f32 0.0, %v2958
      %2960 = vmatmul.f32.gmra.mxu0 %v660
      %v2961 = vpop.f32.mrf.mxu0
      %v2962 = vadd.f32 0.0, %v2961
      %2963 = vdwg.mxu0
      %v2964 = vadd.f32 %v2897, %v2941
      %v2965 = vadd.f32 %v2900, %v2944
      %v2966 = vadd.f32 %v2903, %v2947
      %v2967 = vadd.f32 %v2906, %v2950
      %v2968 = vadd.f32 %v2909, %v2953
      %v2969 = vadd.f32 %v2912, %v2956
      %v2970 = vadd.f32 %v2915, %v2959
      %v2971 = vadd.f32 %v2918, %v2962
      %v2972 = vld [vmem:[%s2 + $0x206] sm:$0x1]
      %v2973 = vperm.slane %v2972, 0
      %v2974 = vadd.f32 %v2964, %v2973
      %v2975 = vadd.f32 %v2965, %v2973
      %v2976 = vadd.f32 %v2966, %v2973
      %v2977 = vadd.f32 %v2967, %v2973
      %v2978 = vadd.f32 %v2968, %v2973
      %v2979 = vadd.f32 %v2969, %v2973
      %v2980 = vadd.f32 %v2970, %v2973
      %v2981 = vadd.f32 %v2971, %v2973
      %vm2982 = vcmp.gt.f32.partialorder %v2974, 0.0
      %vm2983 = vcmp.gt.f32.partialorder %v2975, 0.0
      %vm2984 = vcmp.gt.f32.partialorder %v2976, 0.0
      %vm2985 = vcmp.gt.f32.partialorder %v2977, 0.0
      %vm2986 = vcmp.gt.f32.partialorder %v2978, 0.0
      %vm2987 = vcmp.gt.f32.partialorder %v2979, 0.0
      %vm2988 = vcmp.gt.f32.partialorder %v2980, 0.0
      %vm2989 = vcmp.gt.f32.partialorder %v2981, 0.0
      %v2990 = vmul.f32 %v2974, 0.01
      %v2991 = vmul.f32 %v2975, 0.01
      %v2992 = vmul.f32 %v2976, 0.01
      %v2993 = vmul.f32 %v2977, 0.01
      %v2994 = vmul.f32 %v2978, 0.01
      %v2995 = vmul.f32 %v2979, 0.01
      %v2996 = vmul.f32 %v2980, 0.01
      %v2997 = vmul.f32 %v2981, 0.01
      %v2998 = vsel %vm2982, %v2974, %v2990
      %v2999 = vsel %vm2983, %v2975, %v2991
      %v3000 = vsel %vm2984, %v2976, %v2992
      %v3001 = vsel %vm2985, %v2977, %v2993
      %v3002 = vsel %vm2986, %v2978, %v2994
      %v3003 = vsel %vm2987, %v2979, %v2995
      %v3004 = vsel %vm2988, %v2980, %v2996
      %v3005 = vsel %vm2989, %v2981, %v2997
      %v3006 = vld [vmem:[%s1 + $0x44] sm:$0xff]
      %v3007 = vld [vmem:[%s1 + $0x4c] sm:$0xf]
      %v3008 = vld [vmem:[%s1 + $0x98] sm:$0xff]
      %v3009 = vld [vmem:[%s1 + $0xa0] sm:$0xf]
      %v3010 = vld [vmem:[%s1 + $0xec] sm:$0xff]
      %v3011 = vld [vmem:[%s1 + $0xf4] sm:$0xf]
      %v3012 = vld [vmem:[%s1 + $0x140] sm:$0xff]
      %v3013 = vld [vmem:[%s1 + $0x148] sm:$0xf]
      %v3014 = vld [vmem:[%s1 + $0x194] sm:$0xff]
      %v3015 = vld [vmem:[%s1 + $0x19c] sm:$0xf]
      %v3016 = vld [vmem:[%s1 + $0x1e8] sm:$0xff]
      %v3017 = vld [vmem:[%s1 + $0x1f0] sm:$0xf]
      %v3018 = vld [vmem:[%s1 + $0x23c] sm:$0xff]
      %v3019 = vld [vmem:[%s1 + $0x244] sm:$0xf]
      %v3020 = vld [vmem:[%s1 + $0x290] sm:$0xff]
      %v3021 = vld [vmem:[%s1 + $0x298] sm:$0xf]
      %v3022 = vld [vmem:[%s1 + $0x2e4] sm:$0xff]
      %v3023 = vld [vmem:[%s1 + $0x2ec] sm:$0xf]
      %v3024 = vld [vmem:[%s1 + $0x338] sm:$0xff]
      %v3025 = vld [vmem:[%s1 + $0x340] sm:$0xf]
      %v3026 = vld [vmem:[%s1 + $0x38c] sm:$0xff]
      %v3027 = vld [vmem:[%s1 + $0x394] sm:$0xf]
      %v3028 = vld [vmem:[%s1 + $0x3e0] sm:$0xff]
      %v3029 = vld [vmem:[%s1 + $0x3e8] sm:$0xf]
      %v3030 = vld [vmem:[%s1 + $0x434] sm:$0xff]
      %v3031 = vld [vmem:[%s1 + $0x43c] sm:$0xf]
      %v3032 = vld [vmem:[%s1 + $0x488] sm:$0xff]
      %v3033 = vld [vmem:[%s1 + $0x490] sm:$0xf]
      %v3034 = vld [vmem:[%s1 + $0x4dc] sm:$0xff]
      %v3035 = vld [vmem:[%s1 + $0x4e4] sm:$0xf]
      %v3036 = vld [vmem:[%s1 + $0x530] sm:$0xff]
      %v3037 = vld [vmem:[%s1 + $0x538] sm:$0xf]
      %v3070 = vunpack.c.l.b16 %v3006
      %v3071 = vunpack.c.h.b16 %v3006
      %v3072 = vunpack.c.l.b16 %v3007
      %v3073 = vunpack.c.l.b16 %v3008
      %v3074 = vunpack.c.h.b16 %v3008
      %v3075 = vunpack.c.l.b16 %v3009
      %v3076 = vunpack.c.l.b16 %v3010
      %v3077 = vunpack.c.h.b16 %v3010
      %v3078 = vunpack.c.l.b16 %v3011
      %v3079 = vunpack.c.l.b16 %v3012
      %v3080 = vunpack.c.h.b16 %v3012
      %v3081 = vunpack.c.l.b16 %v3013
      %v3082 = vunpack.c.l.b16 %v3014
      %v3083 = vunpack.c.h.b16 %v3014
      %v3084 = vunpack.c.l.b16 %v3015
      %v3085 = vunpack.c.l.b16 %v3016
      %v3086 = vunpack.c.h.b16 %v3016
      %v3087 = vunpack.c.l.b16 %v3017
      %v3088 = vunpack.c.l.b16 %v3018
      %v3089 = vunpack.c.h.b16 %v3018
      %v3090 = vunpack.c.l.b16 %v3019
      %v3091 = vunpack.c.l.b16 %v3020
      %v3092 = vunpack.c.h.b16 %v3020
      %v3093 = vunpack.c.l.b16 %v3021
      %v3094 = vunpack.c.l.b16 %v3022
      %v3095 = vunpack.c.h.b16 %v3022
      %v3096 = vunpack.c.l.b16 %v3023
      %v3097 = vunpack.c.l.b16 %v3024
      %v3098 = vunpack.c.h.b16 %v3024
      %v3099 = vunpack.c.l.b16 %v3025
      %v3100 = vunpack.c.l.b16 %v3026
      %v3101 = vunpack.c.h.b16 %v3026
      %v3102 = vunpack.c.l.b16 %v3027
      %v3103 = vunpack.c.l.b16 %v3028
      %v3104 = vunpack.c.h.b16 %v3028
      %v3105 = vunpack.c.l.b16 %v3029
      %v3106 = vunpack.c.l.b16 %v3030
      %v3107 = vunpack.c.h.b16 %v3030
      %v3108 = vunpack.c.l.b16 %v3031
      %v3109 = vunpack.c.l.b16 %v3032
      %v3110 = vunpack.c.h.b16 %v3032
      %v3111 = vunpack.c.l.b16 %v3033
      %v3112 = vunpack.c.l.b16 %v3034
      %v3113 = vunpack.c.h.b16 %v3034
      %v3114 = vunpack.c.l.b16 %v3035
      %v3115 = vunpack.c.l.b16 %v3036
      %v3116 = vunpack.c.h.b16 %v3036
      %v3117 = vunpack.c.l.b16 %v3037
      %v3118 = vpack.c.b16 %v3073, %v3070
      %v3119 = vpack.c.b16 %v3074, %v3071
      %v3120 = vpack.c.b16 %v3075, %v3072
      %v3121 = vpack.c.b16 %v3079, %v3076
      %v3122 = vpack.c.b16 %v3080, %v3077
      %v3123 = vpack.c.b16 %v3081, %v3078
      %v3124 = vpack.c.b16 %v3085, %v3082
      %v3125 = vpack.c.b16 %v3086, %v3083
      %v3126 = vpack.c.b16 %v3087, %v3084
      %v3127 = vpack.c.b16 %v3091, %v3088
      %v3128 = vpack.c.b16 %v3092, %v3089
      %v3129 = vpack.c.b16 %v3093, %v3090
      %v3130 = vpack.c.b16 %v3097, %v3094
      %v3131 = vpack.c.b16 %v3098, %v3095
      %v3132 = vpack.c.b16 %v3099, %v3096
      %v3133 = vpack.c.b16 %v3103, %v3100
      %v3134 = vpack.c.b16 %v3104, %v3101
      %v3135 = vpack.c.b16 %v3105, %v3102
      %v3136 = vpack.c.b16 %v3109, %v3106
      %v3137 = vpack.c.b16 %v3110, %v3107
      %v3138 = vpack.c.b16 %v3111, %v3108
      %v3139 = vpack.c.b16 %v3115, %v3112
      %v3140 = vpack.c.b16 %v3116, %v3113
      %v3141 = vpack.c.b16 %v3117, %v3114
      %3166 = vmatpush.bf16.msra.mxu0 %v3139
      %3167 = vmatpush.bf16.msra.mxu0 %v3136
      %3168 = vmatpush.bf16.msra.mxu0 %v3133
      %3169 = vmatpush.bf16.msra.mxu0 %v3130
      %3170 = vmatpush.bf16.msra.mxu0 %v3127
      %3171 = vmatpush.bf16.msra.mxu0 %v3124
      %3172 = vmatpush.bf16.msra.mxu0 %v3121
      %3173 = vmatpush.bf16.msra.mxu0 %v3118
      %3174 = vmatmul.bf16.gmra.mxu0 %v2625
      %v3175 = vpop.f32.mrf.mxu0
      %v3176 = vadd.f32 0.0, %v3175
      %v3177 = vpop.f32.mrf.mxu0
      %v3178 = vadd.f32 0.0, %v3177
      %3179 = vmatmul.bf16.gmra.mxu0 %v2626
      %v3180 = vpop.f32.mrf.mxu0
      %v3181 = vadd.f32 0.0, %v3180
      %v3182 = vpop.f32.mrf.mxu0
      %v3183 = vadd.f32 0.0, %v3182
      %3184 = vmatmul.bf16.gmra.mxu0 %v2627
      %v3185 = vpop.f32.mrf.mxu0
      %v3186 = vadd.f32 0.0, %v3185
      %v3187 = vpop.f32.mrf.mxu0
      %v3188 = vadd.f32 0.0, %v3187
      %3189 = vmatmul.bf16.gmra.mxu0 %v2628
      %v3190 = vpop.f32.mrf.mxu0
      %v3191 = vadd.f32 0.0, %v3190
      %v3192 = vpop.f32.mrf.mxu0
      %v3193 = vadd.f32 0.0, %v3192
      %3194 = vdwg.mxu0
      %3195 = vmatpush.bf16.msra.mxu0 %v3140
      %3196 = vmatpush.bf16.msra.mxu0 %v3137
      %3197 = vmatpush.bf16.msra.mxu0 %v3134
      %3198 = vmatpush.bf16.msra.mxu0 %v3131
      %3199 = vmatpush.bf16.msra.mxu0 %v3128
      %3200 = vmatpush.bf16.msra.mxu0 %v3125
      %3201 = vmatpush.bf16.msra.mxu0 %v3122
      %3202 = vmatpush.bf16.msra.mxu0 %v3119
      %3203 = vmatmul.bf16.gmra.mxu0 %v2625
      %v3204 = vpop.f32.mrf.mxu0
      %v3205 = vadd.f32 0.0, %v3204
      %v3206 = vpop.f32.mrf.mxu0
      %v3207 = vadd.f32 0.0, %v3206
      %3208 = vmatmul.bf16.gmra.mxu0 %v2626
      %v3209 = vpop.f32.mrf.mxu0
      %v3210 = vadd.f32 0.0, %v3209
      %v3211 = vpop.f32.mrf.mxu0
      %v3212 = vadd.f32 0.0, %v3211
      %3213 = vmatmul.bf16.gmra.mxu0 %v2627
      %v3214 = vpop.f32.mrf.mxu0
      %v3215 = vadd.f32 0.0, %v3214
      %v3216 = vpop.f32.mrf.mxu0
      %v3217 = vadd.f32 0.0, %v3216
      %3218 = vmatmul.bf16.gmra.mxu0 %v2628
      %v3219 = vpop.f32.mrf.mxu0
      %v3220 = vadd.f32 0.0, %v3219
      %v3221 = vpop.f32.mrf.mxu0
      %v3222 = vadd.f32 0.0, %v3221
      %3223 = vdwg.mxu0
      %3224 = vmatpush.bf16.msra.mxu0 %v3141
      %3225 = vmatpush.bf16.msra.mxu0 %v3138
      %3226 = vmatpush.bf16.msra.mxu0 %v3135
      %3227 = vmatpush.bf16.msra.mxu0 %v3132
      %3228 = vmatpush.bf16.msra.mxu0 %v3129
      %3229 = vmatpush.bf16.msra.mxu0 %v3126
      %3230 = vmatpush.bf16.msra.mxu0 %v3123
      %3231 = vmatpush.bf16.msra.mxu0 %v3120
      %3232 = vmatmul.bf16.gmra.mxu0 %v2625
      %v3233 = vpop.f32.mrf.mxu0
      %v3234 = vadd.f32 0.0, %v3233
      %v3235 = vpop.f32.mrf.mxu0
      %v3236 = vadd.f32 0.0, %v3235
      %3237 = vmatmul.bf16.gmra.mxu0 %v2626
      %v3238 = vpop.f32.mrf.mxu0
      %v3239 = vadd.f32 0.0, %v3238
      %v3240 = vpop.f32.mrf.mxu0
      %v3241 = vadd.f32 0.0, %v3240
      %3242 = vmatmul.bf16.gmra.mxu0 %v2627
      %v3243 = vpop.f32.mrf.mxu0
      %v3244 = vadd.f32 0.0, %v3243
      %v3245 = vpop.f32.mrf.mxu0
      %v3246 = vadd.f32 0.0, %v3245
      %3247 = vmatmul.bf16.gmra.mxu0 %v2628
      %v3248 = vpop.f32.mrf.mxu0
      %v3249 = vadd.f32 0.0, %v3248
      %v3250 = vpop.f32.mrf.mxu0
      %v3251 = vadd.f32 0.0, %v3250
      %3252 = vdwg.mxu0
      %v3254 = vsel %vm593, %v3193, 0
      %3256 = vmatpush.msra.mxu0 0.0
      %3257 = vmatpush.msra.mxu0 0.0
      %3258 = vmatpush.msra.mxu0 0.0
      %3259 = vmatpush.msra.mxu0 0.0
      %3260 = vmatpush.msra.mxu0 0.0
      %3261 = vmatpush.msra.mxu0 0.0
      %3262 = vmatpush.msra.mxu0 0.0
      %3263 = vmatpush.msra.mxu0 0.0
      %3264 = vmatpush.msra.mxu0 %v3254
      %3265 = vmatpush.msra.mxu0 %v3191
      %3266 = vmatpush.msra.mxu0 %v3188
      %3267 = vmatpush.msra.mxu0 %v3186
      %3268 = vmatpush.msra.mxu0 %v3183
      %3269 = vmatpush.msra.mxu0 %v3181
      %3270 = vmatpush.msra.mxu0 %v3178
      %3271 = vmatpush.msra.mxu0 %v3176
      %3272 = vmatmul.f32.gmra.mxu0 %v570
      %v3273 = vpop.f32.mrf.mxu0
      %v3274 = vadd.f32 %v3205, %v3273
      %3275 = vmatmul.f32.gmra.mxu0 %v573
      %v3276 = vpop.f32.mrf.mxu0
      %v3277 = vadd.f32 %v3207, %v3276
      %3278 = vmatmul.f32.gmra.mxu0 %v576
      %v3279 = vpop.f32.mrf.mxu0
      %v3280 = vadd.f32 %v3210, %v3279
      %3281 = vmatmul.f32.gmra.mxu0 %v579
      %v3282 = vpop.f32.mrf.mxu0
      %v3283 = vadd.f32 %v3212, %v3282
      %3284 = vmatmul.f32.gmra.mxu0 %v582
      %v3285 = vpop.f32.mrf.mxu0
      %v3286 = vadd.f32 %v3215, %v3285
      %3287 = vmatmul.f32.gmra.mxu0 %v585
      %v3288 = vpop.f32.mrf.mxu0
      %v3289 = vadd.f32 %v3217, %v3288
      %3290 = vmatmul.f32.gmra.mxu0 %v588
      %v3291 = vpop.f32.mrf.mxu0
      %v3292 = vadd.f32 %v3220, %v3291
      %3293 = vmatmul.f32.gmra.mxu0 %v591
      %v3294 = vpop.f32.mrf.mxu0
      %v3295 = vadd.f32 %v3222, %v3294
      %3296 = vdwg.mxu0
      %v3298 = vsel %vm593, %v3251, 0
      %3300 = vmatpush.msra.mxu0 0.0
      %3301 = vmatpush.msra.mxu0 0.0
      %3302 = vmatpush.msra.mxu0 0.0
      %3303 = vmatpush.msra.mxu0 0.0
      %3304 = vmatpush.msra.mxu0 0.0
      %3305 = vmatpush.msra.mxu0 0.0
      %3306 = vmatpush.msra.mxu0 0.0
      %3307 = vmatpush.msra.mxu0 0.0
      %3308 = vmatpush.msra.mxu0 %v3298
      %3309 = vmatpush.msra.mxu0 %v3249
      %3310 = vmatpush.msra.mxu0 %v3246
      %3311 = vmatpush.msra.mxu0 %v3244
      %3312 = vmatpush.msra.mxu0 %v3241
      %3313 = vmatpush.msra.mxu0 %v3239
      %3314 = vmatpush.msra.mxu0 %v3236
      %3315 = vmatpush.msra.mxu0 %v3234
      %3316 = vmatmul.f32.gmra.mxu0 %v639
      %v3317 = vpop.f32.mrf.mxu0
      %v3318 = vadd.f32 0.0, %v3317
      %3319 = vmatmul.f32.gmra.mxu0 %v642
      %v3320 = vpop.f32.mrf.mxu0
      %v3321 = vadd.f32 0.0, %v3320
      %3322 = vmatmul.f32.gmra.mxu0 %v645
      %v3323 = vpop.f32.mrf.mxu0
      %v3324 = vadd.f32 0.0, %v3323
      %3325 = vmatmul.f32.gmra.mxu0 %v648
      %v3326 = vpop.f32.mrf.mxu0
      %v3327 = vadd.f32 0.0, %v3326
      %3328 = vmatmul.f32.gmra.mxu0 %v651
      %v3329 = vpop.f32.mrf.mxu0
      %v3330 = vadd.f32 0.0, %v3329
      %3331 = vmatmul.f32.gmra.mxu0 %v654
      %v3332 = vpop.f32.mrf.mxu0
      %v3333 = vadd.f32 0.0, %v3332
      %3334 = vmatmul.f32.gmra.mxu0 %v657
      %v3335 = vpop.f32.mrf.mxu0
      %v3336 = vadd.f32 0.0, %v3335
      %3337 = vmatmul.f32.gmra.mxu0 %v660
      %v3338 = vpop.f32.mrf.mxu0
      %v3339 = vadd.f32 0.0, %v3338
      %3340 = vdwg.mxu0
      %v3341 = vadd.f32 %v3274, %v3318
      %v3342 = vadd.f32 %v3277, %v3321
      %v3343 = vadd.f32 %v3280, %v3324
      %v3344 = vadd.f32 %v3283, %v3327
      %v3345 = vadd.f32 %v3286, %v3330
      %v3346 = vadd.f32 %v3289, %v3333
      %v3347 = vadd.f32 %v3292, %v3336
      %v3348 = vadd.f32 %v3295, %v3339
      %v3349 = vld [vmem:[%s2 + $0x207] sm:$0x1]
      %v3350 = vperm.slane %v3349, 0
      %v3351 = vadd.f32 %v3341, %v3350
      %v3352 = vadd.f32 %v3342, %v3350
      %v3353 = vadd.f32 %v3343, %v3350
      %v3354 = vadd.f32 %v3344, %v3350
      %v3355 = vadd.f32 %v3345, %v3350
      %v3356 = vadd.f32 %v3346, %v3350
      %v3357 = vadd.f32 %v3347, %v3350
      %v3358 = vadd.f32 %v3348, %v3350
      %v3359 = vmul.f32 %v3351, 0.5
      %v3360 = vmul.f32 %v3352, 0.5
      %v3361 = vmul.f32 %v3353, 0.5
      %v3362 = vmul.f32 %v3354, 0.5
      %v3363 = vmul.f32 %v3355, 0.5
      %v3364 = vmul.f32 %v3356, 0.5
      %v3365 = vmul.f32 %v3357, 0.5
      %v3366 = vmul.f32 %v3358, 0.5
      %v3367 = vtanh.pop %v3359
      %v3368 = vtanh.pop %v3360
      %v3369 = vtanh.pop %v3361
      %v3370 = vtanh.pop %v3362
      %v3371 = vtanh.pop %v3363
      %v3372 = vtanh.pop %v3364
      %v3373 = vtanh.pop %v3365
      %v3374 = vtanh.pop %v3366
      %v3375 = vadd.f32 %v3367, 1.0
      %v3376 = vadd.f32 %v3368, 1.0
      %v3377 = vadd.f32 %v3369, 1.0
      %v3378 = vadd.f32 %v3370, 1.0
      %v3379 = vadd.f32 %v3371, 1.0
      %v3380 = vadd.f32 %v3372, 1.0
      %v3381 = vadd.f32 %v3373, 1.0
      %v3382 = vadd.f32 %v3374, 1.0
      %v3383 = vmul.f32 %v3375, 0.5
      %v3384 = vmul.f32 %v3376, 0.5
      %v3385 = vmul.f32 %v3377, 0.5
      %v3386 = vmul.f32 %v3378, 0.5
      %v3387 = vmul.f32 %v3379, 0.5
      %v3388 = vmul.f32 %v3380, 0.5
      %v3389 = vmul.f32 %v3381, 0.5
      %v3390 = vmul.f32 %v3382, 0.5
      %v3391 = vmul.f32 %v3383, %v2998
      %v3392 = vmul.f32 %v3384, %v2999
      %v3393 = vmul.f32 %v3385, %v3000
      %v3394 = vmul.f32 %v3386, %v3001
      %v3395 = vmul.f32 %v3387, %v3002
      %v3396 = vmul.f32 %v3388, %v3003
      %v3397 = vmul.f32 %v3389, %v3004
      %v3398 = vmul.f32 %v3390, %v3005
      %v3399 = vld [vmem:[%s2 + $0x80] sm:$0xff]
      %v3400 = vld [vmem:[%s2 + $0x88] sm:$0xff]
      %v3401 = vld [vmem:[%s2 + $0x90] sm:$0xff]
      %v3402 = vld [vmem:[%s2 + $0x98] sm:$0xff]
      %v3403 = vld [vmem:[%s2 + $0xa0] sm:$0xff]
      %v3404 = vld [vmem:[%s2 + $0xa8] sm:$0xff]
      %v3405 = vld [vmem:[%s2 + $0xb0] sm:$0xff]
      %v3406 = vld [vmem:[%s2 + $0xb8] sm:$0xff]
      %v3407 = vld [vmem:[%s2 + $0xc0] sm:$0xff]
      %v3408 = vld [vmem:[%s2 + $0xc8] sm:$0xff]
      %v3409 = vld [vmem:[%s2 + $0xd0] sm:$0xff]
      %v3410 = vld [vmem:[%s2 + $0xd8] sm:$0xff]
      %v3411 = vld [vmem:[%s2 + $0xe0] sm:$0xff]
      %v3412 = vld [vmem:[%s2 + $0xe8] sm:$0xff]
      %v3413 = vld [vmem:[%s2 + $0xf0] sm:$0xff]
      %v3414 = vld [vmem:[%s2 + $0xf8] sm:$0xff]
      %3415 = vmatpush.msra.mxu0 %v3414
      %3416 = vmatpush.msra.mxu0 %v3413
      %3417 = vmatpush.msra.mxu0 %v3412
      %3418 = vmatpush.msra.mxu0 %v3411
      %3419 = vmatpush.msra.mxu0 %v3410
      %3420 = vmatpush.msra.mxu0 %v3409
      %3421 = vmatpush.msra.mxu0 %v3408
      %3422 = vmatpush.msra.mxu0 %v3407
      %3423 = vmatpush.msra.mxu0 %v3406
      %3424 = vmatpush.msra.mxu0 %v3405
      %3425 = vmatpush.msra.mxu0 %v3404
      %3426 = vmatpush.msra.mxu0 %v3403
      %3427 = vmatpush.msra.mxu0 %v3402
      %3428 = vmatpush.msra.mxu0 %v3401
      %3429 = vmatpush.msra.mxu0 %v3400
      %3430 = vmatpush.msra.mxu0 %v3399
      %3431 = vmatmul.f32.gmra.mxu0 %v3391
      %v3432 = vpop.f32.mrf.mxu0
      %v3433 = vadd.f32 0.0, %v3432
      %3434 = vmatmul.f32.gmra.mxu0 %v3392
      %v3435 = vpop.f32.mrf.mxu0
      %v3436 = vadd.f32 0.0, %v3435
      %3437 = vmatmul.f32.gmra.mxu0 %v3393
      %v3438 = vpop.f32.mrf.mxu0
      %v3439 = vadd.f32 0.0, %v3438
      %3440 = vmatmul.f32.gmra.mxu0 %v3394
      %v3441 = vpop.f32.mrf.mxu0
      %v3442 = vadd.f32 0.0, %v3441
      %3443 = vmatmul.f32.gmra.mxu0 %v3395
      %v3444 = vpop.f32.mrf.mxu0
      %v3445 = vadd.f32 0.0, %v3444
      %3446 = vmatmul.f32.gmra.mxu0 %v3396
      %v3447 = vpop.f32.mrf.mxu0
      %v3448 = vadd.f32 0.0, %v3447
      %3449 = vmatmul.f32.gmra.mxu0 %v3397
      %v3450 = vpop.f32.mrf.mxu0
      %v3451 = vadd.f32 0.0, %v3450
      %3452 = vmatmul.f32.gmra.mxu0 %v3398
      %v3453 = vpop.f32.mrf.mxu0
      %v3454 = vadd.f32 0.0, %v3453
      %3455 = vdwg.mxu0
      %v3456 = vld [vmem:[%s3 + $0x80] sm:$0xff]
      %v3457 = vld [vmem:[%s3 + $0x88] sm:$0xff]
      %v3458 = vld [vmem:[%s3 + $0x90] sm:$0xff]
      %v3459 = vld [vmem:[%s3 + $0x98] sm:$0xff]
      %v3460 = vld [vmem:[%s3 + $0xa0] sm:$0xff]
      %v3461 = vld [vmem:[%s3 + $0xa8] sm:$0xff]
      %v3462 = vld [vmem:[%s3 + $0xb0] sm:$0xff]
      %v3463 = vld [vmem:[%s3 + $0xb8] sm:$0xf]
      %3464 = vmatpush.xpose.msra.mxu0 0.0
      %3465 = vmatpush.xpose.msra.mxu0 0.0
      %3466 = vmatpush.xpose.msra.mxu0 0.0
      %3467 = vmatpush.xpose.msra.mxu0 0.0
      %3468 = vmatpush.xpose.msra.mxu0 0.0
      %3469 = vmatpush.xpose.msra.mxu0 0.0
      %3470 = vmatpush.xpose.msra.mxu0 0.0
      %3471 = vmatpush.xpose.msra.mxu0 0.0
      %3472 = vmatpush.xpose.msra.mxu0 %v3398
      %3473 = vmatpush.xpose.msra.mxu0 %v3397
      %3474 = vmatpush.xpose.msra.mxu0 %v3396
      %3475 = vmatpush.xpose.msra.mxu0 %v3395
      %3476 = vmatpush.xpose.msra.mxu0 %v3394
      %3477 = vmatpush.xpose.msra.mxu0 %v3393
      %3478 = vmatpush.xpose.msra.mxu0 %v3392
      %3479 = vmatpush.xpose.msra.mxu0 %v3391
      %3480 = vmatmul.f32.gmra.mxu0 %v3433
      %v3481 = vpop.f32.mrf.mxu0
      %v3482 = vadd.f32 %v3456, %v3481
      %3483 = vmatmul.f32.gmra.mxu0 %v3436
      %v3484 = vpop.f32.mrf.mxu0
      %v3485 = vadd.f32 %v3457, %v3484
      %3486 = vmatmul.f32.gmra.mxu0 %v3439
      %v3487 = vpop.f32.mrf.mxu0
      %v3488 = vadd.f32 %v3458, %v3487
      %3489 = vmatmul.f32.gmra.mxu0 %v3442
      %v3490 = vpop.f32.mrf.mxu0
      %v3491 = vadd.f32 %v3459, %v3490
      %3492 = vmatmul.f32.gmra.mxu0 %v3445
      %v3493 = vpop.f32.mrf.mxu0
      %v3494 = vadd.f32 %v3460, %v3493
      %3495 = vmatmul.f32.gmra.mxu0 %v3448
      %v3496 = vpop.f32.mrf.mxu0
      %v3497 = vadd.f32 %v3461, %v3496
      %3498 = vmatmul.f32.gmra.mxu0 %v3451
      %v3499 = vpop.f32.mrf.mxu0
      %v3500 = vadd.f32 %v3462, %v3499
      %3501 = vmatmul.f32.gmra.mxu0 %v3454
      %v3502 = vpop.f32.mrf.mxu0
      %v3503 = vadd.f32 %v3463, %v3502
      %3504 = vdwg.mxu0
      %v3505 = vmul.f32 %v3482, 0.5
      %v3506 = vmul.f32 %v3485, 0.5
      %v3507 = vmul.f32 %v3488, 0.5
      %v3508 = vmul.f32 %v3491, 0.5
      %v3509 = vmul.f32 %v3494, 0.5
      %v3510 = vmul.f32 %v3497, 0.5
      %v3511 = vmul.f32 %v3500, 0.5
      %v3512 = vmul.f32 %v3503, 0.5
      %v3513 = vtanh.pop %v3505
      %v3514 = vtanh.pop %v3506
      %v3515 = vtanh.pop %v3507
      %v3516 = vtanh.pop %v3508
      %v3517 = vtanh.pop %v3509
      %v3518 = vtanh.pop %v3510
      %v3519 = vtanh.pop %v3511
      %v3520 = vtanh.pop %v3512
      %v3521 = vadd.f32 %v3513, 1.0
      %v3522 = vadd.f32 %v3514, 1.0
      %v3523 = vadd.f32 %v3515, 1.0
      %v3524 = vadd.f32 %v3516, 1.0
      %v3525 = vadd.f32 %v3517, 1.0
      %v3526 = vadd.f32 %v3518, 1.0
      %v3527 = vadd.f32 %v3519, 1.0
      %v3528 = vadd.f32 %v3520, 1.0
      %v3529 = vmul.f32 %v3521, 0.5
      %v3530 = vmul.f32 %v3522, 0.5
      %v3531 = vmul.f32 %v3523, 0.5
      %v3532 = vmul.f32 %v3524, 0.5
      %v3533 = vmul.f32 %v3525, 0.5
      %v3534 = vmul.f32 %v3526, 0.5
      %v3535 = vmul.f32 %v3527, 0.5
      %v3536 = vmul.f32 %v3528, 0.5
      %v3537 = vld [vmem:[%s3 + $0xc0] sm:$0xff]
      %v3538 = vld [vmem:[%s3 + $0xc8] sm:$0xff]
      %v3539 = vld [vmem:[%s3 + $0xd0] sm:$0xff]
      %v3540 = vld [vmem:[%s3 + $0xd8] sm:$0xff]
      %v3541 = vld [vmem:[%s3 + $0xe0] sm:$0xff]
      %v3542 = vld [vmem:[%s3 + $0xe8] sm:$0xff]
      %v3543 = vld [vmem:[%s3 + $0xf0] sm:$0xff]
      %v3544 = vld [vmem:[%s3 + $0xf8] sm:$0xf]
      %v3546 = vsel %vm568, %v3537, 0
      %v3549 = vsel %vm568, %v3538, 0
      %v3552 = vsel %vm568, %v3539, 0
      %v3555 = vsel %vm568, %v3540, 0
      %v3558 = vsel %vm568, %v3541, 0
      %v3561 = vsel %vm568, %v3542, 0
      %v3564 = vsel %vm568, %v3543, 0
      %v3567 = vsel %vm568, %v3544, 0
      %v3570 = vsel %vm593, %v3536, 0
      %3572 = vmatpush.msra.mxu0 0.0
      %3573 = vmatpush.msra.mxu0 0.0
      %3574 = vmatpush.msra.mxu0 0.0
      %3575 = vmatpush.msra.mxu0 0.0
      %3576 = vmatpush.msra.mxu0 0.0
      %3577 = vmatpush.msra.mxu0 0.0
      %3578 = vmatpush.msra.mxu0 0.0
      %3579 = vmatpush.msra.mxu0 0.0
      %3580 = vmatpush.msra.mxu0 %v3570
      %3581 = vmatpush.msra.mxu0 %v3535
      %3582 = vmatpush.msra.mxu0 %v3534
      %3583 = vmatpush.msra.mxu0 %v3533
      %3584 = vmatpush.msra.mxu0 %v3532
      %3585 = vmatpush.msra.mxu0 %v3531
      %3586 = vmatpush.msra.mxu0 %v3530
      %3587 = vmatpush.msra.mxu0 %v3529
      %3588 = vmatmul.f32.gmra.mxu0 %v3546
      %v3589 = vpop.f32.mrf.mxu0
      %v3590 = vadd.f32 0.0, %v3589
      %3591 = vmatmul.f32.gmra.mxu0 %v3549
      %v3592 = vpop.f32.mrf.mxu0
      %v3593 = vadd.f32 0.0, %v3592
      %3594 = vmatmul.f32.gmra.mxu0 %v3552
      %v3595 = vpop.f32.mrf.mxu0
      %v3596 = vadd.f32 0.0, %v3595
      %3597 = vmatmul.f32.gmra.mxu0 %v3555
      %v3598 = vpop.f32.mrf.mxu0
      %v3599 = vadd.f32 0.0, %v3598
      %3600 = vmatmul.f32.gmra.mxu0 %v3558
      %v3601 = vpop.f32.mrf.mxu0
      %v3602 = vadd.f32 0.0, %v3601
      %3603 = vmatmul.f32.gmra.mxu0 %v3561
      %v3604 = vpop.f32.mrf.mxu0
      %v3605 = vadd.f32 0.0, %v3604
      %3606 = vmatmul.f32.gmra.mxu0 %v3564
      %v3607 = vpop.f32.mrf.mxu0
      %v3608 = vadd.f32 0.0, %v3607
      %3609 = vmatmul.f32.gmra.mxu0 %v3567
      %v3610 = vpop.f32.mrf.mxu0
      %v3611 = vadd.f32 0.0, %v3610
      %3612 = vdwg.mxu0
      %v3613 = vmul.f32 %v3590, 0.999995
      %v3614 = vmul.f32 %v3593, 0.999995
      %v3615 = vmul.f32 %v3596, 0.999995
      %v3616 = vmul.f32 %v3599, 0.999995
      %v3617 = vmul.f32 %v3602, 0.999995
      %v3618 = vmul.f32 %v3605, 0.999995
      %v3619 = vmul.f32 %v3608, 0.999995
      %v3620 = vmul.f32 %v3611, 0.999995
      %v3621 = vsel %vm568, %v3613, -inf
      %3622 = vmax.xlane.f32.xlu0 %v3621
      %v3623 = vpop.xlane.xlu0 %3622
      %v3624 = vsel %vm568, %v3614, -inf
      %3625 = vmax.xlane.f32.xlu0 %v3624
      %v3626 = vpop.xlane.xlu0 %3625
      %v3627 = vsel %vm568, %v3615, -inf
      %3628 = vmax.xlane.f32.xlu0 %v3627
      %v3629 = vpop.xlane.xlu0 %3628
      %v3630 = vsel %vm568, %v3616, -inf
      %3631 = vmax.xlane.f32.xlu0 %v3630
      %v3632 = vpop.xlane.xlu0 %3631
      %v3633 = vsel %vm568, %v3617, -inf
      %3634 = vmax.xlane.f32.xlu0 %v3633
      %v3635 = vpop.xlane.xlu0 %3634
      %v3636 = vsel %vm568, %v3618, -inf
      %3637 = vmax.xlane.f32.xlu0 %v3636
      %v3638 = vpop.xlane.xlu0 %3637
      %v3639 = vsel %vm568, %v3619, -inf
      %3640 = vmax.xlane.f32.xlu0 %v3639
      %v3641 = vpop.xlane.xlu0 %3640
      %v3642 = vsel %vm1765, %v3620, -inf
      %3643 = vmax.xlane.f32.xlu0 %v3642
      %v3644 = vpop.xlane.xlu0 %3643
      %v3645 = vsub.f32 %v3613, %v3623
      %v3646 = vsub.f32 %v3614, %v3626
      %v3647 = vsub.f32 %v3615, %v3629
      %v3648 = vsub.f32 %v3616, %v3632
      %v3649 = vsub.f32 %v3617, %v3635
      %v3650 = vsub.f32 %v3618, %v3638
      %v3651 = vsub.f32 %v3619, %v3641
      %v3652 = vsub.f32 %v3620, %v3644
      %v3653 = vmul.f32 %v3645, 1.442695
      %v3654 = vpow.pop %v3653
      %v3655 = vmul.f32 %v3646, 1.442695
      %v3656 = vpow.pop %v3655
      %v3657 = vmul.f32 %v3647, 1.442695
      %v3658 = vpow.pop %v3657
      %v3659 = vmul.f32 %v3648, 1.442695
      %v3660 = vpow.pop %v3659
      %v3661 = vmul.f32 %v3649, 1.442695
      %v3662 = vpow.pop %v3661
      %v3663 = vmul.f32 %v3650, 1.442695
      %v3664 = vpow.pop %v3663
      %v3665 = vmul.f32 %v3651, 1.442695
      %v3666 = vpow.pop %v3665
      %v3667 = vmul.f32 %v3652, 1.442695
      %v3668 = vpow.pop %v3667
      %v3669 = vsel %vm568, %v3654, 0.0
      %3670 = vadd.xlane.f32.xlu0 %v3669
      %v3671 = vpop.xlane.xlu0 %3670
      %v3672 = vsel %vm568, %v3656, 0.0
      %3673 = vadd.xlane.f32.xlu0 %v3672
      %v3674 = vpop.xlane.xlu0 %3673
      %v3675 = vsel %vm568, %v3658, 0.0
      %3676 = vadd.xlane.f32.xlu0 %v3675
      %v3677 = vpop.xlane.xlu0 %3676
      %v3678 = vsel %vm568, %v3660, 0.0
      %3679 = vadd.xlane.f32.xlu0 %v3678
      %v3680 = vpop.xlane.xlu0 %3679
      %v3681 = vsel %vm568, %v3662, 0.0
      %3682 = vadd.xlane.f32.xlu0 %v3681
      %v3683 = vpop.xlane.xlu0 %3682
      %v3684 = vsel %vm568, %v3664, 0.0
      %3685 = vadd.xlane.f32.xlu0 %v3684
      %v3686 = vpop.xlane.xlu0 %3685
      %v3687 = vsel %vm568, %v3666, 0.0
      %3688 = vadd.xlane.f32.xlu0 %v3687
      %v3689 = vpop.xlane.xlu0 %3688
      %v3690 = vsel %vm1765, %v3668, 0.0
      %3691 = vadd.xlane.f32.xlu0 %v3690
      %v3692 = vpop.xlane.xlu0 %3691
      %v3693 = vrcp.pop %v3671
      %v3694 = vmul.f32 %v3671, %v3693
      %v3695 = vsub.f32 1.0, %v3694
      %v3696 = vmul.f32 %v3693, %v3695
      %v3697 = vadd.f32 %v3693, %v3696
      %vm3698 = vweird.f32 %v3671
      %vm3699 = vweird.f32 %v3693
      %vm3700 = vmor %vm3698, %vm3699
      %v3701 = vsel %vm3700, %v3693, %v3697
      %v3702 = vand.u32 2147483647, %v3671
      %vm3703 = vcmp.eq.f32.partialorder %v3702, 8.507059e+37
      %v3704 = vand.u32 %v3671, 2147483648
      %v3705 = vor.u32 1.1754944e-38, %v3704
      %v3706 = vsel %vm3703, %v3705, %v3701
      %v3707 = vmul.f32 %v3654, %v3706
      %v3708 = vrcp.pop %v3674
      %v3709 = vmul.f32 %v3674, %v3708
      %v3710 = vsub.f32 1.0, %v3709
      %v3711 = vmul.f32 %v3708, %v3710
      %v3712 = vadd.f32 %v3708, %v3711
      %vm3713 = vweird.f32 %v3674
      %vm3714 = vweird.f32 %v3708
      %vm3715 = vmor %vm3713, %vm3714
      %v3716 = vsel %vm3715, %v3708, %v3712
      %v3717 = vand.u32 2147483647, %v3674
      %vm3718 = vcmp.eq.f32.partialorder %v3717, 8.507059e+37
      %v3719 = vand.u32 %v3674, 2147483648
      %v3720 = vor.u32 1.1754944e-38, %v3719
      %v3721 = vsel %vm3718, %v3720, %v3716
      %v3722 = vmul.f32 %v3656, %v3721
      %v3723 = vrcp.pop %v3677
      %v3724 = vmul.f32 %v3677, %v3723
      %v3725 = vsub.f32 1.0, %v3724
      %v3726 = vmul.f32 %v3723, %v3725
      %v3727 = vadd.f32 %v3723, %v3726
      %vm3728 = vweird.f32 %v3677
      %vm3729 = vweird.f32 %v3723
      %vm3730 = vmor %vm3728, %vm3729
      %v3731 = vsel %vm3730, %v3723, %v3727
      %v3732 = vand.u32 2147483647, %v3677
      %vm3733 = vcmp.eq.f32.partialorder %v3732, 8.507059e+37
      %v3734 = vand.u32 %v3677, 2147483648
      %v3735 = vor.u32 1.1754944e-38, %v3734
      %v3736 = vsel %vm3733, %v3735, %v3731
      %v3737 = vmul.f32 %v3658, %v3736
      %v3738 = vrcp.pop %v3680
      %v3739 = vmul.f32 %v3680, %v3738
      %v3740 = vsub.f32 1.0, %v3739
      %v3741 = vmul.f32 %v3738, %v3740
      %v3742 = vadd.f32 %v3738, %v3741
      %vm3743 = vweird.f32 %v3680
      %vm3744 = vweird.f32 %v3738
      %vm3745 = vmor %vm3743, %vm3744
      %v3746 = vsel %vm3745, %v3738, %v3742
      %v3747 = vand.u32 2147483647, %v3680
      %vm3748 = vcmp.eq.f32.partialorder %v3747, 8.507059e+37
      %v3749 = vand.u32 %v3680, 2147483648
      %v3750 = vor.u32 1.1754944e-38, %v3749
      %v3751 = vsel %vm3748, %v3750, %v3746
      %v3752 = vmul.f32 %v3660, %v3751
      %v3753 = vrcp.pop %v3683
      %v3754 = vmul.f32 %v3683, %v3753
      %v3755 = vsub.f32 1.0, %v3754
      %v3756 = vmul.f32 %v3753, %v3755
      %v3757 = vadd.f32 %v3753, %v3756
      %vm3758 = vweird.f32 %v3683
      %vm3759 = vweird.f32 %v3753
      %vm3760 = vmor %vm3758, %vm3759
      %v3761 = vsel %vm3760, %v3753, %v3757
      %v3762 = vand.u32 2147483647, %v3683
      %vm3763 = vcmp.eq.f32.partialorder %v3762, 8.507059e+37
      %v3764 = vand.u32 %v3683, 2147483648
      %v3765 = vor.u32 1.1754944e-38, %v3764
      %v3766 = vsel %vm3763, %v3765, %v3761
      %v3767 = vmul.f32 %v3662, %v3766
      %v3768 = vrcp.pop %v3686
      %v3769 = vmul.f32 %v3686, %v3768
      %v3770 = vsub.f32 1.0, %v3769
      %v3771 = vmul.f32 %v3768, %v3770
      %v3772 = vadd.f32 %v3768, %v3771
      %vm3773 = vweird.f32 %v3686
      %vm3774 = vweird.f32 %v3768
      %vm3775 = vmor %vm3773, %vm3774
      %v3776 = vsel %vm3775, %v3768, %v3772
      %v3777 = vand.u32 2147483647, %v3686
      %vm3778 = vcmp.eq.f32.partialorder %v3777, 8.507059e+37
      %v3779 = vand.u32 %v3686, 2147483648
      %v3780 = vor.u32 1.1754944e-38, %v3779
      %v3781 = vsel %vm3778, %v3780, %v3776
      %v3782 = vmul.f32 %v3664, %v3781
      %v3783 = vrcp.pop %v3689
      %v3784 = vmul.f32 %v3689, %v3783
      %v3785 = vsub.f32 1.0, %v3784
      %v3786 = vmul.f32 %v3783, %v3785
      %v3787 = vadd.f32 %v3783, %v3786
      %vm3788 = vweird.f32 %v3689
      %vm3789 = vweird.f32 %v3783
      %vm3790 = vmor %vm3788, %vm3789
      %v3791 = vsel %vm3790, %v3783, %v3787
      %v3792 = vand.u32 2147483647, %v3689
      %vm3793 = vcmp.eq.f32.partialorder %v3792, 8.507059e+37
      %v3794 = vand.u32 %v3689, 2147483648
      %v3795 = vor.u32 1.1754944e-38, %v3794
      %v3796 = vsel %vm3793, %v3795, %v3791
      %v3797 = vmul.f32 %v3666, %v3796
      %v3798 = vrcp.pop %v3692
      %v3799 = vmul.f32 %v3692, %v3798
      %v3800 = vsub.f32 1.0, %v3799
      %v3801 = vmul.f32 %v3798, %v3800
      %v3802 = vadd.f32 %v3798, %v3801
      %vm3803 = vweird.f32 %v3692
      %vm3804 = vweird.f32 %v3798
      %vm3805 = vmor %vm3803, %vm3804
      %v3806 = vsel %vm3805, %v3798, %v3802
      %v3807 = vand.u32 2147483647, %v3692
      %vm3808 = vcmp.eq.f32.partialorder %v3807, 8.507059e+37
      %v3809 = vand.u32 %v3692, 2147483648
      %v3810 = vor.u32 1.1754944e-38, %v3809
      %v3811 = vsel %vm3808, %v3810, %v3806
      %v3812 = vmul.f32 %v3668, %v3811
      %v3814 = vsel %vm568, %v3707, 0
      %v3817 = vsel %vm568, %v3722, 0
      %v3820 = vsel %vm568, %v3737, 0
      %v3823 = vsel %vm568, %v3752, 0
      %v3826 = vsel %vm568, %v3767, 0
      %v3829 = vsel %vm568, %v3782, 0
      %v3832 = vsel %vm568, %v3797, 0
      %v3835 = vsel %vm568, %v3812, 0
      %v3838 = vsel %vm593, %v3398, 0
      %3840 = vmatpush.msra.mxu0 0.0
      %3841 = vmatpush.msra.mxu0 0.0
      %3842 = vmatpush.msra.mxu0 0.0
      %3843 = vmatpush.msra.mxu0 0.0
      %3844 = vmatpush.msra.mxu0 0.0
      %3845 = vmatpush.msra.mxu0 0.0
      %3846 = vmatpush.msra.mxu0 0.0
      %3847 = vmatpush.msra.mxu0 0.0
      %3848 = vmatpush.msra.mxu0 %v3838
      %3849 = vmatpush.msra.mxu0 %v3397
      %3850 = vmatpush.msra.mxu0 %v3396
      %3851 = vmatpush.msra.mxu0 %v3395
      %3852 = vmatpush.msra.mxu0 %v3394
      %3853 = vmatpush.msra.mxu0 %v3393
      %3854 = vmatpush.msra.mxu0 %v3392
      %3855 = vmatpush.msra.mxu0 %v3391
      %3856 = vmatmul.f32.gmra.mxu0 %v3814
      %v3857 = vpop.f32.mrf.mxu0
      %v3858 = vadd.f32 0.0, %v3857
      %3859 = vmatmul.f32.gmra.mxu0 %v3817
      %v3860 = vpop.f32.mrf.mxu0
      %v3861 = vadd.f32 0.0, %v3860
      %3862 = vmatmul.f32.gmra.mxu0 %v3820
      %v3863 = vpop.f32.mrf.mxu0
      %v3864 = vadd.f32 0.0, %v3863
      %3865 = vmatmul.f32.gmra.mxu0 %v3823
      %v3866 = vpop.f32.mrf.mxu0
      %v3867 = vadd.f32 0.0, %v3866
      %3868 = vmatmul.f32.gmra.mxu0 %v3826
      %v3869 = vpop.f32.mrf.mxu0
      %v3870 = vadd.f32 0.0, %v3869
      %3871 = vmatmul.f32.gmra.mxu0 %v3829
      %v3872 = vpop.f32.mrf.mxu0
      %v3873 = vadd.f32 0.0, %v3872
      %3874 = vmatmul.f32.gmra.mxu0 %v3832
      %v3875 = vpop.f32.mrf.mxu0
      %v3876 = vadd.f32 0.0, %v3875
      %3877 = vmatmul.f32.gmra.mxu0 %v3835
      %v3878 = vpop.f32.mrf.mxu0
      %v3879 = vadd.f32 0.0, %v3878
      %3880 = vdwg.mxu0
      %vm3881 = vcmp.gt.f32.partialorder %v3858, 0.0
      %vm3882 = vcmp.gt.f32.partialorder %v3861, 0.0
      %vm3883 = vcmp.gt.f32.partialorder %v3864, 0.0
      %vm3884 = vcmp.gt.f32.partialorder %v3867, 0.0
      %vm3885 = vcmp.gt.f32.partialorder %v3870, 0.0
      %vm3886 = vcmp.gt.f32.partialorder %v3873, 0.0
      %vm3887 = vcmp.gt.f32.partialorder %v3876, 0.0
      %vm3888 = vcmp.gt.f32.partialorder %v3879, 0.0
      %v3889 = vmul.f32 %v3858, 0.01
      %v3890 = vmul.f32 %v3861, 0.01
      %v3891 = vmul.f32 %v3864, 0.01
      %v3892 = vmul.f32 %v3867, 0.01
      %v3893 = vmul.f32 %v3870, 0.01
      %v3894 = vmul.f32 %v3873, 0.01
      %v3895 = vmul.f32 %v3876, 0.01
      %v3896 = vmul.f32 %v3879, 0.01
      %v3897 = vsel %vm3881, %v3858, %v3889
      %v3898 = vsel %vm3882, %v3861, %v3890
      %v3899 = vsel %vm3883, %v3864, %v3891
      %v3900 = vsel %vm3884, %v3867, %v3892
      %v3901 = vsel %vm3885, %v3870, %v3893
      %v3902 = vsel %vm3886, %v3873, %v3894
      %v3903 = vsel %vm3887, %v3876, %v3895
      %v3904 = vsel %vm3888, %v3879, %v3896
      %v3905 = vadd.f32 %v3897, %v2229
      %v3906 = vadd.f32 %v3898, %v2231
      %v3907 = vadd.f32 %v3899, %v2234
      %v3908 = vadd.f32 %v3900, %v2236
      %v3909 = vadd.f32 %v3901, %v2239
      %v3910 = vadd.f32 %v3902, %v2241
      %v3911 = vadd.f32 %v3903, %v2244
      %v3912 = vadd.f32 %v3904, %v2246
      %v3913 = vadd.f32 %v3905, %v3906
      %v3914 = vadd.f32 %v3913, %v3907
      %v3915 = vadd.f32 %v3914, %v3908
      %v3916 = vadd.f32 %v3915, %v3909
      %v3917 = vadd.f32 %v3916, %v3910
      %v3918 = vadd.f32 %v3917, %v3911
      %v3919 = vsel %vm593, %v3912, 0.0
      %v3920 = vadd.f32 %v3918, %v3919
      %3921 = vadd.xlane.f32.xlu0 %v3920
      %v3922 = vpop.xlane.xlu0 %3921
      %v3923 = vrot.slane %v3922, 4
      %v3924 = vadd.f32 %v3922, %v3923
      %v3925 = vrot.slane %v3924, 2
      %v3926 = vadd.f32 %v3924, %v3925
      %v3927 = vrot.slane %v3926, 1
      %v3928 = vadd.f32 %v3926, %v3927
      %s3929 = vtos %v3928
      %v3930 = vstv %s3929
      %v3931 = vmul.f32 %v3930, %v2061
      %v3932 = vsub.f32 %v3905, %v3931
      %v3933 = vsub.f32 %v3906, %v3931
      %v3934 = vsub.f32 %v3907, %v3931
      %v3935 = vsub.f32 %v3908, %v3931
      %v3936 = vsub.f32 %v3909, %v3931
      %v3937 = vsub.f32 %v3910, %v3931
      %v3938 = vsub.f32 %v3911, %v3931
      %v3939 = vsub.f32 %v3912, %v3931
      %v3940 = vmul.f32 %v3932, %v3932
      %v3941 = vmul.f32 %v3933, %v3933
      %v3942 = vmul.f32 %v3934, %v3934
      %v3943 = vmul.f32 %v3935, %v3935
      %v3944 = vmul.f32 %v3936, %v3936
      %v3945 = vmul.f32 %v3937, %v3937
      %v3946 = vmul.f32 %v3938, %v3938
      %v3947 = vmul.f32 %v3939, %v3939
      %v3948 = vadd.f32 %v3940, %v3941
      %v3949 = vadd.f32 %v3948, %v3942
      %v3950 = vadd.f32 %v3949, %v3943
      %v3951 = vadd.f32 %v3950, %v3944
      %v3952 = vadd.f32 %v3951, %v3945
      %v3953 = vadd.f32 %v3952, %v3946
      %v3954 = vsel %vm593, %v3947, 0.0
      %v3955 = vadd.f32 %v3953, %v3954
      %3956 = vadd.xlane.f32.xlu0 %v3955
      %v3957 = vpop.xlane.xlu0 %3956
      %v3958 = vrot.slane %v3957, 4
      %v3959 = vadd.f32 %v3957, %v3958
      %v3960 = vrot.slane %v3959, 2
      %v3961 = vadd.f32 %v3959, %v3960
      %v3962 = vrot.slane %v3961, 1
      %v3963 = vadd.f32 %v3961, %v3962
      %s3964 = vtos %v3963
      %v3965 = vstv %s3964
      %v3966 = vmul.f32 %v3965, %v2061
      %v3967 = vadd.f32 %v3966, 1e-05
      %v3968 = vrsqrt.pop %v3967
      %v3969 = vmul.f32 %v3968, %v3967
      %v3970 = vmul.f32 %v3969, %v3968
      %v3971 = vmul.f32 0.5, %v3970
      %v3972 = vsub.f32 1.5, %v3971
      %v3973 = vmul.f32 %v3968, %v3972
      %vm3974 = vweird.f32 %v3967
      %vm3975 = vweird.f32 %v3968
      %vm3976 = vmor %vm3974, %vm3975
      %v3977 = vsel %vm3976, %v3968, %v3973
      %v3978 = vmul.f32 %v3932, %v3977
      %v3979 = vmul.f32 %v3933, %v3977
      %v3980 = vmul.f32 %v3934, %v3977
      %v3981 = vmul.f32 %v3935, %v3977
      %v3982 = vmul.f32 %v3936, %v3977
      %v3983 = vmul.f32 %v3937, %v3977
      %v3984 = vmul.f32 %v3938, %v3977
      %v3985 = vmul.f32 %v3939, %v3977
      %v3986 = vld [vmem:[%s2 + $0x180] sm:$0xff]
      %v3987 = vld [vmem:[%s2 + $0x188] sm:$0xff]
      %v3988 = vld [vmem:[%s2 + $0x190] sm:$0xff]
      %v3989 = vld [vmem:[%s2 + $0x198] sm:$0xff]
      %v3990 = vld [vmem:[%s2 + $0x1a0] sm:$0xff]
      %v3991 = vld [vmem:[%s2 + $0x1a8] sm:$0xff]
      %v3992 = vld [vmem:[%s2 + $0x1b0] sm:$0xff]
      %v3993 = vld [vmem:[%s2 + $0x1b8] sm:$0xf]
      %v3994 = vmul.f32 %v3978, %v3986
      %v3995 = vmul.f32 %v3979, %v3987
      %v3996 = vmul.f32 %v3980, %v3988
      %v3997 = vmul.f32 %v3981, %v3989
      %v3998 = vmul.f32 %v3982, %v3990
      %v3999 = vmul.f32 %v3983, %v3991
      %v4000 = vmul.f32 %v3984, %v3992
      %v4001 = vmul.f32 %v3985, %v3993
      %v4002 = vld [vmem:[%s2 + $0x1c0] sm:$0xff]
      %v4003 = vld [vmem:[%s2 + $0x1c8] sm:$0xff]
      %v4004 = vld [vmem:[%s2 + $0x1d0] sm:$0xff]
      %v4005 = vld [vmem:[%s2 + $0x1d8] sm:$0xff]
      %v4006 = vld [vmem:[%s2 + $0x1e0] sm:$0xff]
      %v4007 = vld [vmem:[%s2 + $0x1e8] sm:$0xff]
      %v4008 = vld [vmem:[%s2 + $0x1f0] sm:$0xff]
      %v4009 = vld [vmem:[%s2 + $0x1f8] sm:$0xf]
      %v4010 = vadd.f32 %v3994, %v4002
      %v4011 = vadd.f32 %v3995, %v4003
      %v4012 = vadd.f32 %v3996, %v4004
      %v4013 = vadd.f32 %v3997, %v4005
      %v4014 = vadd.f32 %v3998, %v4006
      %v4015 = vadd.f32 %v3999, %v4007
      %v4016 = vadd.f32 %v4000, %v4008
      %v4017 = vadd.f32 %v4001, %v4009
      %v4018 = vpack.c.bf16 %v4011, %v4010
      %v4019 = vpack.c.bf16 %v4013, %v4012
      %v4020 = vpack.c.bf16 %v4015, %v4014
      %v4021 = vpack.c.bf16 %v4017, %v4016
      %v4022 = vld [vmem:[%s1 + $0x50] sm:$0xf]
      %v4023 = vld [vmem:[%s1 + $0xa4] sm:$0xf]
      %v4024 = vld [vmem:[%s1 + $0xf8] sm:$0xf]
      %v4025 = vld [vmem:[%s1 + $0x14c] sm:$0xf]
      %v4026 = vld [vmem:[%s1 + $0x1a0] sm:$0xf]
      %v4027 = vld [vmem:[%s1 + $0x1f4] sm:$0xf]
      %v4028 = vld [vmem:[%s1 + $0x248] sm:$0xf]
      %v4029 = vld [vmem:[%s1 + $0x29c] sm:$0xf]
      %v4030 = vld [vmem:[%s1 + $0x2f0] sm:$0xf]
      %v4031 = vld [vmem:[%s1 + $0x344] sm:$0xf]
      %v4032 = vld [vmem:[%s1 + $0x398] sm:$0xf]
      %v4033 = vld [vmem:[%s1 + $0x3ec] sm:$0xf]
      %v4034 = vld [vmem:[%s1 + $0x440] sm:$0xf]
      %v4035 = vld [vmem:[%s1 + $0x494] sm:$0xf]
      %v4036 = vld [vmem:[%s1 + $0x4e8] sm:$0xf]
      %v4037 = vld [vmem:[%s1 + $0x53c] sm:$0xf]
      %v4054 = vunpack.c.l.b16 %v4022
      %v4055 = vunpack.c.l.b16 %v4023
      %v4056 = vunpack.c.l.b16 %v4024
      %v4057 = vunpack.c.l.b16 %v4025
      %v4058 = vunpack.c.l.b16 %v4026
      %v4059 = vunpack.c.l.b16 %v4027
      %v4060 = vunpack.c.l.b16 %v4028
      %v4061 = vunpack.c.l.b16 %v4029
      %v4062 = vunpack.c.l.b16 %v4030
      %v4063 = vunpack.c.l.b16 %v4031
      %v4064 = vunpack.c.l.b16 %v4032
      %v4065 = vunpack.c.l.b16 %v4033
      %v4066 = vunpack.c.l.b16 %v4034
      %v4067 = vunpack.c.l.b16 %v4035
      %v4068 = vunpack.c.l.b16 %v4036
      %v4069 = vunpack.c.l.b16 %v4037
      %v4070 = vpack.c.b16 %v4055, %v4054
      %v4071 = vpack.c.b16 %v4057, %v4056
      %v4072 = vpack.c.b16 %v4059, %v4058
      %v4073 = vpack.c.b16 %v4061, %v4060
      %v4074 = vpack.c.b16 %v4063, %v4062
      %v4075 = vpack.c.b16 %v4065, %v4064
      %v4076 = vpack.c.b16 %v4067, %v4066
      %v4077 = vpack.c.b16 %v4069, %v4068
      %4086 = vmatpush.bf16.msra.mxu0 %v4077
      %4087 = vmatpush.bf16.msra.mxu0 %v4076
      %4088 = vmatpush.bf16.msra.mxu0 %v4075
      %4089 = vmatpush.bf16.msra.mxu0 %v4074
      %4090 = vmatpush.bf16.msra.mxu0 %v4073
      %4091 = vmatpush.bf16.msra.mxu0 %v4072
      %4092 = vmatpush.bf16.msra.mxu0 %v4071
      %4093 = vmatpush.bf16.msra.mxu0 %v4070
      %4094 = vmatmul.bf16.gmra.mxu0 %v4018
      %v4095 = vpop.f32.mrf.mxu0
      %v4096 = vadd.f32 0.0, %v4095
      %v4097 = vpop.f32.mrf.mxu0
      %v4098 = vadd.f32 0.0, %v4097
      %4099 = vmatmul.bf16.gmra.mxu0 %v4019
      %v4100 = vpop.f32.mrf.mxu0
      %v4101 = vadd.f32 0.0, %v4100
      %v4102 = vpop.f32.mrf.mxu0
      %v4103 = vadd.f32 0.0, %v4102
      %4104 = vmatmul.bf16.gmra.mxu0 %v4020
      %v4105 = vpop.f32.mrf.mxu0
      %v4106 = vadd.f32 0.0, %v4105
      %v4107 = vpop.f32.mrf.mxu0
      %v4108 = vadd.f32 0.0, %v4107
      %4109 = vmatmul.bf16.gmra.mxu0 %v4021
      %v4110 = vpop.f32.mrf.mxu0
      %v4111 = vadd.f32 0.0, %v4110
      %v4112 = vpop.f32.mrf.mxu0
      %v4113 = vadd.f32 0.0, %v4112
      %4114 = vdwg.mxu0
      %vm4115 = vcmask 654336
      %4116 = vst.msk [vmem:[#allocation2] sm:$0xff] %vm4115, %v4096
      %4117 = vst.msk [vmem:[#allocation2 + $0x8] sm:$0xff] %vm4115, %v4098
      %4118 = vst.msk [vmem:[#allocation2 + $0x10] sm:$0xff] %vm4115, %v4101
      %4119 = vst.msk [vmem:[#allocation2 + $0x18] sm:$0xff] %vm4115, %v4103
      %4120 = vst.msk [vmem:[#allocation2 + $0x20] sm:$0xff] %vm4115, %v4106
      %4121 = vst.msk [vmem:[#allocation2 + $0x28] sm:$0xff] %vm4115, %v4108
      %4122 = vst.msk [vmem:[#allocation2 + $0x30] sm:$0xff] %vm4115, %v4111
      %vm4123 = vcmask 650240
      %4124 = vst.msk [vmem:[#allocation2 + $0x38] sm:$0xf] %vm4123, %v4113
      %v4125 = vld [vmem:[#allocation2] sm:$0xff]
      %v4126 = vld [vmem:[#allocation2 + $0x8] sm:$0xf]
      %v4127 = vld [vmem:[#allocation2 + $0xc] sm:$0xff]
      %v4128 = vld [vmem:[#allocation2 + $0x14] sm:$0xf]
      %4131 = vrot.lane.b32.xlu0 %v4127, 112
      %v4132 = vpop.permute.xlu0 %4131
      %4133 = vrot.lane.b32.xlu0 %v4128, 112
      %v4134 = vpop.permute.xlu0 %4133
      %v4137 = vadd.f32 %v4125, %v4132
      %v4138 = vadd.f32 %v4126, %v4134
      %v4139 = vld [vmem:[#allocation2 + $0x18] sm:$0xff]
      %v4140 = vld [vmem:[#allocation2 + $0x20] sm:$0xf]
      %4143 = vrot.lane.b32.xlu0 %v4139, 96
      %v4144 = vpop.permute.xlu0 %4143
      %4145 = vrot.lane.b32.xlu0 %v4140, 96
      %v4146 = vpop.permute.xlu0 %4145
      %v4149 = vadd.f32 %v4137, %v4144
      %v4150 = vadd.f32 %v4138, %v4146
      %v4151 = vld [vmem:[%s3 + $0x180] sm:$0xff]
      %v4152 = vld [vmem:[%s3 + $0x188] sm:$0xf]
      %v4153 = vld [vmem:[#allocation2 + $0x8] sm:$0xff]
      %v4154 = vld [vmem:[#allocation2 + $0x10] sm:$0xff]
      %v4155 = vld [vmem:[#allocation2 + $0x20] sm:$0xff]
      %v4156 = vld [vmem:[#allocation2 + $0x28] sm:$0xff]
      %v4157 = vld [vmem:[#allocation2 + $0x30] sm:$0xff]
      %v4158 = vld [vmem:[#allocation2 + $0x38] sm:$0xf]
      %4166 = vrot.lane.b32.xlu0 %v4125, 80
      %v4167 = vpop.permute.xlu0 %4166
      %4168 = vrot.lane.b32.xlu0 %v4153, 80
      %v4169 = vpop.permute.xlu0 %4168
      %4170 = vrot.lane.b32.xlu0 %v4154, 80
      %v4171 = vpop.permute.xlu0 %4170
      %4172 = vrot.lane.b32.xlu0 %v4139, 80
      %v4173 = vpop.permute.xlu0 %4172
      %4174 = vrot.lane.b32.xlu0 %v4155, 80
      %v4175 = vpop.permute.xlu0 %4174
      %4176 = vrot.lane.b32.xlu0 %v4156, 80
      %v4177 = vpop.permute.xlu0 %4176
      %4178 = vrot.lane.b32.xlu0 %v4157, 80
      %v4179 = vpop.permute.xlu0 %4178
      %4180 = vrot.lane.b32.xlu0 %v4158, 80
      %v4181 = vpop.permute.xlu0 %4180
      %v4190 = vsel %vm568, %v4151, 0
      %v4193 = vsel %vm568, %v4152, 0
      %v4195 = vsel %vm593, %v4181, 0
      %4197 = vmatpush.msra.mxu0 0.0
      %4198 = vmatpush.msra.mxu0 0.0
      %4199 = vmatpush.msra.mxu0 0.0
      %4200 = vmatpush.msra.mxu0 0.0
      %4201 = vmatpush.msra.mxu0 0.0
      %4202 = vmatpush.msra.mxu0 0.0
      %4203 = vmatpush.msra.mxu0 0.0
      %4204 = vmatpush.msra.mxu0 0.0
      %4205 = vmatpush.msra.mxu0 %v4195
      %4206 = vmatpush.msra.mxu0 %v4179
      %4207 = vmatpush.msra.mxu0 %v4177
      %4208 = vmatpush.msra.mxu0 %v4175
      %4209 = vmatpush.msra.mxu0 %v4173
      %4210 = vmatpush.msra.mxu0 %v4171
      %4211 = vmatpush.msra.mxu0 %v4169
      %4212 = vmatpush.msra.mxu0 %v4167
      %4213 = vmatmul.f32.gmra.mxu0 %v4190
      %v4214 = vpop.f32.mrf.mxu0
      %v4215 = vadd.f32 0.0, %v4214
      %4216 = vmatmul.f32.gmra.mxu0 %v4193
      %v4217 = vpop.f32.mrf.mxu0
      %v4218 = vadd.f32 0.0, %v4217
      %4219 = vdwg.mxu0
      %v4220 = vadd.f32 %v4149, %v4215
      %v4221 = vadd.f32 %v4150, %v4218
      %v4222 = vld [vmem:[%s3 + $0x190] sm:$0xff]
      %v4223 = vld [vmem:[%s3 + $0x198] sm:$0xf]
      %4224 = vrot.lane.b32.xlu0 %v4125, 64
      %v4225 = vpop.permute.xlu0 %4224
      %4226 = vrot.lane.b32.xlu0 %v4153, 64
      %v4227 = vpop.permute.xlu0 %4226
      %4228 = vrot.lane.b32.xlu0 %v4154, 64
      %v4229 = vpop.permute.xlu0 %4228
      %4230 = vrot.lane.b32.xlu0 %v4139, 64
      %v4231 = vpop.permute.xlu0 %4230
      %4232 = vrot.lane.b32.xlu0 %v4155, 64
      %v4233 = vpop.permute.xlu0 %4232
      %4234 = vrot.lane.b32.xlu0 %v4156, 64
      %v4235 = vpop.permute.xlu0 %4234
      %4236 = vrot.lane.b32.xlu0 %v4157, 64
      %v4237 = vpop.permute.xlu0 %4236
      %4238 = vrot.lane.b32.xlu0 %v4158, 64
      %v4239 = vpop.permute.xlu0 %4238
      %v4248 = vsel %vm568, %v4222, 0
      %v4251 = vsel %vm568, %v4223, 0
      %v4253 = vsel %vm593, %v4239, 0
      %4255 = vmatpush.msra.mxu0 0.0
      %4256 = vmatpush.msra.mxu0 0.0
      %4257 = vmatpush.msra.mxu0 0.0
      %4258 = vmatpush.msra.mxu0 0.0
      %4259 = vmatpush.msra.mxu0 0.0
      %4260 = vmatpush.msra.mxu0 0.0
      %4261 = vmatpush.msra.mxu0 0.0
      %4262 = vmatpush.msra.mxu0 0.0
      %4263 = vmatpush.msra.mxu0 %v4253
      %4264 = vmatpush.msra.mxu0 %v4237
      %4265 = vmatpush.msra.mxu0 %v4235
      %4266 = vmatpush.msra.mxu0 %v4233
      %4267 = vmatpush.msra.mxu0 %v4231
      %4268 = vmatpush.msra.mxu0 %v4229
      %4269 = vmatpush.msra.mxu0 %v4227
      %4270 = vmatpush.msra.mxu0 %v4225
      %4271 = vmatmul.f32.gmra.mxu0 %v4248
      %v4272 = vpop.f32.mrf.mxu0
      %v4273 = vadd.f32 0.0, %v4272
      %4274 = vmatmul.f32.gmra.mxu0 %v4251
      %v4275 = vpop.f32.mrf.mxu0
      %v4276 = vadd.f32 0.0, %v4275
      %4277 = vdwg.mxu0
      %v4278 = vadd.f32 %v4220, %v4273
      %v4279 = vadd.f32 %v4221, %v4276
      %v4280 = vld [vmem:[%s2 + $0x208] sm:$0x1]
      %v4281 = vperm.slane %v4280, 0
      %v4282 = vadd.f32 %v4278, %v4281
      %v4283 = vadd.f32 %v4279, %v4281
      %vm4284 = vcmask 130048
      %4285 = vst.msk [vmem:[%s197] sm:$0xff] %vm4284, %v4282
      %vm4286 = vcmask 125952
      %4287 = vst.msk [vmem:[%s197 + $0x8] sm:$0xf] %vm4286, %v4283
      %p4288 = scmp.lt.s32.totalorder %s15, 1
      %s4289 = scalar_select %p4288, %s15, 1
      %s4290 = smul.addr %s4289, 2
      %s4291 = smul.addr %s4290, 8
      %s4292 = scalar_lea.vmem %s4, %s4291
      // Predicated region
      $region37: #{dgcn_mask_forward.1} parent=35 // pred_check
        %p4293 = pneg %p122
      $region38: #{dgcn_mask_forward.1} parent=35 // pred_check_branch
        %4295 = sbr.rel (%p4293) target = $region40
      $region39: #{dgcn_mask_forward.1} parent=35 // pred_region
        _
      $region40: #{dgcn_mask_forward.1} parent=35 // pred_fallthru
        _
    $region36: #{dgcn_mask_forward.1} parent=5 // pred_fallthru
      _
    %p4296 = scmp.le.s32.totalorder 2, %s10
    // Predicated region
    $region41: #{dgcn_mask_forward.1} parent=5 // pred_check
      %p4297 = pneg %p4296
    $region42: #{dgcn_mask_forward.1} parent=5 // pred_check_branch
      %4299 = sbr.rel (%p4297) target = $region44
    $region43: #{dgcn_mask_forward.1} parent=5 // pred_region
      %s4300 = ssub.s32 %s10, 2
      // Predicated region
      $region45: #{dgcn_mask_forward.1} parent=43 // pred_check
        %p4301 = pneg %p128
      $region46: #{dgcn_mask_forward.1} parent=43 // pred_check_branch
        %4303 = sbr.rel (%p4301) target = $region48
      $region47: #{dgcn_mask_forward.1} parent=43 // pred_region
        %p4304 = scmp.lt.s32.totalorder %s16, 1
        %s4305 = scalar_select %p4304, %s16, 1
        %s4306 = smul.addr %s4305, 2
        %s4307 = smul.addr %s4306, 8
        %s4308 = scalar_lea.vmem %s4, %s4307
      $region48: #{dgcn_mask_forward.1} parent=43 // pred_fallthru
        _
    $region44: #{dgcn_mask_forward.1} parent=5 // pred_fallthru
      _
  $region6: #{dgcn_mask_forward.1} parent=0 // loop_footer
    %s14 = sadd.s32 1, %s10
  $region7: #{dgcn_mask_forward.1} parent=0 // loop_footer_branch
    %9 = sbr.rel target = $region3
  $region8: #{dgcn_mask_forward.1} parent=0 // loop_exit
    _

</llo_original>
